<compile_context>
chip_gen: v6e
topology: v6e:2x2x1
jax: 0.10.0
libtpu: 0.0.40
codegen_flags: <defaults>
</compile_context>

<pallas_src>
from functools import partial

import jax
import jax.numpy as jnp
from jax.experimental import pallas as pl
from jax.experimental.pallas import tpu as pltpu


# ---------------------------------------------------------------------------
# kernels
# ---------------------------------------------------------------------------
def _softmax_lastdim(s):
    # softmax math kept in f32; reciprocal goes to the EUP slot (nearly free).
    s = s - jnp.max(s, axis=-1, keepdims=True)
    p = jnp.exp(s)
    return p * pl.reciprocal(jnp.sum(p, axis=-1, keepdims=True), approx=True)


def attn_qkv_kernel(x_ref, wqkv_ref, bqkv_ref, wproj_ref, bproj_ref, o_ref, o_scr,
                    *, num_heads):
    """Fused qkv-projection + MHSA + output-projection for a (Bt, N, C) batch block."""
    Bt, N, C = x_ref.shape
    hd = C // num_heads
    mm = wqkv_ref.dtype                      # MXU dtype: bf16 weights -> bf16 matmuls

    # --- qkv projection: one (Bt*N, C) @ (C, 3C) MXU matmul -------------------
    # (softmax scale is already folded into the q columns of wqkv/bqkv)
    x2 = x_ref[...].reshape(Bt * N, C).astype(mm)
    qkv = jnp.dot(x2, wqkv_ref[...], preferred_element_type=jnp.float32)
    qkv = (qkv + bqkv_ref[...].astype(jnp.float32)).astype(mm)   # (Bt*N, 3C)
    qkv3 = qkv.reshape(Bt, N, 3 * C)

    # --- per-head attention (3-D batched einsums on the MXU) ------------------
    # TODO(synk): fully head-batched einsums need a (Bt,N,H,hd)->(Bt,H,N,hd)
    #             relayout whose Mosaic lowering is shape-dependent; kept as a
    #             static per-head unroll with mm-dtype matmuls instead.
    for h in range(num_heads):
        lo = h * hd
        q = qkv3[:, :, lo:lo + hd]                              # (Bt, N, hd)
        k = qkv3[:, :, C + lo:C + lo + hd]
        v = qkv3[:, :, 2 * C + lo:2 * C + lo + hd]
        s = jnp.einsum('bnd,bmd->bnm', q, k, preferred_element_type=jnp.float32)
        p = _softmax_lastdim(s)                                 # f32 softmax
        o_h = jnp.einsum('bnm,bmd->bnd', p.astype(mm), v,
                         preferred_element_type=jnp.float32)
        # assemble lane-contiguous head-concat buffer; head output dies here
        o_scr[:, :, lo:lo + hd] = o_h.astype(mm)

    # --- single K=C output projection over the assembled buffer ---------------
    out = jnp.dot(o_scr[...].reshape(Bt * N, C), wproj_ref[...],
                  preferred_element_type=jnp.float32)
    out = out + bproj_ref[...].astype(jnp.float32)
    o_ref[...] = out.reshape(Bt, N, C).astype(o_ref.dtype)


def attn_noqkv_kernel(x_ref, o_ref, *, num_heads, scale):
    """MHSA with q = k = v = x (with_qkv=False path), no projections."""
    Bt, N, C = x_ref.shape
    hd = C // num_heads
    mm = x_ref.dtype
    x = x_ref[...]
    xs = (x.astype(jnp.float32) * scale).astype(mm)     # scale once, whole block
    for h in range(num_heads):
        lo = h * hd
        qh = xs[:, :, lo:lo + hd]
        kvh = x[:, :, lo:lo + hd]
        s = jnp.einsum('bnd,bmd->bnm', qh, kvh, preferred_element_type=jnp.float32)
        p = _softmax_lastdim(s)
        o_h = jnp.einsum('bnm,bmd->bnd', p.astype(mm), kvh,
                         preferred_element_type=jnp.float32)
        o_ref[:, :, lo:lo + hd] = o_h.astype(o_ref.dtype)   # direct write, no concat


# ---------------------------------------------------------------------------
# wrapper helpers
# ---------------------------------------------------------------------------
def _vmem_capacity_bytes():
    """Physical VMEM per TensorCore (generation-aware); conservative fallback."""
    try:
        cap = int(pltpu.get_tpu_info().vmem_capacity_bytes)
        if cap > 0:
            return cap
    except Exception:
        pass
    return 64 * 1024 * 1024          # v7x per-TC VMEM (smallest of v5e/v6e/v7x)


def _const_spec(shape):
    """BlockSpec for a grid-invariant operand (weights/biases): constant block
    index; single-buffered when this Pallas supports pipeline_mode."""
    index_map = lambda b: (0,) * len(shape)
    try:
        return pl.BlockSpec(shape, index_map, pipeline_mode=pl.Buffered(1))
    except (TypeError, ValueError, AttributeError):
        return pl.BlockSpec(shape, index_map)


def _pick_block_b(B, N, C, x_item, w_item, vmem_cap):
    """Batch-block size: fill MXU M dim / amortize grid overhead, stay in VMEM."""
    budget = vmem_cap // 2                           # headroom for compiler scratch
    bt = max(1, min(B, pl.cdiv(2048, N)))            # target ~2048 matmul rows / step

    def footprint(b):
        rows = b * N
        io = 2 * 2 * rows * C * x_item               # x in + out, double buffered
        weights = (3 * C * C + 3 * C + C * C + C) * w_item   # single-buffered weights
        qkv = rows * 3 * C * (4 + w_item)            # f32 qkv + mm-dtype copy
        scores = 2 * b * N * N * 4                   # one head's scores + probs (f32)
        headbuf = rows * C * (w_item + 4)            # head-concat scratch + f32 proj acc
        return io + weights + qkv + scores + headbuf

    while bt > 1 and footprint(bt) > budget:
        bt //= 2
    if B >= 2:
        bt = min(bt, pl.cdiv(B, 2))                  # >=2 grid steps -> both TCs (v7x)
    return max(1, bt)


# ---------------------------------------------------------------------------
# wrapper
# ---------------------------------------------------------------------------
def attention_forward(x, params=None, *, num_heads, with_qkv=True, qk_scale=None,
                      block_b=None):
    """Forward pass of the PyTorch `Attention` module (eval: dropouts are identity)."""
    B, N, C = x.shape
    assert C % num_heads == 0
    hd = C // num_heads
    scale = float(qk_scale) if qk_scale is not None else hd ** (-0.5)

    vmem_cap = _vmem_capacity_bytes()
    w_item = params["wqkv"].dtype.itemsize if with_qkv else x.dtype.itemsize
    if block_b is not None:
        Bt = max(1, min(block_b, B))
    else:
        Bt = _pick_block_b(B, N, C, x.dtype.itemsize, w_item, vmem_cap)
    n_blocks = pl.cdiv(B, Bt)
    Bpad = n_blocks * Bt
    if Bpad != B:                                    # zero-pad; padded rows are dropped
        x = jnp.pad(x, ((0, Bpad - B), (0, 0), (0, 0)))

    cparams = pltpu.CompilerParams(
        dimension_semantics=("parallel",),           # shard batch blocks across TCs
        vmem_limit_bytes=int(vmem_cap * 0.8),        # ~51 MiB v7x / ~102 MiB v5e,v6e
    )

    if with_qkv:
        mm = params["wqkv"].dtype
        # Fold the softmax scale into the q columns of the qkv projection so the
        # kernel never multiplies activations by it.
        col_scale = jnp.concatenate([jnp.full((C,), scale, jnp.float32),
                                     jnp.ones((2 * C,), jnp.float32)])
        wqkv = (params["wqkv"].astype(jnp.float32) * col_scale).astype(mm)
        bqkv = (params["bqkv"].astype(jnp.float32) * col_scale).astype(params["bqkv"].dtype)

        kernel = partial(attn_qkv_kernel, num_heads=num_heads)
        out = pl.pallas_call(
            kernel,
            out_shape=jax.ShapeDtypeStruct((Bpad, N, C), x.dtype),
            grid=(n_blocks,),
            in_specs=[
                pl.BlockSpec((Bt, N, C), lambda b: (b, 0, 0)),
                _const_spec((C, 3 * C)),
                _const_spec((1, 3 * C)),
                _const_spec((C, C)),
                _const_spec((1, C)),
            ],
            out_specs=pl.BlockSpec((Bt, N, C), lambda b: (b, 0, 0)),
            scratch_shapes=[pltpu.VMEM((Bt, N, C), mm)],   # head-concat buffer
            compiler_params=cparams,
        )(x, wqkv, bqkv, params["wproj"], params["bproj"])
    else:
        kernel = partial(attn_noqkv_kernel, num_heads=num_heads, scale=scale)
        out = pl.pallas_call(
            kernel,
            out_shape=jax.ShapeDtypeStruct((Bpad, N, C), x.dtype),
            grid=(n_blocks,),
            in_specs=[pl.BlockSpec((Bt, N, C), lambda b: (b, 0, 0))],
            out_specs=pl.BlockSpec((Bt, N, C), lambda b: (b, 0, 0)),
            compiler_params=cparams,
        )(x)

    return out[:B] if Bpad != B else out


# ---------------------------------------------------------------------------
# pure-JAX reference (mirrors the PyTorch module exactly)
# ---------------------------------------------------------------------------
def attention_reference(x, params=None, *, num_heads, with_qkv=True, qk_scale=None):
    B, N, C = x.shape
    hd = C // num_heads
    scale = float(qk_scale) if qk_scale is not None else hd ** (-0.5)
    xf = x.astype(jnp.float32)
    if with_qkv:
        qkv = xf @ params["wqkv"].astype(jnp.float32) + params["bqkv"].astype(jnp.float32)
        qkv = qkv.reshape(B, N, 3, num_heads, hd).transpose(2, 0, 3, 1, 4)
        q, k, v = qkv[0], qkv[1], qkv[2]
    else:
        qkv = xf.reshape(B, N, num_heads, hd).transpose(0, 2, 1, 3)
        q, k, v = qkv, qkv, qkv
    attn = (q @ jnp.swapaxes(k, -2, -1)) * scale
    attn = jax.nn.softmax(attn, axis=-1)
    out = (attn @ v).transpose(0, 2, 1, 3).reshape(B, N, C)
    if with_qkv:
        out = out @ params["wproj"].astype(jnp.float32) + params["bproj"].astype(jnp.float32)
    return out.astype(x.dtype)


# ---------------------------------------------------------------------------
# demo
# ---------------------------------------------------------------------------
if __name__ == "__main__":
    B, N, dim, num_heads = 6, 16, 128, 4     # small shapes; C=128 keeps outputs lane-dense

    key = jax.random.PRNGKey(0)
    kx, kw1, kw2 = jax.random.split(key, 3)
    x = jax.random.normal(kx, (B, N, dim), jnp.float32)
    params = {
        "wqkv": 0.02 * jax.random.normal(kw1, (dim, 3 * dim), jnp.float32),
        "bqkv": jnp.zeros((1, 3 * dim), jnp.float32),   # qkv_bias=False default
        "wproj": 0.02 * jax.random.normal(kw2, (dim, dim), jnp.float32),
        "bproj": jnp.zeros((1, dim), jnp.float32),
    }
    # NOTE: in production, ship params (and optionally x) as bf16 for bf16-native MXU
    # matmuls; f32 is used here so the reference check is tight.

    # with_qkv=True path, forcing block_b=4 to exercise multi-step grid + padding
    fwd = jax.jit(partial(attention_forward, num_heads=num_heads, with_qkv=True, block_b=4))
    out = jax.block_until_ready(fwd(x, params))
    ref = attention_reference(x, params, num_heads=num_heads, with_qkv=True)
    assert out.shape == (B, N, dim)
    assert bool(jnp.all(jnp.isfinite(out)))
    assert bool(jnp.allclose(out, ref, rtol=1e-2, atol=1e-2)), \
        float(jnp.max(jnp.abs(out - ref)))

    # with_qkv=False path (auto block size: capped at ceil(B/2) -> 2 grid steps)
    fwd2 = jax.jit(partial(attention_forward, num_heads=num_heads, with_qkv=False))
    out2 = jax.block_until_ready(fwd2(x))
    ref2 = attention_reference(x, num_heads=num_heads, with_qkv=False)
    assert out2.shape == (B, N, dim)
    assert bool(jnp.all(jnp.isfinite(out2)))
    assert bool(jnp.allclose(out2, ref2, rtol=1e-2, atol=1e-2)), \
        float(jnp.max(jnp.abs(out2 - ref2)))

    print("KERNEL_OK")
</pallas_src>

<mosaic_0001>
module attributes {stable_mosaic.version = 11 : i64} {
  func.func @attn_qkv_kernel(%arg0: i32, %arg1: memref<4x16x128xf32, #tpu.memory_space<vmem>>, %arg2: memref<128x384xf32, #tpu.memory_space<vmem>>, %arg3: memref<1x384xf32, #tpu.memory_space<vmem>>, %arg4: memref<128x128xf32, #tpu.memory_space<vmem>>, %arg5: memref<1x128xf32, #tpu.memory_space<vmem>>, %arg6: memref<4x16x128xf32, #tpu.memory_space<vmem>>, %arg7: memref<4x16x128xf32, #tpu.memory_space<vmem>>) attributes {dimension_semantics = [#tpu.dimension_semantics<parallel>], iteration_bounds = array<i64: 2>, scalar_prefetch = 0 : i64, scratch_operands = 1 : i64, tpu.core_type = #tpu.core_type<tc>, window_params = [{transform_indices = @transform_0, window_bounds = array<i64: 4, 16, 128>}, {pipeline_mode = #tpu.pipeline_mode<synchronous>, transform_indices = @transform_1, window_bounds = array<i64: 128, 384>}, {pipeline_mode = #tpu.pipeline_mode<synchronous>, transform_indices = @transform_2, window_bounds = array<i64: 1, 384>}, {pipeline_mode = #tpu.pipeline_mode<synchronous>, transform_indices = @transform_3, window_bounds = array<i64: 128, 128>}, {pipeline_mode = #tpu.pipeline_mode<synchronous>, transform_indices = @transform_4, window_bounds = array<i64: 1, 128>}, {transform_indices = @transform_5, window_bounds = array<i64: 4, 16, 128>}]} {
    %c0 = arith.constant 0 : index
    %c0_0 = arith.constant 0 : index
    %c0_1 = arith.constant 0 : index
    %0 = vector.load %arg1[%c0, %c0_0, %c0_1] : memref<4x16x128xf32, #tpu.memory_space<vmem>>, vector<4x16x128xf32>
    %1 = vector.shape_cast %0 : vector<4x16x128xf32> to vector<64x128xf32>
    %c0_2 = arith.constant 0 : index
    %c0_3 = arith.constant 0 : index
    %2 = vector.load %arg2[%c0_2, %c0_3] : memref<128x384xf32, #tpu.memory_space<vmem>>, vector<128x384xf32>
    %cst = arith.constant dense<0.000000e+00> : vector<64x384xf32>
    %3 = tpu.matmul %1, %2, %cst {dimension_numbers = #tpu.dot_dimension_numbers<[1], [0], [0], [1], [0, 0, 1, 1], [], []>} : vector<64x128xf32>, vector<128x384xf32>, vector<64x384xf32> -> vector<64x384xf32>
    %c0_4 = arith.constant 0 : index
    %c0_5 = arith.constant 0 : index
    %4 = vector.load %arg3[%c0_4, %c0_5] : memref<1x384xf32, #tpu.memory_space<vmem>>, vector<1x384xf32>
    %5 = vector.broadcast %4 : vector<1x384xf32> to vector<64x384xf32>
    %6 = arith.addf %3, %5 : vector<64x384xf32>
    %7 = vector.shape_cast %6 : vector<64x384xf32> to vector<4x16x384xf32>
    %8 = vector.extract_strided_slice %7 {offsets = [0, 0, 0], sizes = [4, 16, 32], strides = [1, 1, 1]} : vector<4x16x384xf32> to vector<4x16x32xf32>
    %9 = vector.extract_strided_slice %7 {offsets = [0, 0, 128], sizes = [4, 16, 32], strides = [1, 1, 1]} : vector<4x16x384xf32> to vector<4x16x32xf32>
    %10 = vector.extract_strided_slice %7 {offsets = [0, 0, 256], sizes = [4, 16, 32], strides = [1, 1, 1]} : vector<4x16x384xf32> to vector<4x16x32xf32>
    "tpu.trace_start"() <{level = 10 : i32, message = "bnd,bmd->bnm"}> : () -> ()
    %cst_6 = arith.constant dense<0.000000e+00> : vector<4x16x16xf32>
    %11 = tpu.matmul %8, %9, %cst_6 {dimension_numbers = #tpu.dot_dimension_numbers<[2], [2], [1], [1], [0, 0, 0, 1, 1, 1], [0], [0]>} : vector<4x16x32xf32>, vector<4x16x32xf32>, vector<4x16x16xf32> -> vector<4x16x16xf32>
    "tpu.trace_stop"() : () -> ()
    %cst_7 = arith.constant dense<0xFF800000> : vector<4x16xf32>
    %12 = vector.multi_reduction <maximumf>, %11, %cst_7 [2] : vector<4x16x16xf32> to vector<4x16xf32>
    %13 = vector.shape_cast %12 : vector<4x16xf32> to vector<4x16x1xf32>
    %14 = vector.broadcast %13 : vector<4x16x1xf32> to vector<4x16x16xf32>
    %15 = arith.subf %11, %14 : vector<4x16x16xf32>
    %16 = math.exp %15 : vector<4x16x16xf32>
    %cst_8 = arith.constant dense<0.000000e+00> : vector<4x16xf32>
    %17 = vector.multi_reduction <add>, %16, %cst_8 [2] : vector<4x16x16xf32> to vector<4x16xf32>
    %18 = vector.shape_cast %17 : vector<4x16xf32> to vector<4x16x1xf32>
    %19 = tpu.reciprocal %18 {approx = true} : vector<4x16x1xf32> -> vector<4x16x1xf32>
    %20 = vector.broadcast %19 : vector<4x16x1xf32> to vector<4x16x16xf32>
    %21 = arith.mulf %16, %20 : vector<4x16x16xf32>
    "tpu.trace_start"() <{level = 10 : i32, message = "bnm,bmd->bnd"}> : () -> ()
    %cst_9 = arith.constant dense<0.000000e+00> : vector<4x16x32xf32>
    %22 = tpu.matmul %21, %10, %cst_9 {dimension_numbers = #tpu.dot_dimension_numbers<[2], [1], [1], [2], [0, 0, 0, 1, 1, 2], [0], [0]>} : vector<4x16x16xf32>, vector<4x16x32xf32>, vector<4x16x32xf32> -> vector<4x16x32xf32>
    "tpu.trace_stop"() : () -> ()
    %c0_10 = arith.constant 0 : index
    %c0_11 = arith.constant 0 : index
    %c0_12 = arith.constant 0 : index
    %23 = vector.load %arg7[%c0_10, %c0_11, %c0_12] : memref<4x16x128xf32, #tpu.memory_space<vmem>>, vector<4x16x32xf32>
    tpu.vector_store %arg7[%c0_10, %c0_11, %c0_12], %22 {strides = array<i32>} : memref<4x16x128xf32, #tpu.memory_space<vmem>>, vector<4x16x32xf32>,
    %24 = vector.extract_strided_slice %7 {offsets = [0, 0, 32], sizes = [4, 16, 32], strides = [1, 1, 1]} : vector<4x16x384xf32> to vector<4x16x32xf32>
    %25 = vector.extract_strided_slice %7 {offsets = [0, 0, 160], sizes = [4, 16, 32], strides = [1, 1, 1]} : vector<4x16x384xf32> to vector<4x16x32xf32>
    %26 = vector.extract_strided_slice %7 {offsets = [0, 0, 288], sizes = [4, 16, 32], strides = [1, 1, 1]} : vector<4x16x384xf32> to vector<4x16x32xf32>
    "tpu.trace_start"() <{level = 10 : i32, message = "bnd,bmd->bnm"}> : () -> ()
    %cst_13 = arith.constant dense<0.000000e+00> : vector<4x16x16xf32>
    %27 = tpu.matmul %24, %25, %cst_13 {dimension_numbers = #tpu.dot_dimension_numbers<[2], [2], [1], [1], [0, 0, 0, 1, 1, 1], [0], [0]>} : vector<4x16x32xf32>, vector<4x16x32xf32>, vector<4x16x16xf32> -> vector<4x16x16xf32>
    "tpu.trace_stop"() : () -> ()
    %cst_14 = arith.constant dense<0xFF800000> : vector<4x16xf32>
    %28 = vector.multi_reduction <maximumf>, %27, %cst_14 [2] : vector<4x16x16xf32> to vector<4x16xf32>
    %29 = vector.shape_cast %28 : vector<4x16xf32> to vector<4x16x1xf32>
    %30 = vector.broadcast %29 : vector<4x16x1xf32> to vector<4x16x16xf32>
    %31 = arith.subf %27, %30 : vector<4x16x16xf32>
    %32 = math.exp %31 : vector<4x16x16xf32>
    %cst_15 = arith.constant dense<0.000000e+00> : vector<4x16xf32>
    %33 = vector.multi_reduction <add>, %32, %cst_15 [2] : vector<4x16x16xf32> to vector<4x16xf32>
    %34 = vector.shape_cast %33 : vector<4x16xf32> to vector<4x16x1xf32>
    %35 = tpu.reciprocal %34 {approx = true} : vector<4x16x1xf32> -> vector<4x16x1xf32>
    %36 = vector.broadcast %35 : vector<4x16x1xf32> to vector<4x16x16xf32>
    %37 = arith.mulf %32, %36 : vector<4x16x16xf32>
    "tpu.trace_start"() <{level = 10 : i32, message = "bnm,bmd->bnd"}> : () -> ()
    %cst_16 = arith.constant dense<0.000000e+00> : vector<4x16x32xf32>
    %38 = tpu.matmul %37, %26, %cst_16 {dimension_numbers = #tpu.dot_dimension_numbers<[2], [1], [1], [2], [0, 0, 0, 1, 1, 2], [0], [0]>} : vector<4x16x16xf32>, vector<4x16x32xf32>, vector<4x16x32xf32> -> vector<4x16x32xf32>
    "tpu.trace_stop"() : () -> ()
    %c0_17 = arith.constant 0 : index
    %c0_18 = arith.constant 0 : index
    %c32 = arith.constant 32 : index
    %39 = vector.load %arg7[%c0_17, %c0_18, %c32] : memref<4x16x128xf32, #tpu.memory_space<vmem>>, vector<4x16x32xf32>
    tpu.vector_store %arg7[%c0_17, %c0_18, %c32], %38 {strides = array<i32>} : memref<4x16x128xf32, #tpu.memory_space<vmem>>, vector<4x16x32xf32>,
    %40 = vector.extract_strided_slice %7 {offsets = [0, 0, 64], sizes = [4, 16, 32], strides = [1, 1, 1]} : vector<4x16x384xf32> to vector<4x16x32xf32>
    %41 = vector.extract_strided_slice %7 {offsets = [0, 0, 192], sizes = [4, 16, 32], strides = [1, 1, 1]} : vector<4x16x384xf32> to vector<4x16x32xf32>
    %42 = vector.extract_strided_slice %7 {offsets = [0, 0, 320], sizes = [4, 16, 32], strides = [1, 1, 1]} : vector<4x16x384xf32> to vector<4x16x32xf32>
    "tpu.trace_start"() <{level = 10 : i32, message = "bnd,bmd->bnm"}> : () -> ()
    %cst_19 = arith.constant dense<0.000000e+00> : vector<4x16x16xf32>
    %43 = tpu.matmul %40, %41, %cst_19 {dimension_numbers = #tpu.dot_dimension_numbers<[2], [2], [1], [1], [0, 0, 0, 1, 1, 1], [0], [0]>} : vector<4x16x32xf32>, vector<4x16x32xf32>, vector<4x16x16xf32> -> vector<4x16x16xf32>
    "tpu.trace_stop"() : () -> ()
    %cst_20 = arith.constant dense<0xFF800000> : vector<4x16xf32>
    %44 = vector.multi_reduction <maximumf>, %43, %cst_20 [2] : vector<4x16x16xf32> to vector<4x16xf32>
    %45 = vector.shape_cast %44 : vector<4x16xf32> to vector<4x16x1xf32>
    %46 = vector.broadcast %45 : vector<4x16x1xf32> to vector<4x16x16xf32>
    %47 = arith.subf %43, %46 : vector<4x16x16xf32>
    %48 = math.exp %47 : vector<4x16x16xf32>
    %cst_21 = arith.constant dense<0.000000e+00> : vector<4x16xf32>
    %49 = vector.multi_reduction <add>, %48, %cst_21 [2] : vector<4x16x16xf32> to vector<4x16xf32>
    %50 = vector.shape_cast %49 : vector<4x16xf32> to vector<4x16x1xf32>
    %51 = tpu.reciprocal %50 {approx = true} : vector<4x16x1xf32> -> vector<4x16x1xf32>
    %52 = vector.broadcast %51 : vector<4x16x1xf32> to vector<4x16x16xf32>
    %53 = arith.mulf %48, %52 : vector<4x16x16xf32>
    "tpu.trace_start"() <{level = 10 : i32, message = "bnm,bmd->bnd"}> : () -> ()
    %cst_22 = arith.constant dense<0.000000e+00> : vector<4x16x32xf32>
    %54 = tpu.matmul %53, %42, %cst_22 {dimension_numbers = #tpu.dot_dimension_numbers<[2], [1], [1], [2], [0, 0, 0, 1, 1, 2], [0], [0]>} : vector<4x16x16xf32>, vector<4x16x32xf32>, vector<4x16x32xf32> -> vector<4x16x32xf32>
    "tpu.trace_stop"() : () -> ()
    %c0_23 = arith.constant 0 : index
    %c0_24 = arith.constant 0 : index
    %c64 = arith.constant 64 : index
    %55 = vector.load %arg7[%c0_23, %c0_24, %c64] : memref<4x16x128xf32, #tpu.memory_space<vmem>>, vector<4x16x32xf32>
    tpu.vector_store %arg7[%c0_23, %c0_24, %c64], %54 {strides = array<i32>} : memref<4x16x128xf32, #tpu.memory_space<vmem>>, vector<4x16x32xf32>,
    %56 = vector.extract_strided_slice %7 {offsets = [0, 0, 96], sizes = [4, 16, 32], strides = [1, 1, 1]} : vector<4x16x384xf32> to vector<4x16x32xf32>
    %57 = vector.extract_strided_slice %7 {offsets = [0, 0, 224], sizes = [4, 16, 32], strides = [1, 1, 1]} : vector<4x16x384xf32> to vector<4x16x32xf32>
    %58 = vector.extract_strided_slice %7 {offsets = [0, 0, 352], sizes = [4, 16, 32], strides = [1, 1, 1]} : vector<4x16x384xf32> to vector<4x16x32xf32>
    "tpu.trace_start"() <{level = 10 : i32, message = "bnd,bmd->bnm"}> : () -> ()
    %cst_25 = arith.constant dense<0.000000e+00> : vector<4x16x16xf32>
    %59 = tpu.matmul %56, %57, %cst_25 {dimension_numbers = #tpu.dot_dimension_numbers<[2], [2], [1], [1], [0, 0, 0, 1, 1, 1], [0], [0]>} : vector<4x16x32xf32>, vector<4x16x32xf32>, vector<4x16x16xf32> -> vector<4x16x16xf32>
    "tpu.trace_stop"() : () -> ()
    %cst_26 = arith.constant dense<0xFF800000> : vector<4x16xf32>
    %60 = vector.multi_reduction <maximumf>, %59, %cst_26 [2] : vector<4x16x16xf32> to vector<4x16xf32>
    %61 = vector.shape_cast %60 : vector<4x16xf32> to vector<4x16x1xf32>
    %62 = vector.broadcast %61 : vector<4x16x1xf32> to vector<4x16x16xf32>
    %63 = arith.subf %59, %62 : vector<4x16x16xf32>
    %64 = math.exp %63 : vector<4x16x16xf32>
    %cst_27 = arith.constant dense<0.000000e+00> : vector<4x16xf32>
    %65 = vector.multi_reduction <add>, %64, %cst_27 [2] : vector<4x16x16xf32> to vector<4x16xf32>
    %66 = vector.shape_cast %65 : vector<4x16xf32> to vector<4x16x1xf32>
    %67 = tpu.reciprocal %66 {approx = true} : vector<4x16x1xf32> -> vector<4x16x1xf32>
    %68 = vector.broadcast %67 : vector<4x16x1xf32> to vector<4x16x16xf32>
    %69 = arith.mulf %64, %68 : vector<4x16x16xf32>
    "tpu.trace_start"() <{level = 10 : i32, message = "bnm,bmd->bnd"}> : () -> ()
    %cst_28 = arith.constant dense<0.000000e+00> : vector<4x16x32xf32>
    %70 = tpu.matmul %69, %58, %cst_28 {dimension_numbers = #tpu.dot_dimension_numbers<[2], [1], [1], [2], [0, 0, 0, 1, 1, 2], [0], [0]>} : vector<4x16x16xf32>, vector<4x16x32xf32>, vector<4x16x32xf32> -> vector<4x16x32xf32>
    "tpu.trace_stop"() : () -> ()
    %c0_29 = arith.constant 0 : index
    %c0_30 = arith.constant 0 : index
    %c96 = arith.constant 96 : index
    %71 = vector.load %arg7[%c0_29, %c0_30, %c96] : memref<4x16x128xf32, #tpu.memory_space<vmem>>, vector<4x16x32xf32>
    tpu.vector_store %arg7[%c0_29, %c0_30, %c96], %70 {strides = array<i32>} : memref<4x16x128xf32, #tpu.memory_space<vmem>>, vector<4x16x32xf32>,
    %c0_31 = arith.constant 0 : index
    %c0_32 = arith.constant 0 : index
    %c0_33 = arith.constant 0 : index
    %72 = vector.load %arg7[%c0_31, %c0_32, %c0_33] : memref<4x16x128xf32, #tpu.memory_space<vmem>>, vector<4x16x128xf32>
    %73 = vector.shape_cast %72 : vector<4x16x128xf32> to vector<64x128xf32>
    %c0_34 = arith.constant 0 : index
    %c0_35 = arith.constant 0 : index
    %74 = vector.load %arg4[%c0_34, %c0_35] : memref<128x128xf32, #tpu.memory_space<vmem>>, vector<128x128xf32>
    %cst_36 = arith.constant dense<0.000000e+00> : vector<64x128xf32>
    %75 = tpu.matmul %73, %74, %cst_36 {dimension_numbers = #tpu.dot_dimension_numbers<[1], [0], [0], [1], [0, 0, 1, 1], [], []>} : vector<64x128xf32>, vector<128x128xf32>, vector<64x128xf32> -> vector<64x128xf32>
    %c0_37 = arith.constant 0 : index
    %c0_38 = arith.constant 0 : index
    %76 = vector.load %arg5[%c0_37, %c0_38] : memref<1x128xf32, #tpu.memory_space<vmem>>, vector<1x128xf32>
    %77 = vector.broadcast %76 : vector<1x128xf32> to vector<64x128xf32>
    %78 = arith.addf %75, %77 : vector<64x128xf32>
    %79 = vector.shape_cast %78 : vector<64x128xf32> to vector<4x16x128xf32>
    %c0_39 = arith.constant 0 : index
    %c0_40 = arith.constant 0 : index
    %c0_41 = arith.constant 0 : index
    %80 = vector.load %arg6[%c0_39, %c0_40, %c0_41] : memref<4x16x128xf32, #tpu.memory_space<vmem>>, vector<4x16x128xf32>
    tpu.vector_store %arg6[%c0_39, %c0_40, %c0_41], %79 {strides = array<i32>} : memref<4x16x128xf32, #tpu.memory_space<vmem>>, vector<4x16x128xf32>,
    return
  }
  func.func @transform_0(%arg0: i32) -> (i32, i32, i32) {
    %c0_i32 = arith.constant 0 : i32
    %c0_i32_0 = arith.constant 0 : i32
    %c0_i32_1 = arith.constant 0 : i32
    return %arg0, %c0_i32, %c0_i32_0 : i32, i32, i32
  }
  func.func @transform_1(%arg0: i32) -> (i32, i32) {
    %c0_i32 = arith.constant 0 : i32
    %c0_i32_0 = arith.constant 0 : i32
    %c0_i32_1 = arith.constant 0 : i32
    return %c0_i32, %c0_i32_0 : i32, i32
  }
  func.func @transform_2(%arg0: i32) -> (i32, i32) {
    %c0_i32 = arith.constant 0 : i32
    %c0_i32_0 = arith.constant 0 : i32
    %c0_i32_1 = arith.constant 0 : i32
    return %c0_i32, %c0_i32_0 : i32, i32
  }
  func.func @transform_3(%arg0: i32) -> (i32, i32) {
    %c0_i32 = arith.constant 0 : i32
    %c0_i32_0 = arith.constant 0 : i32
    %c0_i32_1 = arith.constant 0 : i32
    return %c0_i32, %c0_i32_0 : i32, i32
  }
  func.func @transform_4(%arg0: i32) -> (i32, i32) {
    %c0_i32 = arith.constant 0 : i32
    %c0_i32_0 = arith.constant 0 : i32
    %c0_i32_1 = arith.constant 0 : i32
    return %c0_i32, %c0_i32_0 : i32, i32
  }
  func.func @transform_5(%arg0: i32) -> (i32, i32, i32) {
    %c0_i32 = arith.constant 0 : i32
    %c0_i32_0 = arith.constant 0 : i32
    %c0_i32_1 = arith.constant 0 : i32
    return %arg0, %c0_i32, %c0_i32_0 : i32, i32, i32
  }
}

</mosaic_0001>

<llo_original>
// kernel: mul.9
$region0: #{mul.9}
  #allocation0 [shape = 's32[1]{0}', space=sflag, size = 0x4, scoped, tag = 'scoped memory for mul.9']
  %s0 = inlined_call_operand.vmem [shape: f32[1,384], index: 0, kind: input, shape index: {}]
  %s1 = inlined_call_operand.vmem [shape: f32[1,384], index: 1, kind: input, shape index: {}]
  %s2 = inlined_call_operand.vmem [shape: f32[1,384], index: 2, kind: output, shape index: {}]
  %v3 = vld [vmem:[%s0] sm:$0x1]
  %v4 = vld [vmem:[%s1] sm:$0x1]
  %5 = xla_tuple %v3, %v4
  %6 = xla_tuple %5
  %v7 = vmul.f32 %v3, %v4
  %8 = xla_tuple %v7
  %9 = vst [vmem:[%s2] sm:$0x1] %v7
  %s10 = scalar_lea.vmem %s0, 1
  %v11 = vld [vmem:[%s10] sm:$0x1]
  %s12 = scalar_lea.vmem %s1, 1
  %v13 = vld [vmem:[%s12] sm:$0x1]
  %14 = xla_tuple %v11, %v13
  %15 = xla_tuple %14
  %v16 = vmul.f32 %v11, %v13
  %17 = xla_tuple %v16
  %s18 = scalar_lea.vmem %s2, 1
  %19 = vst [vmem:[%s18] sm:$0x1] %v16
  %s20 = scalar_lea.vmem %s0, 2
  %v21 = vld [vmem:[%s20] sm:$0x1]
  %s22 = scalar_lea.vmem %s1, 2
  %v23 = vld [vmem:[%s22] sm:$0x1]
  %24 = xla_tuple %v21, %v23
  %25 = xla_tuple %24
  %v26 = vmul.f32 %v21, %v23
  %27 = xla_tuple %v26
  %s28 = scalar_lea.vmem %s2, 2
  %29 = vst [vmem:[%s28] sm:$0x1] %v26

// kernel: attention_forward.1
$region0: #{attention_forward.1}
  #allocation0 [shape = 'u32[]', space=smem, size = 0x4, offset = 0x4, fixed_abs, tag = 'smem constant byte address 0x4 - core index']
  #allocation1 [shape = 'u32[144,128]{1,0:T(1,128)}', space=vmem, size = 0x12000, scoped, tag = 'internal scratch']
  #allocation2 [shape = 'f32[4,16,128]{2,1,0:T(8,128)}', space=vmem, size = 0x8000, scoped, tag = 'scratch operand']
  %s0 = inlined_call_operand.vmem [shape: f32[8,16,128], index: 0, kind: input, shape index: {}]
  %s1 = inlined_call_operand.vmem [shape: f32[128,384], index: 1, kind: input, shape index: {}]
  %s2 = inlined_call_operand.vmem [shape: f32[1,384], index: 2, kind: input, shape index: {}]
  %s3 = inlined_call_operand.vmem [shape: f32[128,128], index: 3, kind: input, shape index: {}]
  %s4 = inlined_call_operand.vmem [shape: f32[1,128], index: 4, kind: input, shape index: {}]
  %s5 = inlined_call_operand.vmem [shape: f32[8,16,128], index: 5, kind: output, shape index: {}]
  %s6 = sld [smem:[#allocation0]]
  $region53: #{attention_forward.1} parent=0
    _
  %s8 = ssub.s32 1, %s6
  %s9 = scalar_select 0, %s8, %s6
  loop: start=0, step=1, limit=4
  $region2: #{attention_forward.1} parent=0 // loop_pre_header
    _
  $region3: #{attention_forward.1} parent=0 // loop_header
    %s11 = sphi 0, %s15
    %p12 = scmp.ge.s32.totalorder %s11, 4
    %s21 = sphi 0, %s23
    %s24 = sphi 0, %s21
    %s25 = sphi 0, %s24
    %s41 = sphi 0, %s25
    %s45 = sphi 0, %s45
    %s47 = sphi 0, %s45
    %s48 = sphi 0, %s47
    %s62 = sphi 0, %s48
    %s66 = sphi 0, %s66
    %s68 = sphi 0, %s66
    %s69 = sphi 0, %s68
    %s83 = sphi 0, %s69
    %s87 = sphi 0, %s87
    %s89 = sphi 0, %s87
    %s90 = sphi 0, %s89
    %s104 = sphi 0, %s90
    %s108 = sphi 0, %s108
    %s110 = sphi 0, %s108
    %s111 = sphi 0, %s110
    %s125 = sphi 0, %s111
    %s131 = sphi 0, %s133
    %s134 = sphi 0, %s131
    %s135 = sphi 0, %s134
    %s151 = sphi 0, %s135
  $region4: #{attention_forward.1} parent=0 // loop_header_branch
    %14 = sbr.rel (%p12) target = $region8
  $region5: #{attention_forward.1} parent=0 // loop_body
    %s16 = ssub.s32 %s11, 1
    %s17 = ssub.s32 %s11, 2
    %s18 = sadd.s32 %s11, 1
    %s19 = ssub.s32 %s11, %s18
    %p20 = scmp.eq.s32.totalorder %s19, 0
    %s22 = sadd.s32 %s21, 1
    %s23 = scalar_select %p20, %s21, %s22
    %p26 = pneg %p20
    %p27 = scmp.eq.s32.totalorder %s11, 1
    %p28 = por %p26, %p27
    %p29 = scmp.ne.s32.totalorder %s21, %s24
    %p30 = scmp.eq.s32.totalorder %s11, 0
    %p31 = por %p29, %p30
    %p32 = scmp.ne.s32.totalorder %s21, %s24
    %p33 = scmp.eq.s32.totalorder %s16, 1
    %p34 = por %p32, %p33
    %p35 = scmp.ne.s32.totalorder %s24, %s25
    %p36 = scmp.eq.s32.totalorder %s16, 0
    %p37 = por %p35, %p36
    %p38 = scmp.ne.s32.totalorder %s24, %s25
    %p39 = scmp.eq.s32.totalorder %s17, 1
    %p40 = por %p38, %p39
    %p42 = scmp.ne.s32.totalorder %s25, %s41
    %p43 = scmp.eq.s32.totalorder %s17, 0
    %p44 = por %p42, %p43
    %s46 = sadd.s32 %s45, 1
    %p49 = scmp.eq.s32.totalorder %s11, 1
    %p50 = scmp.ne.s32.totalorder %s45, %s47
    %p51 = scmp.eq.s32.totalorder %s11, 0
    %p52 = por %p50, %p51
    %p53 = scmp.ne.s32.totalorder %s45, %s47
    %p54 = scmp.eq.s32.totalorder %s16, 1
    %p55 = por %p53, %p54
    %p56 = scmp.ne.s32.totalorder %s47, %s48
    %p57 = scmp.eq.s32.totalorder %s16, 0
    %p58 = por %p56, %p57
    %p59 = scmp.ne.s32.totalorder %s47, %s48
    %p60 = scmp.eq.s32.totalorder %s17, 1
    %p61 = por %p59, %p60
    %p63 = scmp.ne.s32.totalorder %s48, %s62
    %p64 = scmp.eq.s32.totalorder %s17, 0
    %p65 = por %p63, %p64
    %s67 = sadd.s32 %s66, 1
    %p70 = scmp.eq.s32.totalorder %s11, 1
    %p71 = scmp.ne.s32.totalorder %s66, %s68
    %p72 = scmp.eq.s32.totalorder %s11, 0
    %p73 = por %p71, %p72
    %p74 = scmp.ne.s32.totalorder %s66, %s68
    %p75 = scmp.eq.s32.totalorder %s16, 1
    %p76 = por %p74, %p75
    %p77 = scmp.ne.s32.totalorder %s68, %s69
    %p78 = scmp.eq.s32.totalorder %s16, 0
    %p79 = por %p77, %p78
    %p80 = scmp.ne.s32.totalorder %s68, %s69
    %p81 = scmp.eq.s32.totalorder %s17, 1
    %p82 = por %p80, %p81
    %p84 = scmp.ne.s32.totalorder %s69, %s83
    %p85 = scmp.eq.s32.totalorder %s17, 0
    %p86 = por %p84, %p85
    %s88 = sadd.s32 %s87, 1
    %p91 = scmp.eq.s32.totalorder %s11, 1
    %p92 = scmp.ne.s32.totalorder %s87, %s89
    %p93 = scmp.eq.s32.totalorder %s11, 0
    %p94 = por %p92, %p93
    %p95 = scmp.ne.s32.totalorder %s87, %s89
    %p96 = scmp.eq.s32.totalorder %s16, 1
    %p97 = por %p95, %p96
    %p98 = scmp.ne.s32.totalorder %s89, %s90
    %p99 = scmp.eq.s32.totalorder %s16, 0
    %p100 = por %p98, %p99
    %p101 = scmp.ne.s32.totalorder %s89, %s90
    %p102 = scmp.eq.s32.totalorder %s17, 1
    %p103 = por %p101, %p102
    %p105 = scmp.ne.s32.totalorder %s90, %s104
    %p106 = scmp.eq.s32.totalorder %s17, 0
    %p107 = por %p105, %p106
    %s109 = sadd.s32 %s108, 1
    %p112 = scmp.eq.s32.totalorder %s11, 1
    %p113 = scmp.ne.s32.totalorder %s108, %s110
    %p114 = scmp.eq.s32.totalorder %s11, 0
    %p115 = por %p113, %p114
    %p116 = scmp.ne.s32.totalorder %s108, %s110
    %p117 = scmp.eq.s32.totalorder %s16, 1
    %p118 = por %p116, %p117
    %p119 = scmp.ne.s32.totalorder %s110, %s111
    %p120 = scmp.eq.s32.totalorder %s16, 0
    %p121 = por %p119, %p120
    %p122 = scmp.ne.s32.totalorder %s110, %s111
    %p123 = scmp.eq.s32.totalorder %s17, 1
    %p124 = por %p122, %p123
    %p126 = scmp.ne.s32.totalorder %s111, %s125
    %p127 = scmp.eq.s32.totalorder %s17, 0
    %p128 = por %p126, %p127
    %s129 = ssub.s32 %s11, %s18
    %p130 = scmp.eq.s32.totalorder %s129, 0
    %s132 = sadd.s32 %s131, 1
    %s133 = scalar_select %p130, %s131, %s132
    %p136 = pneg %p130
    %p137 = scmp.eq.s32.totalorder %s11, 1
    %p138 = por %p136, %p137
    %p139 = scmp.ne.s32.totalorder %s131, %s134
    %p140 = scmp.eq.s32.totalorder %s11, 0
    %p141 = por %p139, %p140
    %p142 = scmp.ne.s32.totalorder %s131, %s134
    %p143 = scmp.eq.s32.totalorder %s16, 1
    %p144 = por %p142, %p143
    %p145 = scmp.ne.s32.totalorder %s134, %s135
    %p146 = scmp.eq.s32.totalorder %s16, 0
    %p147 = por %p145, %p146
    %p148 = scmp.ne.s32.totalorder %s134, %s135
    %p149 = scmp.eq.s32.totalorder %s17, 1
    %p150 = por %p148, %p149
    %p152 = scmp.ne.s32.totalorder %s135, %s151
    %p153 = scmp.eq.s32.totalorder %s17, 0
    %p154 = por %p152, %p153
    %p155 = scmp.le.s32.totalorder 1, %s11
    %p156 = scmp.lt.s32.totalorder %s11, 3
    %p157 = pnand %p155, %p156
    %p158 = pneg %p157
    // Predicated region
    $region9: #{attention_forward.1} parent=5 // pred_check
      _
    $region10: #{attention_forward.1} parent=5 // pred_check_branch
      %160 = sbr.rel (%p157) target = $region12
    $region11: #{attention_forward.1} parent=5 // pred_region
      %s161 = ssub.s32 %s11, 1
      // Predicated region
      $region13: #{attention_forward.1} parent=11 // pred_check
        %p162 = pneg %p58
      $region14: #{attention_forward.1} parent=11 // pred_check_branch
        %164 = sbr.rel (%p162) target = $region16
      $region15: #{attention_forward.1} parent=11 // pred_region
        _
      $region16: #{attention_forward.1} parent=11 // pred_fallthru
        _
      // Predicated region
      $region17: #{attention_forward.1} parent=11 // pred_check
        %p165 = pneg %p79
      $region18: #{attention_forward.1} parent=11 // pred_check_branch
        %167 = sbr.rel (%p165) target = $region20
      $region19: #{attention_forward.1} parent=11 // pred_region
        _
      $region20: #{attention_forward.1} parent=11 // pred_fallthru
        _
      // Predicated region
      $region21: #{attention_forward.1} parent=11 // pred_check
        %p168 = pneg %p100
      $region22: #{attention_forward.1} parent=11 // pred_check_branch
        %170 = sbr.rel (%p168) target = $region24
      $region23: #{attention_forward.1} parent=11 // pred_region
        _
      $region24: #{attention_forward.1} parent=11 // pred_fallthru
        _
      // Predicated region
      $region25: #{attention_forward.1} parent=11 // pred_check
        %p171 = pneg %p121
      $region26: #{attention_forward.1} parent=11 // pred_check_branch
        %173 = sbr.rel (%p171) target = $region28
      $region27: #{attention_forward.1} parent=11 // pred_region
        _
      $region28: #{attention_forward.1} parent=11 // pred_fallthru
        _
    $region12: #{attention_forward.1} parent=5 // pred_fallthru
      _
    %p174 = scmp.lt.s32.totalorder %s11, 2
    // Predicated region
    $region29: #{attention_forward.1} parent=5 // pred_check
      %p175 = pneg %p174
    $region30: #{attention_forward.1} parent=5 // pred_check_branch
      %177 = sbr.rel (%p175) target = $region32
    $region31: #{attention_forward.1} parent=5 // pred_region
      // Predicated region
      $region33: #{attention_forward.1} parent=31 // pred_check
        %p178 = pneg %p31
      $region34: #{attention_forward.1} parent=31 // pred_check_branch
        %180 = sbr.rel (%p178) target = $region36
      $region35: #{attention_forward.1} parent=31 // pred_region
        %s181 = smul.u32 4, %s11
        %p182 = scmp.lt.s32.totalorder %s181, 7
        %s183 = scalar_select %p182, %s181, 7
        %s184 = smul.addr %s183, 2
        %s185 = smul.addr %s184, 8
        %s186 = scalar_lea.vmem %s0, %s185
        %s187 = smul.u32 4, %s11
      $region36: #{attention_forward.1} parent=31 // pred_fallthru
        _
    $region32: #{attention_forward.1} parent=5 // pred_fallthru
      _
    %p188 = scmp.le.s32.totalorder 1, %s11
    %p189 = scmp.lt.s32.totalorder %s11, 3
    %p190 = pnand %p188, %p189
    %p191 = pneg %p190
    // Predicated region
    $region37: #{attention_forward.1} parent=5 // pred_check
      _
    $region38: #{attention_forward.1} parent=5 // pred_check_branch
      %193 = sbr.rel (%p190) target = $region40
    $region39: #{attention_forward.1} parent=5 // pred_region
      %s194 = ssub.s32 %s11, 1
      %s195 = smul.u32 4, %s16
      %p196 = scmp.lt.s32.totalorder %s195, 7
      %s197 = scalar_select %p196, %s195, 7
      %s198 = smul.addr %s197, 2
      %s199 = smul.addr %s198, 8
      %s200 = scalar_lea.vmem %s0, %s199
      %p201 = pneg %p37
      %p202 = pneg %p34
      %p203 = pneg %p58
      %p204 = pneg %p55
      %p205 = pneg %p79
      %p206 = pneg %p76
      %p207 = pneg %p100
      %p208 = pneg %p97
      %p209 = pneg %p121
      %p210 = pneg %p118
      %p211 = pneg %p147
      %p212 = pneg %p144
      %s213 = smul.u32 4, %s16
      %p214 = scmp.lt.s32.totalorder %s213, 7
      %s215 = scalar_select %p214, %s213, 7
      %s216 = smul.addr %s215, 2
      %s217 = smul.addr %s216, 8
      %s218 = scalar_lea.vmem %s5, %s217
      %s219 = smul.u32 4, %s16
      %p220 = scmp.lt.s32.totalorder %s219, 7
      %s221 = scalar_select %p220, %s219, 7
      %s222 = smul.addr %s221, 2
      %s223 = smul.addr %s222, 8
      %s224 = scalar_lea.vmem %s0, %s223
      %s225 = smul.u32 4, %s16
      %s226 = smul.u32 4, %s16
      %p227 = scmp.lt.s32.totalorder %s226, 7
      %s228 = scalar_select %p227, %s226, 7
      %s229 = smul.addr %s228, 2
      %s230 = smul.addr %s229, 8
      %s231 = scalar_lea.vmem %s5, %s230
      %s232 = smul.u32 4, %s16
      %v233 = vld [vmem:[%s224] sm:$0xff]
      %v234 = vld [vmem:[%s224 + $0x8] sm:$0xff]
      %v235 = vld [vmem:[%s224 + $0x10] sm:$0xff]
      %v236 = vld [vmem:[%s224 + $0x18] sm:$0xff]
      %v237 = vld [vmem:[%s224 + $0x20] sm:$0xff]
      %v238 = vld [vmem:[%s224 + $0x28] sm:$0xff]
      %v239 = vld [vmem:[%s224 + $0x30] sm:$0xff]
      %v240 = vld [vmem:[%s224 + $0x38] sm:$0xff]
      %v241 = vld [vmem:[%s1] sm:$0xff]
      %v242 = vld [vmem:[%s1 + $0x8] sm:$0xff]
      %v243 = vld [vmem:[%s1 + $0x10] sm:$0xff]
      %v244 = vld [vmem:[%s1 + $0x18] sm:$0xff]
      %v245 = vld [vmem:[%s1 + $0x20] sm:$0xff]
      %v246 = vld [vmem:[%s1 + $0x28] sm:$0xff]
      %v247 = vld [vmem:[%s1 + $0x30] sm:$0xff]
      %v248 = vld [vmem:[%s1 + $0x38] sm:$0xff]
      %v249 = vld [vmem:[%s1 + $0x40] sm:$0xff]
      %v250 = vld [vmem:[%s1 + $0x48] sm:$0xff]
      %v251 = vld [vmem:[%s1 + $0x50] sm:$0xff]
      %v252 = vld [vmem:[%s1 + $0x58] sm:$0xff]
      %v253 = vld [vmem:[%s1 + $0x60] sm:$0xff]
      %v254 = vld [vmem:[%s1 + $0x68] sm:$0xff]
      %v255 = vld [vmem:[%s1 + $0x70] sm:$0xff]
      %v256 = vld [vmem:[%s1 + $0x78] sm:$0xff]
      %v257 = vld [vmem:[%s1 + $0x80] sm:$0xff]
      %v258 = vld [vmem:[%s1 + $0x88] sm:$0xff]
      %v259 = vld [vmem:[%s1 + $0x90] sm:$0xff]
      %v260 = vld [vmem:[%s1 + $0x98] sm:$0xff]
      %v261 = vld [vmem:[%s1 + $0xa0] sm:$0xff]
      %v262 = vld [vmem:[%s1 + $0xa8] sm:$0xff]
      %v263 = vld [vmem:[%s1 + $0xb0] sm:$0xff]
      %v264 = vld [vmem:[%s1 + $0xb8] sm:$0xff]
      %v265 = vld [vmem:[%s1 + $0xc0] sm:$0xff]
      %v266 = vld [vmem:[%s1 + $0xc8] sm:$0xff]
      %v267 = vld [vmem:[%s1 + $0xd0] sm:$0xff]
      %v268 = vld [vmem:[%s1 + $0xd8] sm:$0xff]
      %v269 = vld [vmem:[%s1 + $0xe0] sm:$0xff]
      %v270 = vld [vmem:[%s1 + $0xe8] sm:$0xff]
      %v271 = vld [vmem:[%s1 + $0xf0] sm:$0xff]
      %v272 = vld [vmem:[%s1 + $0xf8] sm:$0xff]
      %v273 = vld [vmem:[%s1 + $0x100] sm:$0xff]
      %v274 = vld [vmem:[%s1 + $0x108] sm:$0xff]
      %v275 = vld [vmem:[%s1 + $0x110] sm:$0xff]
      %v276 = vld [vmem:[%s1 + $0x118] sm:$0xff]
      %v277 = vld [vmem:[%s1 + $0x120] sm:$0xff]
      %v278 = vld [vmem:[%s1 + $0x128] sm:$0xff]
      %v279 = vld [vmem:[%s1 + $0x130] sm:$0xff]
      %v280 = vld [vmem:[%s1 + $0x138] sm:$0xff]
      %v281 = vld [vmem:[%s1 + $0x140] sm:$0xff]
      %v282 = vld [vmem:[%s1 + $0x148] sm:$0xff]
      %v283 = vld [vmem:[%s1 + $0x150] sm:$0xff]
      %v284 = vld [vmem:[%s1 + $0x158] sm:$0xff]
      %v285 = vld [vmem:[%s1 + $0x160] sm:$0xff]
      %v286 = vld [vmem:[%s1 + $0x168] sm:$0xff]
      %v287 = vld [vmem:[%s1 + $0x170] sm:$0xff]
      %v288 = vld [vmem:[%s1 + $0x178] sm:$0xff]
      %v289 = vld [vmem:[%s2] sm:$0x7]
      %v291 = vlaneseq
      %v292 = vshrl.u32 %v291, 7
      %v293 = vsub.s32 0, %v292
      %v294 = vrot.slane %v289, %v293
      %v295 = vlaneseq
      %v296 = vshrl.u32 %v295, 7
      %v297 = vsub.s32 1, %v296
      %v298 = vrot.slane %v289, %v297
      %v299 = vlaneseq
      %v300 = vshrl.u32 %v299, 7
      %v301 = vsub.s32 2, %v300
      %v302 = vrot.slane %v289, %v301
      %306 = vmatprep.subr.mxu0 %v287
      %307 = vmatpush1.msra.mxu0 %v286
      %308 = vmatprep.subr.mxu0 %v284
      %309 = vmatpush1.msra.mxu0 %v283
      %310 = vmatprep.subr.mxu0 %v281
      %311 = vmatpush1.msra.mxu0 %v280
      %312 = vmatprep.subr.mxu0 %v278
      %313 = vmatpush1.msra.mxu0 %v277
      %314 = vmatprep.subr.mxu0 %v275
      %315 = vmatpush1.msra.mxu0 %v274
      %316 = vmatprep.subr.mxu0 %v272
      %317 = vmatpush1.msra.mxu0 %v271
      %318 = vmatprep.subr.mxu0 %v269
      %319 = vmatpush1.msra.mxu0 %v268
      %320 = vmatprep.subr.mxu0 %v266
      %321 = vmatpush1.msra.mxu0 %v265
      %322 = vmatprep.subr.mxu0 %v263
      %323 = vmatpush1.msra.mxu0 %v262
      %324 = vmatprep.subr.mxu0 %v260
      %325 = vmatpush1.msra.mxu0 %v259
      %326 = vmatprep.subr.mxu0 %v257
      %327 = vmatpush1.msra.mxu0 %v256
      %328 = vmatprep.subr.mxu0 %v254
      %329 = vmatpush1.msra.mxu0 %v253
      %330 = vmatprep.subr.mxu0 %v251
      %331 = vmatpush1.msra.mxu0 %v250
      %332 = vmatprep.subr.mxu0 %v248
      %333 = vmatpush1.msra.mxu0 %v247
      %334 = vmatprep.subr.mxu0 %v245
      %335 = vmatpush1.msra.mxu0 %v244
      %336 = vmatprep.subr.mxu0 %v242
      %337 = vmatpush1.msra.mxu0 %v241
      %338 = vmatprep.subr.mxu0 0.0
      %339 = vmatpush2.msra.mxu0 0.0
      %340 = vmatprep.subr.mxu0 0.0
      %341 = vmatpush2.msra.mxu0 0.0
      %342 = vmatprep.subr.mxu0 0.0
      %343 = vmatpush2.msra.mxu0 0.0
      %344 = vmatprep.subr.mxu0 0.0
      %345 = vmatpush2.msra.mxu0 0.0
      %346 = vmatprep.subr.mxu0 0.0
      %347 = vmatpush2.msra.mxu0 0.0
      %348 = vmatprep.subr.mxu0 0.0
      %349 = vmatpush2.msra.mxu0 0.0
      %350 = vmatprep.subr.mxu0 0.0
      %351 = vmatpush2.msra.mxu0 0.0
      %352 = vmatprep.subr.mxu0 0.0
      %353 = vmatpush2.msra.mxu0 0.0
      %354 = vmatprep.subr.mxu0 0.0
      %355 = vmatpush2.msra.mxu0 0.0
      %356 = vmatprep.subr.mxu0 0.0
      %357 = vmatpush2.msra.mxu0 0.0
      %358 = vmatprep.subr.mxu0 0.0
      %359 = vmatpush2.msra.mxu0 0.0
      %360 = vmatprep.subr.mxu0 0.0
      %361 = vmatpush2.msra.mxu0 0.0
      %362 = vmatprep.subr.mxu0 0.0
      %363 = vmatpush2.msra.mxu0 0.0
      %364 = vmatprep.subr.mxu0 0.0
      %365 = vmatpush2.msra.mxu0 0.0
      %366 = vmatprep.subr.mxu0 0.0
      %367 = vmatpush2.msra.mxu0 0.0
      %368 = vmatprep.subr.mxu0 0.0
      %369 = vmatpush2.msra.mxu0 0.0
      %370 = vmatprep.mubr.f32.mxu0 0.0
      %371 = vmatmul.mubr.f32.gmra.mxu0 %v233
      %v372 = vpop.f32.mrf.mxu0
      %v373 = vadd.f32 %v294, %v372
      %v374 = vpop.f32.mrf.mxu0
      %v375 = vadd.f32 %v298, %v374
      %376 = vmatprep.mubr.f32.mxu0 0.0
      %377 = vmatmul.mubr.f32.gmra.mxu0 %v234
      %v378 = vpop.f32.mrf.mxu0
      %v379 = vadd.f32 %v294, %v378
      %v380 = vpop.f32.mrf.mxu0
      %v381 = vadd.f32 %v298, %v380
      %382 = vmatprep.mubr.f32.mxu0 0.0
      %383 = vmatmul.mubr.f32.gmra.mxu0 %v235
      %v384 = vpop.f32.mrf.mxu0
      %v385 = vadd.f32 %v294, %v384
      %v386 = vpop.f32.mrf.mxu0
      %v387 = vadd.f32 %v298, %v386
      %388 = vmatprep.mubr.f32.mxu0 0.0
      %389 = vmatmul.mubr.f32.gmra.mxu0 %v236
      %v390 = vpop.f32.mrf.mxu0
      %v391 = vadd.f32 %v294, %v390
      %v392 = vpop.f32.mrf.mxu0
      %v393 = vadd.f32 %v298, %v392
      %394 = vmatprep.mubr.f32.mxu0 0.0
      %395 = vmatmul.mubr.f32.gmra.mxu0 %v237
      %v396 = vpop.f32.mrf.mxu0
      %v397 = vadd.f32 %v294, %v396
      %v398 = vpop.f32.mrf.mxu0
      %v399 = vadd.f32 %v298, %v398
      %400 = vmatprep.mubr.f32.mxu0 0.0
      %401 = vmatmul.mubr.f32.gmra.mxu0 %v238
      %v402 = vpop.f32.mrf.mxu0
      %v403 = vadd.f32 %v294, %v402
      %v404 = vpop.f32.mrf.mxu0
      %v405 = vadd.f32 %v298, %v404
      %406 = vmatprep.mubr.f32.mxu0 0.0
      %407 = vmatmul.mubr.f32.gmra.mxu0 %v239
      %v408 = vpop.f32.mrf.mxu0
      %v409 = vadd.f32 %v294, %v408
      %v410 = vpop.f32.mrf.mxu0
      %v411 = vadd.f32 %v298, %v410
      %412 = vmatprep.mubr.f32.mxu0 0.0
      %413 = vmatmul.mubr.f32.gmra.mxu0 %v240
      %v414 = vpop.f32.mrf.mxu0
      %v415 = vadd.f32 %v294, %v414
      %v416 = vpop.f32.mrf.mxu0
      %v417 = vadd.f32 %v298, %v416
      %418 = vdwg.mxu0
      %419 = vmatprep.subr.mxu0 0.0
      %420 = vmatpush1.msra.mxu0 %v288
      %421 = vmatprep.subr.mxu0 0.0
      %422 = vmatpush1.msra.mxu0 %v285
      %423 = vmatprep.subr.mxu0 0.0
      %424 = vmatpush1.msra.mxu0 %v282
      %425 = vmatprep.subr.mxu0 0.0
      %426 = vmatpush1.msra.mxu0 %v279
      %427 = vmatprep.subr.mxu0 0.0
      %428 = vmatpush1.msra.mxu0 %v276
      %429 = vmatprep.subr.mxu0 0.0
      %430 = vmatpush1.msra.mxu0 %v273
      %431 = vmatprep.subr.mxu0 0.0
      %432 = vmatpush1.msra.mxu0 %v270
      %433 = vmatprep.subr.mxu0 0.0
      %434 = vmatpush1.msra.mxu0 %v267
      %435 = vmatprep.subr.mxu0 0.0
      %436 = vmatpush1.msra.mxu0 %v264
      %437 = vmatprep.subr.mxu0 0.0
      %438 = vmatpush1.msra.mxu0 %v261
      %439 = vmatprep.subr.mxu0 0.0
      %440 = vmatpush1.msra.mxu0 %v258
      %441 = vmatprep.subr.mxu0 0.0
      %442 = vmatpush1.msra.mxu0 %v255
      %443 = vmatprep.subr.mxu0 0.0
      %444 = vmatpush1.msra.mxu0 %v252
      %445 = vmatprep.subr.mxu0 0.0
      %446 = vmatpush1.msra.mxu0 %v249
      %447 = vmatprep.subr.mxu0 0.0
      %448 = vmatpush1.msra.mxu0 %v246
      %449 = vmatprep.subr.mxu0 0.0
      %450 = vmatpush1.msra.mxu0 %v243
      %451 = vmatprep.subr.mxu0 0.0
      %452 = vmatpush2.msra.mxu0 0.0
      %453 = vmatprep.subr.mxu0 0.0
      %454 = vmatpush2.msra.mxu0 0.0
      %455 = vmatprep.subr.mxu0 0.0
      %456 = vmatpush2.msra.mxu0 0.0
      %457 = vmatprep.subr.mxu0 0.0
      %458 = vmatpush2.msra.mxu0 0.0
      %459 = vmatprep.subr.mxu0 0.0
      %460 = vmatpush2.msra.mxu0 0.0
      %461 = vmatprep.subr.mxu0 0.0
      %462 = vmatpush2.msra.mxu0 0.0
      %463 = vmatprep.subr.mxu0 0.0
      %464 = vmatpush2.msra.mxu0 0.0
      %465 = vmatprep.subr.mxu0 0.0
      %466 = vmatpush2.msra.mxu0 0.0
      %467 = vmatprep.subr.mxu0 0.0
      %468 = vmatpush2.msra.mxu0 0.0
      %469 = vmatprep.subr.mxu0 0.0
      %470 = vmatpush2.msra.mxu0 0.0
      %471 = vmatprep.subr.mxu0 0.0
      %472 = vmatpush2.msra.mxu0 0.0
      %473 = vmatprep.subr.mxu0 0.0
      %474 = vmatpush2.msra.mxu0 0.0
      %475 = vmatprep.subr.mxu0 0.0
      %476 = vmatpush2.msra.mxu0 0.0
      %477 = vmatprep.subr.mxu0 0.0
      %478 = vmatpush2.msra.mxu0 0.0
      %479 = vmatprep.subr.mxu0 0.0
      %480 = vmatpush2.msra.mxu0 0.0
      %481 = vmatprep.subr.mxu0 0.0
      %482 = vmatpush2.msra.mxu0 0.0
      %483 = vmatprep.mubr.f32.mxu0 0.0
      %484 = vmatmul.mubr.f32.gmra.mxu0 %v233
      %v485 = vpop.f32.mrf.mxu0
      %v486 = vadd.f32 %v302, %v485
      %v487 = vpop.f32.mrf.mxu0
      %488 = vmatprep.mubr.f32.mxu0 0.0
      %489 = vmatmul.mubr.f32.gmra.mxu0 %v234
      %v490 = vpop.f32.mrf.mxu0
      %v491 = vadd.f32 %v302, %v490
      %v492 = vpop.f32.mrf.mxu0
      %493 = vmatprep.mubr.f32.mxu0 0.0
      %494 = vmatmul.mubr.f32.gmra.mxu0 %v235
      %v495 = vpop.f32.mrf.mxu0
      %v496 = vadd.f32 %v302, %v495
      %v497 = vpop.f32.mrf.mxu0
      %498 = vmatprep.mubr.f32.mxu0 0.0
      %499 = vmatmul.mubr.f32.gmra.mxu0 %v236
      %v500 = vpop.f32.mrf.mxu0
      %v501 = vadd.f32 %v302, %v500
      %v502 = vpop.f32.mrf.mxu0
      %503 = vmatprep.mubr.f32.mxu0 0.0
      %504 = vmatmul.mubr.f32.gmra.mxu0 %v237
      %v505 = vpop.f32.mrf.mxu0
      %v506 = vadd.f32 %v302, %v505
      %v507 = vpop.f32.mrf.mxu0
      %508 = vmatprep.mubr.f32.mxu0 0.0
      %509 = vmatmul.mubr.f32.gmra.mxu0 %v238
      %v510 = vpop.f32.mrf.mxu0
      %v511 = vadd.f32 %v302, %v510
      %v512 = vpop.f32.mrf.mxu0
      %513 = vmatprep.mubr.f32.mxu0 0.0
      %514 = vmatmul.mubr.f32.gmra.mxu0 %v239
      %v515 = vpop.f32.mrf.mxu0
      %v516 = vadd.f32 %v302, %v515
      %v517 = vpop.f32.mrf.mxu0
      %518 = vmatprep.mubr.f32.mxu0 0.0
      %519 = vmatmul.mubr.f32.gmra.mxu0 %v240
      %v520 = vpop.f32.mrf.mxu0
      %v521 = vadd.f32 %v302, %v520
      %v522 = vpop.f32.mrf.mxu0
      %523 = vdwg.mxu0
      %vm524 = vcmask 261120
      %v526 = vsel %vm524, %v373, 0
      %v529 = vsel %vm524, %v379, 0
      %v532 = vsel %vm524, %v375, 0
      %v535 = vsel %vm524, %v381, 0
      %537 = vmatprep.subr.mxu0 0.0
      %538 = vmatpush1.xpose.msra.mxu0 0.0
      %539 = vmatprep.subr.mxu0 0.0
      %540 = vmatpush1.xpose.msra.mxu0 0.0
      %541 = vmatprep.subr.mxu0 0.0
      %542 = vmatpush1.xpose.msra.mxu0 0.0
      %543 = vmatprep.subr.mxu0 0.0
      %544 = vmatpush1.xpose.msra.mxu0 0.0
      %545 = vmatprep.subr.mxu0 0.0
      %546 = vmatpush1.xpose.msra.mxu0 0.0
      %547 = vmatprep.subr.mxu0 0.0
      %548 = vmatpush1.xpose.msra.mxu0 0.0
      %549 = vmatprep.subr.mxu0 0.0
      %550 = vmatpush1.xpose.msra.mxu0 0.0
      %551 = vmatprep.subr.mxu0 0.0
      %552 = vmatpush1.xpose.msra.mxu0 0.0
      %553 = vmatprep.subr.mxu0 0.0
      %554 = vmatpush1.xpose.msra.mxu0 0.0
      %555 = vmatprep.subr.mxu0 0.0
      %556 = vmatpush1.xpose.msra.mxu0 0.0
      %557 = vmatprep.subr.mxu0 0.0
      %558 = vmatpush1.xpose.msra.mxu0 0.0
      %559 = vmatprep.subr.mxu0 0.0
      %560 = vmatpush1.xpose.msra.mxu0 0.0
      %561 = vmatprep.subr.mxu0 0.0
      %562 = vmatpush1.xpose.msra.mxu0 0.0
      %563 = vmatprep.subr.mxu0 0.0
      %564 = vmatpush1.xpose.msra.mxu0 0.0
      %565 = vmatprep.subr.mxu0 0.0
      %566 = vmatpush1.xpose.msra.mxu0 %v535
      %567 = vmatprep.subr.mxu0 0.0
      %568 = vmatpush1.xpose.msra.mxu0 %v532
      %569 = vmatprep.subr.mxu0 0.0
      %570 = vmatpush2.xpose.msra.mxu0 0.0
      %571 = vmatprep.subr.mxu0 0.0
      %572 = vmatpush2.xpose.msra.mxu0 0.0
      %573 = vmatprep.subr.mxu0 0.0
      %574 = vmatpush2.xpose.msra.mxu0 0.0
      %575 = vmatprep.subr.mxu0 0.0
      %576 = vmatpush2.xpose.msra.mxu0 0.0
      %577 = vmatprep.subr.mxu0 0.0
      %578 = vmatpush2.xpose.msra.mxu0 0.0
      %579 = vmatprep.subr.mxu0 0.0
      %580 = vmatpush2.xpose.msra.mxu0 0.0
      %581 = vmatprep.subr.mxu0 0.0
      %582 = vmatpush2.xpose.msra.mxu0 0.0
      %583 = vmatprep.subr.mxu0 0.0
      %584 = vmatpush2.xpose.msra.mxu0 0.0
      %585 = vmatprep.subr.mxu0 0.0
      %586 = vmatpush2.xpose.msra.mxu0 0.0
      %587 = vmatprep.subr.mxu0 0.0
      %588 = vmatpush2.xpose.msra.mxu0 0.0
      %589 = vmatprep.subr.mxu0 0.0
      %590 = vmatpush2.xpose.msra.mxu0 0.0
      %591 = vmatprep.subr.mxu0 0.0
      %592 = vmatpush2.xpose.msra.mxu0 0.0
      %593 = vmatprep.subr.mxu0 0.0
      %594 = vmatpush2.xpose.msra.mxu0 0.0
      %595 = vmatprep.subr.mxu0 0.0
      %596 = vmatpush2.xpose.msra.mxu0 0.0
      %597 = vmatprep.subr.mxu0 0.0
      %598 = vmatpush2.xpose.msra.mxu0 0.0
      %599 = vmatprep.subr.mxu0 0.0
      %600 = vmatpush2.xpose.msra.mxu0 0.0
      %601 = vmatprep.mubr.f32.mxu0 0.0
      %602 = vmatmul.mubr.f32.gmra.mxu0 %v526
      %v603 = vpop.f32.mrf.mxu0
      %v604 = vadd.f32 0.0, %v603
      %v605 = vpop.f32.mrf.mxu0
      %606 = vmatprep.mubr.f32.mxu0 0.0
      %607 = vmatmul.mubr.f32.gmra.mxu0 %v529
      %v608 = vpop.f32.mrf.mxu0
      %v609 = vadd.f32 0.0, %v608
      %v610 = vpop.f32.mrf.mxu0
      %611 = vdwg.mxu0
      %v613 = vsel %vm524, %v385, 0
      %v616 = vsel %vm524, %v391, 0
      %v619 = vsel %vm524, %v387, 0
      %v622 = vsel %vm524, %v393, 0
      %624 = vmatprep.subr.mxu0 0.0
      %625 = vmatpush1.xpose.msra.mxu0 0.0
      %626 = vmatprep.subr.mxu0 0.0
      %627 = vmatpush1.xpose.msra.mxu0 0.0
      %628 = vmatprep.subr.mxu0 0.0
      %629 = vmatpush1.xpose.msra.mxu0 0.0
      %630 = vmatprep.subr.mxu0 0.0
      %631 = vmatpush1.xpose.msra.mxu0 0.0
      %632 = vmatprep.subr.mxu0 0.0
      %633 = vmatpush1.xpose.msra.mxu0 0.0
      %634 = vmatprep.subr.mxu0 0.0
      %635 = vmatpush1.xpose.msra.mxu0 0.0
      %636 = vmatprep.subr.mxu0 0.0
      %637 = vmatpush1.xpose.msra.mxu0 0.0
      %638 = vmatprep.subr.mxu0 0.0
      %639 = vmatpush1.xpose.msra.mxu0 0.0
      %640 = vmatprep.subr.mxu0 0.0
      %641 = vmatpush1.xpose.msra.mxu0 0.0
      %642 = vmatprep.subr.mxu0 0.0
      %643 = vmatpush1.xpose.msra.mxu0 0.0
      %644 = vmatprep.subr.mxu0 0.0
      %645 = vmatpush1.xpose.msra.mxu0 0.0
      %646 = vmatprep.subr.mxu0 0.0
      %647 = vmatpush1.xpose.msra.mxu0 0.0
      %648 = vmatprep.subr.mxu0 0.0
      %649 = vmatpush1.xpose.msra.mxu0 0.0
      %650 = vmatprep.subr.mxu0 0.0
      %651 = vmatpush1.xpose.msra.mxu0 0.0
      %652 = vmatprep.subr.mxu0 0.0
      %653 = vmatpush1.xpose.msra.mxu0 %v622
      %654 = vmatprep.subr.mxu0 0.0
      %655 = vmatpush1.xpose.msra.mxu0 %v619
      %656 = vmatprep.subr.mxu0 0.0
      %657 = vmatpush2.xpose.msra.mxu0 0.0
      %658 = vmatprep.subr.mxu0 0.0
      %659 = vmatpush2.xpose.msra.mxu0 0.0
      %660 = vmatprep.subr.mxu0 0.0
      %661 = vmatpush2.xpose.msra.mxu0 0.0
      %662 = vmatprep.subr.mxu0 0.0
      %663 = vmatpush2.xpose.msra.mxu0 0.0
      %664 = vmatprep.subr.mxu0 0.0
      %665 = vmatpush2.xpose.msra.mxu0 0.0
      %666 = vmatprep.subr.mxu0 0.0
      %667 = vmatpush2.xpose.msra.mxu0 0.0
      %668 = vmatprep.subr.mxu0 0.0
      %669 = vmatpush2.xpose.msra.mxu0 0.0
      %670 = vmatprep.subr.mxu0 0.0
      %671 = vmatpush2.xpose.msra.mxu0 0.0
      %672 = vmatprep.subr.mxu0 0.0
      %673 = vmatpush2.xpose.msra.mxu0 0.0
      %674 = vmatprep.subr.mxu0 0.0
      %675 = vmatpush2.xpose.msra.mxu0 0.0
      %676 = vmatprep.subr.mxu0 0.0
      %677 = vmatpush2.xpose.msra.mxu0 0.0
      %678 = vmatprep.subr.mxu0 0.0
      %679 = vmatpush2.xpose.msra.mxu0 0.0
      %680 = vmatprep.subr.mxu0 0.0
      %681 = vmatpush2.xpose.msra.mxu0 0.0
      %682 = vmatprep.subr.mxu0 0.0
      %683 = vmatpush2.xpose.msra.mxu0 0.0
      %684 = vmatprep.subr.mxu0 0.0
      %685 = vmatpush2.xpose.msra.mxu0 0.0
      %686 = vmatprep.subr.mxu0 0.0
      %687 = vmatpush2.xpose.msra.mxu0 0.0
      %688 = vmatprep.mubr.f32.mxu0 0.0
      %689 = vmatmul.mubr.f32.gmra.mxu0 %v613
      %v690 = vpop.f32.mrf.mxu0
      %v691 = vadd.f32 0.0, %v690
      %v692 = vpop.f32.mrf.mxu0
      %693 = vmatprep.mubr.f32.mxu0 0.0
      %694 = vmatmul.mubr.f32.gmra.mxu0 %v616
      %v695 = vpop.f32.mrf.mxu0
      %v696 = vadd.f32 0.0, %v695
      %v697 = vpop.f32.mrf.mxu0
      %698 = vdwg.mxu0
      %v700 = vsel %vm524, %v397, 0
      %v703 = vsel %vm524, %v403, 0
      %v706 = vsel %vm524, %v399, 0
      %v709 = vsel %vm524, %v405, 0
      %711 = vmatprep.subr.mxu0 0.0
      %712 = vmatpush1.xpose.msra.mxu0 0.0
      %713 = vmatprep.subr.mxu0 0.0
      %714 = vmatpush1.xpose.msra.mxu0 0.0
      %715 = vmatprep.subr.mxu0 0.0
      %716 = vmatpush1.xpose.msra.mxu0 0.0
      %717 = vmatprep.subr.mxu0 0.0
      %718 = vmatpush1.xpose.msra.mxu0 0.0
      %719 = vmatprep.subr.mxu0 0.0
      %720 = vmatpush1.xpose.msra.mxu0 0.0
      %721 = vmatprep.subr.mxu0 0.0
      %722 = vmatpush1.xpose.msra.mxu0 0.0
      %723 = vmatprep.subr.mxu0 0.0
      %724 = vmatpush1.xpose.msra.mxu0 0.0
      %725 = vmatprep.subr.mxu0 0.0
      %726 = vmatpush1.xpose.msra.mxu0 0.0
      %727 = vmatprep.subr.mxu0 0.0
      %728 = vmatpush1.xpose.msra.mxu0 0.0
      %729 = vmatprep.subr.mxu0 0.0
      %730 = vmatpush1.xpose.msra.mxu0 0.0
      %731 = vmatprep.subr.mxu0 0.0
      %732 = vmatpush1.xpose.msra.mxu0 0.0
      %733 = vmatprep.subr.mxu0 0.0
      %734 = vmatpush1.xpose.msra.mxu0 0.0
      %735 = vmatprep.subr.mxu0 0.0
      %736 = vmatpush1.xpose.msra.mxu0 0.0
      %737 = vmatprep.subr.mxu0 0.0
      %738 = vmatpush1.xpose.msra.mxu0 0.0
      %739 = vmatprep.subr.mxu0 0.0
      %740 = vmatpush1.xpose.msra.mxu0 %v709
      %741 = vmatprep.subr.mxu0 0.0
      %742 = vmatpush1.xpose.msra.mxu0 %v706
      %743 = vmatprep.subr.mxu0 0.0
      %744 = vmatpush2.xpose.msra.mxu0 0.0
      %745 = vmatprep.subr.mxu0 0.0
      %746 = vmatpush2.xpose.msra.mxu0 0.0
      %747 = vmatprep.subr.mxu0 0.0
      %748 = vmatpush2.xpose.msra.mxu0 0.0
      %749 = vmatprep.subr.mxu0 0.0
      %750 = vmatpush2.xpose.msra.mxu0 0.0
      %751 = vmatprep.subr.mxu0 0.0
      %752 = vmatpush2.xpose.msra.mxu0 0.0
      %753 = vmatprep.subr.mxu0 0.0
      %754 = vmatpush2.xpose.msra.mxu0 0.0
      %755 = vmatprep.subr.mxu0 0.0
      %756 = vmatpush2.xpose.msra.mxu0 0.0
      %757 = vmatprep.subr.mxu0 0.0
      %758 = vmatpush2.xpose.msra.mxu0 0.0
      %759 = vmatprep.subr.mxu0 0.0
      %760 = vmatpush2.xpose.msra.mxu0 0.0
      %761 = vmatprep.subr.mxu0 0.0
      %762 = vmatpush2.xpose.msra.mxu0 0.0
      %763 = vmatprep.subr.mxu0 0.0
      %764 = vmatpush2.xpose.msra.mxu0 0.0
      %765 = vmatprep.subr.mxu0 0.0
      %766 = vmatpush2.xpose.msra.mxu0 0.0
      %767 = vmatprep.subr.mxu0 0.0
      %768 = vmatpush2.xpose.msra.mxu0 0.0
      %769 = vmatprep.subr.mxu0 0.0
      %770 = vmatpush2.xpose.msra.mxu0 0.0
      %771 = vmatprep.subr.mxu0 0.0
      %772 = vmatpush2.xpose.msra.mxu0 0.0
      %773 = vmatprep.subr.mxu0 0.0
      %774 = vmatpush2.xpose.msra.mxu0 0.0
      %775 = vmatprep.mubr.f32.mxu0 0.0
      %776 = vmatmul.mubr.f32.gmra.mxu0 %v700
      %v777 = vpop.f32.mrf.mxu0
      %v778 = vadd.f32 0.0, %v777
      %v779 = vpop.f32.mrf.mxu0
      %780 = vmatprep.mubr.f32.mxu0 0.0
      %781 = vmatmul.mubr.f32.gmra.mxu0 %v703
      %v782 = vpop.f32.mrf.mxu0
      %v783 = vadd.f32 0.0, %v782
      %v784 = vpop.f32.mrf.mxu0
      %785 = vdwg.mxu0
      %v787 = vsel %vm524, %v409, 0
      %v790 = vsel %vm524, %v415, 0
      %v793 = vsel %vm524, %v411, 0
      %v796 = vsel %vm524, %v417, 0
      %798 = vmatprep.subr.mxu0 0.0
      %799 = vmatpush1.xpose.msra.mxu0 0.0
      %800 = vmatprep.subr.mxu0 0.0
      %801 = vmatpush1.xpose.msra.mxu0 0.0
      %802 = vmatprep.subr.mxu0 0.0
      %803 = vmatpush1.xpose.msra.mxu0 0.0
      %804 = vmatprep.subr.mxu0 0.0
      %805 = vmatpush1.xpose.msra.mxu0 0.0
      %806 = vmatprep.subr.mxu0 0.0
      %807 = vmatpush1.xpose.msra.mxu0 0.0
      %808 = vmatprep.subr.mxu0 0.0
      %809 = vmatpush1.xpose.msra.mxu0 0.0
      %810 = vmatprep.subr.mxu0 0.0
      %811 = vmatpush1.xpose.msra.mxu0 0.0
      %812 = vmatprep.subr.mxu0 0.0
      %813 = vmatpush1.xpose.msra.mxu0 0.0
      %814 = vmatprep.subr.mxu0 0.0
      %815 = vmatpush1.xpose.msra.mxu0 0.0
      %816 = vmatprep.subr.mxu0 0.0
      %817 = vmatpush1.xpose.msra.mxu0 0.0
      %818 = vmatprep.subr.mxu0 0.0
      %819 = vmatpush1.xpose.msra.mxu0 0.0
      %820 = vmatprep.subr.mxu0 0.0
      %821 = vmatpush1.xpose.msra.mxu0 0.0
      %822 = vmatprep.subr.mxu0 0.0
      %823 = vmatpush1.xpose.msra.mxu0 0.0
      %824 = vmatprep.subr.mxu0 0.0
      %825 = vmatpush1.xpose.msra.mxu0 0.0
      %826 = vmatprep.subr.mxu0 0.0
      %827 = vmatpush1.xpose.msra.mxu0 %v796
      %828 = vmatprep.subr.mxu0 0.0
      %829 = vmatpush1.xpose.msra.mxu0 %v793
      %830 = vmatprep.subr.mxu0 0.0
      %831 = vmatpush2.xpose.msra.mxu0 0.0
      %832 = vmatprep.subr.mxu0 0.0
      %833 = vmatpush2.xpose.msra.mxu0 0.0
      %834 = vmatprep.subr.mxu0 0.0
      %835 = vmatpush2.xpose.msra.mxu0 0.0
      %836 = vmatprep.subr.mxu0 0.0
      %837 = vmatpush2.xpose.msra.mxu0 0.0
      %838 = vmatprep.subr.mxu0 0.0
      %839 = vmatpush2.xpose.msra.mxu0 0.0
      %840 = vmatprep.subr.mxu0 0.0
      %841 = vmatpush2.xpose.msra.mxu0 0.0
      %842 = vmatprep.subr.mxu0 0.0
      %843 = vmatpush2.xpose.msra.mxu0 0.0
      %844 = vmatprep.subr.mxu0 0.0
      %845 = vmatpush2.xpose.msra.mxu0 0.0
      %846 = vmatprep.subr.mxu0 0.0
      %847 = vmatpush2.xpose.msra.mxu0 0.0
      %848 = vmatprep.subr.mxu0 0.0
      %849 = vmatpush2.xpose.msra.mxu0 0.0
      %850 = vmatprep.subr.mxu0 0.0
      %851 = vmatpush2.xpose.msra.mxu0 0.0
      %852 = vmatprep.subr.mxu0 0.0
      %853 = vmatpush2.xpose.msra.mxu0 0.0
      %854 = vmatprep.subr.mxu0 0.0
      %855 = vmatpush2.xpose.msra.mxu0 0.0
      %856 = vmatprep.subr.mxu0 0.0
      %857 = vmatpush2.xpose.msra.mxu0 0.0
      %858 = vmatprep.subr.mxu0 0.0
      %859 = vmatpush2.xpose.msra.mxu0 0.0
      %860 = vmatprep.subr.mxu0 0.0
      %861 = vmatpush2.xpose.msra.mxu0 0.0
      %862 = vmatprep.mubr.f32.mxu0 0.0
      %863 = vmatmul.mubr.f32.gmra.mxu0 %v787
      %v864 = vpop.f32.mrf.mxu0
      %v865 = vadd.f32 0.0, %v864
      %v866 = vpop.f32.mrf.mxu0
      %867 = vmatprep.mubr.f32.mxu0 0.0
      %868 = vmatmul.mubr.f32.gmra.mxu0 %v790
      %v869 = vpop.f32.mrf.mxu0
      %v870 = vadd.f32 0.0, %v869
      %v871 = vpop.f32.mrf.mxu0
      %872 = vdwg.mxu0
      %vm873 = vcmask 130048
      %v874 = vsel %vm873, %v604, -inf
      %875 = vmax.xlane.f32.xlu0 %v874
      %v876 = vpop.xlane.xlu0 %875
      %v877 = vsel %vm873, %v609, -inf
      %878 = vmax.xlane.f32.xlu0 %v877
      %v879 = vpop.xlane.xlu0 %878
      %v880 = vsel %vm873, %v691, -inf
      %881 = vmax.xlane.f32.xlu0 %v880
      %v882 = vpop.xlane.xlu0 %881
      %v883 = vsel %vm873, %v696, -inf
      %884 = vmax.xlane.f32.xlu0 %v883
      %v885 = vpop.xlane.xlu0 %884
      %v886 = vsel %vm873, %v778, -inf
      %887 = vmax.xlane.f32.xlu0 %v886
      %v888 = vpop.xlane.xlu0 %887
      %v889 = vsel %vm873, %v783, -inf
      %890 = vmax.xlane.f32.xlu0 %v889
      %v891 = vpop.xlane.xlu0 %890
      %v892 = vsel %vm873, %v865, -inf
      %893 = vmax.xlane.f32.xlu0 %v892
      %v894 = vpop.xlane.xlu0 %893
      %v895 = vsel %vm873, %v870, -inf
      %896 = vmax.xlane.f32.xlu0 %v895
      %v897 = vpop.xlane.xlu0 %896
      %v898 = vsub.f32 %v604, %v876
      %v899 = vsub.f32 %v609, %v879
      %v900 = vsub.f32 %v691, %v882
      %v901 = vsub.f32 %v696, %v885
      %v902 = vsub.f32 %v778, %v888
      %v903 = vsub.f32 %v783, %v891
      %v904 = vsub.f32 %v865, %v894
      %v905 = vsub.f32 %v870, %v897
      %v906 = vmul.f32 %v898, 1.442695
      %v907 = vpow.pop %v906
      %v908 = vmul.f32 %v899, 1.442695
      %v909 = vpow.pop %v908
      %v910 = vmul.f32 %v900, 1.442695
      %v911 = vpow.pop %v910
      %v912 = vmul.f32 %v901, 1.442695
      %v913 = vpow.pop %v912
      %v914 = vmul.f32 %v902, 1.442695
      %v915 = vpow.pop %v914
      %v916 = vmul.f32 %v903, 1.442695
      %v917 = vpow.pop %v916
      %v918 = vmul.f32 %v904, 1.442695
      %v919 = vpow.pop %v918
      %v920 = vmul.f32 %v905, 1.442695
      %v921 = vpow.pop %v920
      %v922 = vsel %vm873, %v907, 0.0
      %923 = vadd.xlane.f32.xlu0 %v922
      %v924 = vpop.xlane.xlu0 %923
      %v925 = vsel %vm873, %v909, 0.0
      %926 = vadd.xlane.f32.xlu0 %v925
      %v927 = vpop.xlane.xlu0 %926
      %v928 = vsel %vm873, %v911, 0.0
      %929 = vadd.xlane.f32.xlu0 %v928
      %v930 = vpop.xlane.xlu0 %929
      %v931 = vsel %vm873, %v913, 0.0
      %932 = vadd.xlane.f32.xlu0 %v931
      %v933 = vpop.xlane.xlu0 %932
      %v934 = vsel %vm873, %v915, 0.0
      %935 = vadd.xlane.f32.xlu0 %v934
      %v936 = vpop.xlane.xlu0 %935
      %v937 = vsel %vm873, %v917, 0.0
      %938 = vadd.xlane.f32.xlu0 %v937
      %v939 = vpop.xlane.xlu0 %938
      %v940 = vsel %vm873, %v919, 0.0
      %941 = vadd.xlane.f32.xlu0 %v940
      %v942 = vpop.xlane.xlu0 %941
      %v943 = vsel %vm873, %v921, 0.0
      %944 = vadd.xlane.f32.xlu0 %v943
      %v945 = vpop.xlane.xlu0 %944
      %v946 = vrcp.pop %v924
      %v947 = vrcp.pop %v927
      %v948 = vrcp.pop %v930
      %v949 = vrcp.pop %v933
      %v950 = vrcp.pop %v936
      %v951 = vrcp.pop %v939
      %v952 = vrcp.pop %v942
      %v953 = vrcp.pop %v945
      %v954 = vmul.f32 %v907, %v946
      %v955 = vmul.f32 %v909, %v947
      %v956 = vmul.f32 %v911, %v948
      %v957 = vmul.f32 %v913, %v949
      %v958 = vmul.f32 %v915, %v950
      %v959 = vmul.f32 %v917, %v951
      %v960 = vmul.f32 %v919, %v952
      %v961 = vmul.f32 %v921, %v953
      %v963 = vsel %vm873, %v954, 0
      %v966 = vsel %vm873, %v955, 0
      %968 = vmatprep.subr.mxu0 0.0
      %969 = vmatpush1.msra.mxu0 0.0
      %970 = vmatprep.subr.mxu0 0.0
      %971 = vmatpush1.msra.mxu0 0.0
      %972 = vmatprep.subr.mxu0 0.0
      %973 = vmatpush1.msra.mxu0 0.0
      %974 = vmatprep.subr.mxu0 0.0
      %975 = vmatpush1.msra.mxu0 0.0
      %976 = vmatprep.subr.mxu0 0.0
      %977 = vmatpush1.msra.mxu0 0.0
      %978 = vmatprep.subr.mxu0 0.0
      %979 = vmatpush1.msra.mxu0 0.0
      %980 = vmatprep.subr.mxu0 0.0
      %981 = vmatpush1.msra.mxu0 0.0
      %982 = vmatprep.subr.mxu0 0.0
      %983 = vmatpush1.msra.mxu0 0.0
      %984 = vmatprep.subr.mxu0 0.0
      %985 = vmatpush1.msra.mxu0 0.0
      %986 = vmatprep.subr.mxu0 0.0
      %987 = vmatpush1.msra.mxu0 0.0
      %988 = vmatprep.subr.mxu0 0.0
      %989 = vmatpush1.msra.mxu0 0.0
      %990 = vmatprep.subr.mxu0 0.0
      %991 = vmatpush1.msra.mxu0 0.0
      %992 = vmatprep.subr.mxu0 0.0
      %993 = vmatpush1.msra.mxu0 0.0
      %994 = vmatprep.subr.mxu0 0.0
      %995 = vmatpush1.msra.mxu0 0.0
      %996 = vmatprep.subr.mxu0 0.0
      %997 = vmatpush1.msra.mxu0 %v491
      %998 = vmatprep.subr.mxu0 0.0
      %999 = vmatpush1.msra.mxu0 %v486
      %1000 = vmatprep.subr.mxu0 0.0
      %1001 = vmatpush2.msra.mxu0 0.0
      %1002 = vmatprep.subr.mxu0 0.0
      %1003 = vmatpush2.msra.mxu0 0.0
      %1004 = vmatprep.subr.mxu0 0.0
      %1005 = vmatpush2.msra.mxu0 0.0
      %1006 = vmatprep.subr.mxu0 0.0
      %1007 = vmatpush2.msra.mxu0 0.0
      %1008 = vmatprep.subr.mxu0 0.0
      %1009 = vmatpush2.msra.mxu0 0.0
      %1010 = vmatprep.subr.mxu0 0.0
      %1011 = vmatpush2.msra.mxu0 0.0
      %1012 = vmatprep.subr.mxu0 0.0
      %1013 = vmatpush2.msra.mxu0 0.0
      %1014 = vmatprep.subr.mxu0 0.0
      %1015 = vmatpush2.msra.mxu0 0.0
      %1016 = vmatprep.subr.mxu0 0.0
      %1017 = vmatpush2.msra.mxu0 0.0
      %1018 = vmatprep.subr.mxu0 0.0
      %1019 = vmatpush2.msra.mxu0 0.0
      %1020 = vmatprep.subr.mxu0 0.0
      %1021 = vmatpush2.msra.mxu0 0.0
      %1022 = vmatprep.subr.mxu0 0.0
      %1023 = vmatpush2.msra.mxu0 0.0
      %1024 = vmatprep.subr.mxu0 0.0
      %1025 = vmatpush2.msra.mxu0 0.0
      %1026 = vmatprep.subr.mxu0 0.0
      %1027 = vmatpush2.msra.mxu0 0.0
      %1028 = vmatprep.subr.mxu0 0.0
      %1029 = vmatpush2.msra.mxu0 0.0
      %1030 = vmatprep.subr.mxu0 0.0
      %1031 = vmatpush2.msra.mxu0 0.0
      %1032 = vmatprep.mubr.f32.mxu0 0.0
      %1033 = vmatmul.mubr.f32.gmra.mxu0 %v963
      %v1034 = vpop.f32.mrf.mxu0
      %v1035 = vadd.f32 0.0, %v1034
      %v1036 = vpop.f32.mrf.mxu0
      %1037 = vmatprep.mubr.f32.mxu0 0.0
      %1038 = vmatmul.mubr.f32.gmra.mxu0 %v966
      %v1039 = vpop.f32.mrf.mxu0
      %v1040 = vadd.f32 0.0, %v1039
      %v1041 = vpop.f32.mrf.mxu0
      %1042 = vdwg.mxu0
      %v1044 = vsel %vm873, %v956, 0
      %v1047 = vsel %vm873, %v957, 0
      %1049 = vmatprep.subr.mxu0 0.0
      %1050 = vmatpush1.msra.mxu0 0.0
      %1051 = vmatprep.subr.mxu0 0.0
      %1052 = vmatpush1.msra.mxu0 0.0
      %1053 = vmatprep.subr.mxu0 0.0
      %1054 = vmatpush1.msra.mxu0 0.0
      %1055 = vmatprep.subr.mxu0 0.0
      %1056 = vmatpush1.msra.mxu0 0.0
      %1057 = vmatprep.subr.mxu0 0.0
      %1058 = vmatpush1.msra.mxu0 0.0
      %1059 = vmatprep.subr.mxu0 0.0
      %1060 = vmatpush1.msra.mxu0 0.0
      %1061 = vmatprep.subr.mxu0 0.0
      %1062 = vmatpush1.msra.mxu0 0.0
      %1063 = vmatprep.subr.mxu0 0.0
      %1064 = vmatpush1.msra.mxu0 0.0
      %1065 = vmatprep.subr.mxu0 0.0
      %1066 = vmatpush1.msra.mxu0 0.0
      %1067 = vmatprep.subr.mxu0 0.0
      %1068 = vmatpush1.msra.mxu0 0.0
      %1069 = vmatprep.subr.mxu0 0.0
      %1070 = vmatpush1.msra.mxu0 0.0
      %1071 = vmatprep.subr.mxu0 0.0
      %1072 = vmatpush1.msra.mxu0 0.0
      %1073 = vmatprep.subr.mxu0 0.0
      %1074 = vmatpush1.msra.mxu0 0.0
      %1075 = vmatprep.subr.mxu0 0.0
      %1076 = vmatpush1.msra.mxu0 0.0
      %1077 = vmatprep.subr.mxu0 0.0
      %1078 = vmatpush1.msra.mxu0 %v501
      %1079 = vmatprep.subr.mxu0 0.0
      %1080 = vmatpush1.msra.mxu0 %v496
      %1081 = vmatprep.subr.mxu0 0.0
      %1082 = vmatpush2.msra.mxu0 0.0
      %1083 = vmatprep.subr.mxu0 0.0
      %1084 = vmatpush2.msra.mxu0 0.0
      %1085 = vmatprep.subr.mxu0 0.0
      %1086 = vmatpush2.msra.mxu0 0.0
      %1087 = vmatprep.subr.mxu0 0.0
      %1088 = vmatpush2.msra.mxu0 0.0
      %1089 = vmatprep.subr.mxu0 0.0
      %1090 = vmatpush2.msra.mxu0 0.0
      %1091 = vmatprep.subr.mxu0 0.0
      %1092 = vmatpush2.msra.mxu0 0.0
      %1093 = vmatprep.subr.mxu0 0.0
      %1094 = vmatpush2.msra.mxu0 0.0
      %1095 = vmatprep.subr.mxu0 0.0
      %1096 = vmatpush2.msra.mxu0 0.0
      %1097 = vmatprep.subr.mxu0 0.0
      %1098 = vmatpush2.msra.mxu0 0.0
      %1099 = vmatprep.subr.mxu0 0.0
      %1100 = vmatpush2.msra.mxu0 0.0
      %1101 = vmatprep.subr.mxu0 0.0
      %1102 = vmatpush2.msra.mxu0 0.0
      %1103 = vmatprep.subr.mxu0 0.0
      %1104 = vmatpush2.msra.mxu0 0.0
      %1105 = vmatprep.subr.mxu0 0.0
      %1106 = vmatpush2.msra.mxu0 0.0
      %1107 = vmatprep.subr.mxu0 0.0
      %1108 = vmatpush2.msra.mxu0 0.0
      %1109 = vmatprep.subr.mxu0 0.0
      %1110 = vmatpush2.msra.mxu0 0.0
      %1111 = vmatprep.subr.mxu0 0.0
      %1112 = vmatpush2.msra.mxu0 0.0
      %1113 = vmatprep.mubr.f32.mxu0 0.0
      %1114 = vmatmul.mubr.f32.gmra.mxu0 %v1044
      %v1115 = vpop.f32.mrf.mxu0
      %v1116 = vadd.f32 0.0, %v1115
      %v1117 = vpop.f32.mrf.mxu0
      %1118 = vmatprep.mubr.f32.mxu0 0.0
      %1119 = vmatmul.mubr.f32.gmra.mxu0 %v1047
      %v1120 = vpop.f32.mrf.mxu0
      %v1121 = vadd.f32 0.0, %v1120
      %v1122 = vpop.f32.mrf.mxu0
      %1123 = vdwg.mxu0
      %v1125 = vsel %vm873, %v958, 0
      %v1128 = vsel %vm873, %v959, 0
      %1130 = vmatprep.subr.mxu0 0.0
      %1131 = vmatpush1.msra.mxu0 0.0
      %1132 = vmatprep.subr.mxu0 0.0
      %1133 = vmatpush1.msra.mxu0 0.0
      %1134 = vmatprep.subr.mxu0 0.0
      %1135 = vmatpush1.msra.mxu0 0.0
      %1136 = vmatprep.subr.mxu0 0.0
      %1137 = vmatpush1.msra.mxu0 0.0
      %1138 = vmatprep.subr.mxu0 0.0
      %1139 = vmatpush1.msra.mxu0 0.0
      %1140 = vmatprep.subr.mxu0 0.0
      %1141 = vmatpush1.msra.mxu0 0.0
      %1142 = vmatprep.subr.mxu0 0.0
      %1143 = vmatpush1.msra.mxu0 0.0
      %1144 = vmatprep.subr.mxu0 0.0
      %1145 = vmatpush1.msra.mxu0 0.0
      %1146 = vmatprep.subr.mxu0 0.0
      %1147 = vmatpush1.msra.mxu0 0.0
      %1148 = vmatprep.subr.mxu0 0.0
      %1149 = vmatpush1.msra.mxu0 0.0
      %1150 = vmatprep.subr.mxu0 0.0
      %1151 = vmatpush1.msra.mxu0 0.0
      %1152 = vmatprep.subr.mxu0 0.0
      %1153 = vmatpush1.msra.mxu0 0.0
      %1154 = vmatprep.subr.mxu0 0.0
      %1155 = vmatpush1.msra.mxu0 0.0
      %1156 = vmatprep.subr.mxu0 0.0
      %1157 = vmatpush1.msra.mxu0 0.0
      %1158 = vmatprep.subr.mxu0 0.0
      %1159 = vmatpush1.msra.mxu0 %v511
      %1160 = vmatprep.subr.mxu0 0.0
      %1161 = vmatpush1.msra.mxu0 %v506
      %1162 = vmatprep.subr.mxu0 0.0
      %1163 = vmatpush2.msra.mxu0 0.0
      %1164 = vmatprep.subr.mxu0 0.0
      %1165 = vmatpush2.msra.mxu0 0.0
      %1166 = vmatprep.subr.mxu0 0.0
      %1167 = vmatpush2.msra.mxu0 0.0
      %1168 = vmatprep.subr.mxu0 0.0
      %1169 = vmatpush2.msra.mxu0 0.0
      %1170 = vmatprep.subr.mxu0 0.0
      %1171 = vmatpush2.msra.mxu0 0.0
      %1172 = vmatprep.subr.mxu0 0.0
      %1173 = vmatpush2.msra.mxu0 0.0
      %1174 = vmatprep.subr.mxu0 0.0
      %1175 = vmatpush2.msra.mxu0 0.0
      %1176 = vmatprep.subr.mxu0 0.0
      %1177 = vmatpush2.msra.mxu0 0.0
      %1178 = vmatprep.subr.mxu0 0.0
      %1179 = vmatpush2.msra.mxu0 0.0
      %1180 = vmatprep.subr.mxu0 0.0
      %1181 = vmatpush2.msra.mxu0 0.0
      %1182 = vmatprep.subr.mxu0 0.0
      %1183 = vmatpush2.msra.mxu0 0.0
      %1184 = vmatprep.subr.mxu0 0.0
      %1185 = vmatpush2.msra.mxu0 0.0
      %1186 = vmatprep.subr.mxu0 0.0
      %1187 = vmatpush2.msra.mxu0 0.0
      %1188 = vmatprep.subr.mxu0 0.0
      %1189 = vmatpush2.msra.mxu0 0.0
      %1190 = vmatprep.subr.mxu0 0.0
      %1191 = vmatpush2.msra.mxu0 0.0
      %1192 = vmatprep.subr.mxu0 0.0
      %1193 = vmatpush2.msra.mxu0 0.0
      %1194 = vmatprep.mubr.f32.mxu0 0.0
      %1195 = vmatmul.mubr.f32.gmra.mxu0 %v1125
      %v1196 = vpop.f32.mrf.mxu0
      %v1197 = vadd.f32 0.0, %v1196
      %v1198 = vpop.f32.mrf.mxu0
      %1199 = vmatprep.mubr.f32.mxu0 0.0
      %1200 = vmatmul.mubr.f32.gmra.mxu0 %v1128
      %v1201 = vpop.f32.mrf.mxu0
      %v1202 = vadd.f32 0.0, %v1201
      %v1203 = vpop.f32.mrf.mxu0
      %1204 = vdwg.mxu0
      %v1206 = vsel %vm873, %v960, 0
      %v1209 = vsel %vm873, %v961, 0
      %1211 = vmatprep.subr.mxu0 0.0
      %1212 = vmatpush1.msra.mxu0 0.0
      %1213 = vmatprep.subr.mxu0 0.0
      %1214 = vmatpush1.msra.mxu0 0.0
      %1215 = vmatprep.subr.mxu0 0.0
      %1216 = vmatpush1.msra.mxu0 0.0
      %1217 = vmatprep.subr.mxu0 0.0
      %1218 = vmatpush1.msra.mxu0 0.0
      %1219 = vmatprep.subr.mxu0 0.0
      %1220 = vmatpush1.msra.mxu0 0.0
      %1221 = vmatprep.subr.mxu0 0.0
      %1222 = vmatpush1.msra.mxu0 0.0
      %1223 = vmatprep.subr.mxu0 0.0
      %1224 = vmatpush1.msra.mxu0 0.0
      %1225 = vmatprep.subr.mxu0 0.0
      %1226 = vmatpush1.msra.mxu0 0.0
      %1227 = vmatprep.subr.mxu0 0.0
      %1228 = vmatpush1.msra.mxu0 0.0
      %1229 = vmatprep.subr.mxu0 0.0
      %1230 = vmatpush1.msra.mxu0 0.0
      %1231 = vmatprep.subr.mxu0 0.0
      %1232 = vmatpush1.msra.mxu0 0.0
      %1233 = vmatprep.subr.mxu0 0.0
      %1234 = vmatpush1.msra.mxu0 0.0
      %1235 = vmatprep.subr.mxu0 0.0
      %1236 = vmatpush1.msra.mxu0 0.0
      %1237 = vmatprep.subr.mxu0 0.0
      %1238 = vmatpush1.msra.mxu0 0.0
      %1239 = vmatprep.subr.mxu0 0.0
      %1240 = vmatpush1.msra.mxu0 %v521
      %1241 = vmatprep.subr.mxu0 0.0
      %1242 = vmatpush1.msra.mxu0 %v516
      %1243 = vmatprep.subr.mxu0 0.0
      %1244 = vmatpush2.msra.mxu0 0.0
      %1245 = vmatprep.subr.mxu0 0.0
      %1246 = vmatpush2.msra.mxu0 0.0
      %1247 = vmatprep.subr.mxu0 0.0
      %1248 = vmatpush2.msra.mxu0 0.0
      %1249 = vmatprep.subr.mxu0 0.0
      %1250 = vmatpush2.msra.mxu0 0.0
      %1251 = vmatprep.subr.mxu0 0.0
      %1252 = vmatpush2.msra.mxu0 0.0
      %1253 = vmatprep.subr.mxu0 0.0
      %1254 = vmatpush2.msra.mxu0 0.0
      %1255 = vmatprep.subr.mxu0 0.0
      %1256 = vmatpush2.msra.mxu0 0.0
      %1257 = vmatprep.subr.mxu0 0.0
      %1258 = vmatpush2.msra.mxu0 0.0
      %1259 = vmatprep.subr.mxu0 0.0
      %1260 = vmatpush2.msra.mxu0 0.0
      %1261 = vmatprep.subr.mxu0 0.0
      %1262 = vmatpush2.msra.mxu0 0.0
      %1263 = vmatprep.subr.mxu0 0.0
      %1264 = vmatpush2.msra.mxu0 0.0
      %1265 = vmatprep.subr.mxu0 0.0
      %1266 = vmatpush2.msra.mxu0 0.0
      %1267 = vmatprep.subr.mxu0 0.0
      %1268 = vmatpush2.msra.mxu0 0.0
      %1269 = vmatprep.subr.mxu0 0.0
      %1270 = vmatpush2.msra.mxu0 0.0
      %1271 = vmatprep.subr.mxu0 0.0
      %1272 = vmatpush2.msra.mxu0 0.0
      %1273 = vmatprep.subr.mxu0 0.0
      %1274 = vmatpush2.msra.mxu0 0.0
      %1275 = vmatprep.mubr.f32.mxu0 0.0
      %1276 = vmatmul.mubr.f32.gmra.mxu0 %v1206
      %v1277 = vpop.f32.mrf.mxu0
      %v1278 = vadd.f32 0.0, %v1277
      %v1279 = vpop.f32.mrf.mxu0
      %1280 = vmatprep.mubr.f32.mxu0 0.0
      %1281 = vmatmul.mubr.f32.gmra.mxu0 %v1209
      %v1282 = vpop.f32.mrf.mxu0
      %v1283 = vadd.f32 0.0, %v1282
      %v1284 = vpop.f32.mrf.mxu0
      %1285 = vdwg.mxu0
      %1286 = vst.msk [vmem:[#allocation2] sm:$0xff] %vm524, %v1035
      %1287 = vst.msk [vmem:[#allocation2 + $0x8] sm:$0xff] %vm524, %v1040
      %1288 = vst.msk [vmem:[#allocation2 + $0x10] sm:$0xff] %vm524, %v1116
      %1289 = vst.msk [vmem:[#allocation2 + $0x18] sm:$0xff] %vm524, %v1121
      %1290 = vst.msk [vmem:[#allocation2 + $0x20] sm:$0xff] %vm524, %v1197
      %1291 = vst.msk [vmem:[#allocation2 + $0x28] sm:$0xff] %vm524, %v1202
      %1292 = vst.msk [vmem:[#allocation2 + $0x30] sm:$0xff] %vm524, %v1278
      %1293 = vst.msk [vmem:[#allocation2 + $0x38] sm:$0xff] %vm524, %v1283
      %1294 = vrot.lane.b32.xlu0 %v373, 96
      %v1295 = vpop.permute.xlu0 %1294
      %1296 = vrot.lane.b32.xlu0 %v379, 96
      %v1297 = vpop.permute.xlu0 %1296
      %1298 = vrot.lane.b32.xlu0 %v375, 96
      %v1299 = vpop.permute.xlu0 %1298
      %1300 = vrot.lane.b32.xlu0 %v381, 96
      %v1301 = vpop.permute.xlu0 %1300
      %v1302 = vsel %vm524, %v1295, 0
      %v1304 = vsel %vm524, %v1297, 0
      %v1306 = vsel %vm524, %v1299, 0
      %v1308 = vsel %vm524, %v1301, 0
      %1310 = vmatprep.subr.mxu0 0.0
      %1311 = vmatpush1.xpose.msra.mxu0 0.0
      %1312 = vmatprep.subr.mxu0 0.0
      %1313 = vmatpush1.xpose.msra.mxu0 0.0
      %1314 = vmatprep.subr.mxu0 0.0
      %1315 = vmatpush1.xpose.msra.mxu0 0.0
      %1316 = vmatprep.subr.mxu0 0.0
      %1317 = vmatpush1.xpose.msra.mxu0 0.0
      %1318 = vmatprep.subr.mxu0 0.0
      %1319 = vmatpush1.xpose.msra.mxu0 0.0
      %1320 = vmatprep.subr.mxu0 0.0
      %1321 = vmatpush1.xpose.msra.mxu0 0.0
      %1322 = vmatprep.subr.mxu0 0.0
      %1323 = vmatpush1.xpose.msra.mxu0 0.0
      %1324 = vmatprep.subr.mxu0 0.0
      %1325 = vmatpush1.xpose.msra.mxu0 0.0
      %1326 = vmatprep.subr.mxu0 0.0
      %1327 = vmatpush1.xpose.msra.mxu0 0.0
      %1328 = vmatprep.subr.mxu0 0.0
      %1329 = vmatpush1.xpose.msra.mxu0 0.0
      %1330 = vmatprep.subr.mxu0 0.0
      %1331 = vmatpush1.xpose.msra.mxu0 0.0
      %1332 = vmatprep.subr.mxu0 0.0
      %1333 = vmatpush1.xpose.msra.mxu0 0.0
      %1334 = vmatprep.subr.mxu0 0.0
      %1335 = vmatpush1.xpose.msra.mxu0 0.0
      %1336 = vmatprep.subr.mxu0 0.0
      %1337 = vmatpush1.xpose.msra.mxu0 0.0
      %1338 = vmatprep.subr.mxu0 0.0
      %1339 = vmatpush1.xpose.msra.mxu0 %v1308
      %1340 = vmatprep.subr.mxu0 0.0
      %1341 = vmatpush1.xpose.msra.mxu0 %v1306
      %1342 = vmatprep.subr.mxu0 0.0
      %1343 = vmatpush2.xpose.msra.mxu0 0.0
      %1344 = vmatprep.subr.mxu0 0.0
      %1345 = vmatpush2.xpose.msra.mxu0 0.0
      %1346 = vmatprep.subr.mxu0 0.0
      %1347 = vmatpush2.xpose.msra.mxu0 0.0
      %1348 = vmatprep.subr.mxu0 0.0
      %1349 = vmatpush2.xpose.msra.mxu0 0.0
      %1350 = vmatprep.subr.mxu0 0.0
      %1351 = vmatpush2.xpose.msra.mxu0 0.0
      %1352 = vmatprep.subr.mxu0 0.0
      %1353 = vmatpush2.xpose.msra.mxu0 0.0
      %1354 = vmatprep.subr.mxu0 0.0
      %1355 = vmatpush2.xpose.msra.mxu0 0.0
      %1356 = vmatprep.subr.mxu0 0.0
      %1357 = vmatpush2.xpose.msra.mxu0 0.0
      %1358 = vmatprep.subr.mxu0 0.0
      %1359 = vmatpush2.xpose.msra.mxu0 0.0
      %1360 = vmatprep.subr.mxu0 0.0
      %1361 = vmatpush2.xpose.msra.mxu0 0.0
      %1362 = vmatprep.subr.mxu0 0.0
      %1363 = vmatpush2.xpose.msra.mxu0 0.0
      %1364 = vmatprep.subr.mxu0 0.0
      %1365 = vmatpush2.xpose.msra.mxu0 0.0
      %1366 = vmatprep.subr.mxu0 0.0
      %1367 = vmatpush2.xpose.msra.mxu0 0.0
      %1368 = vmatprep.subr.mxu0 0.0
      %1369 = vmatpush2.xpose.msra.mxu0 0.0
      %1370 = vmatprep.subr.mxu0 0.0
      %1371 = vmatpush2.xpose.msra.mxu0 0.0
      %1372 = vmatprep.subr.mxu0 0.0
      %1373 = vmatpush2.xpose.msra.mxu0 0.0
      %1374 = vmatprep.mubr.f32.mxu0 0.0
      %1375 = vmatmul.mubr.f32.gmra.mxu0 %v1302
      %v1376 = vpop.f32.mrf.mxu0
      %v1377 = vadd.f32 0.0, %v1376
      %v1378 = vpop.f32.mrf.mxu0
      %1379 = vmatprep.mubr.f32.mxu0 0.0
      %1380 = vmatmul.mubr.f32.gmra.mxu0 %v1304
      %v1381 = vpop.f32.mrf.mxu0
      %v1382 = vadd.f32 0.0, %v1381
      %v1383 = vpop.f32.mrf.mxu0
      %1384 = vdwg.mxu0
      %1385 = vrot.lane.b32.xlu0 %v385, 96
      %v1386 = vpop.permute.xlu0 %1385
      %1387 = vrot.lane.b32.xlu0 %v391, 96
      %v1388 = vpop.permute.xlu0 %1387
      %1389 = vrot.lane.b32.xlu0 %v387, 96
      %v1390 = vpop.permute.xlu0 %1389
      %1391 = vrot.lane.b32.xlu0 %v393, 96
      %v1392 = vpop.permute.xlu0 %1391
      %v1393 = vsel %vm524, %v1386, 0
      %v1395 = vsel %vm524, %v1388, 0
      %v1397 = vsel %vm524, %v1390, 0
      %v1399 = vsel %vm524, %v1392, 0
      %1401 = vmatprep.subr.mxu0 0.0
      %1402 = vmatpush1.xpose.msra.mxu0 0.0
      %1403 = vmatprep.subr.mxu0 0.0
      %1404 = vmatpush1.xpose.msra.mxu0 0.0
      %1405 = vmatprep.subr.mxu0 0.0
      %1406 = vmatpush1.xpose.msra.mxu0 0.0
      %1407 = vmatprep.subr.mxu0 0.0
      %1408 = vmatpush1.xpose.msra.mxu0 0.0
      %1409 = vmatprep.subr.mxu0 0.0
      %1410 = vmatpush1.xpose.msra.mxu0 0.0
      %1411 = vmatprep.subr.mxu0 0.0
      %1412 = vmatpush1.xpose.msra.mxu0 0.0
      %1413 = vmatprep.subr.mxu0 0.0
      %1414 = vmatpush1.xpose.msra.mxu0 0.0
      %1415 = vmatprep.subr.mxu0 0.0
      %1416 = vmatpush1.xpose.msra.mxu0 0.0
      %1417 = vmatprep.subr.mxu0 0.0
      %1418 = vmatpush1.xpose.msra.mxu0 0.0
      %1419 = vmatprep.subr.mxu0 0.0
      %1420 = vmatpush1.xpose.msra.mxu0 0.0
      %1421 = vmatprep.subr.mxu0 0.0
      %1422 = vmatpush1.xpose.msra.mxu0 0.0
      %1423 = vmatprep.subr.mxu0 0.0
      %1424 = vmatpush1.xpose.msra.mxu0 0.0
      %1425 = vmatprep.subr.mxu0 0.0
      %1426 = vmatpush1.xpose.msra.mxu0 0.0
      %1427 = vmatprep.subr.mxu0 0.0
      %1428 = vmatpush1.xpose.msra.mxu0 0.0
      %1429 = vmatprep.subr.mxu0 0.0
      %1430 = vmatpush1.xpose.msra.mxu0 %v1399
      %1431 = vmatprep.subr.mxu0 0.0
      %1432 = vmatpush1.xpose.msra.mxu0 %v1397
      %1433 = vmatprep.subr.mxu0 0.0
      %1434 = vmatpush2.xpose.msra.mxu0 0.0
      %1435 = vmatprep.subr.mxu0 0.0
      %1436 = vmatpush2.xpose.msra.mxu0 0.0
      %1437 = vmatprep.subr.mxu0 0.0
      %1438 = vmatpush2.xpose.msra.mxu0 0.0
      %1439 = vmatprep.subr.mxu0 0.0
      %1440 = vmatpush2.xpose.msra.mxu0 0.0
      %1441 = vmatprep.subr.mxu0 0.0
      %1442 = vmatpush2.xpose.msra.mxu0 0.0
      %1443 = vmatprep.subr.mxu0 0.0
      %1444 = vmatpush2.xpose.msra.mxu0 0.0
      %1445 = vmatprep.subr.mxu0 0.0
      %1446 = vmatpush2.xpose.msra.mxu0 0.0
      %1447 = vmatprep.subr.mxu0 0.0
      %1448 = vmatpush2.xpose.msra.mxu0 0.0
      %1449 = vmatprep.subr.mxu0 0.0
      %1450 = vmatpush2.xpose.msra.mxu0 0.0
      %1451 = vmatprep.subr.mxu0 0.0
      %1452 = vmatpush2.xpose.msra.mxu0 0.0
      %1453 = vmatprep.subr.mxu0 0.0
      %1454 = vmatpush2.xpose.msra.mxu0 0.0
      %1455 = vmatprep.subr.mxu0 0.0
      %1456 = vmatpush2.xpose.msra.mxu0 0.0
      %1457 = vmatprep.subr.mxu0 0.0
      %1458 = vmatpush2.xpose.msra.mxu0 0.0
      %1459 = vmatprep.subr.mxu0 0.0
      %1460 = vmatpush2.xpose.msra.mxu0 0.0
      %1461 = vmatprep.subr.mxu0 0.0
      %1462 = vmatpush2.xpose.msra.mxu0 0.0
      %1463 = vmatprep.subr.mxu0 0.0
      %1464 = vmatpush2.xpose.msra.mxu0 0.0
      %1465 = vmatprep.mubr.f32.mxu0 0.0
      %1466 = vmatmul.mubr.f32.gmra.mxu0 %v1393
      %v1467 = vpop.f32.mrf.mxu0
      %v1468 = vadd.f32 0.0, %v1467
      %v1469 = vpop.f32.mrf.mxu0
      %1470 = vmatprep.mubr.f32.mxu0 0.0
      %1471 = vmatmul.mubr.f32.gmra.mxu0 %v1395
      %v1472 = vpop.f32.mrf.mxu0
      %v1473 = vadd.f32 0.0, %v1472
      %v1474 = vpop.f32.mrf.mxu0
      %1475 = vdwg.mxu0
      %1476 = vrot.lane.b32.xlu0 %v397, 96
      %v1477 = vpop.permute.xlu0 %1476
      %1478 = vrot.lane.b32.xlu0 %v403, 96
      %v1479 = vpop.permute.xlu0 %1478
      %1480 = vrot.lane.b32.xlu0 %v399, 96
      %v1481 = vpop.permute.xlu0 %1480
      %1482 = vrot.lane.b32.xlu0 %v405, 96
      %v1483 = vpop.permute.xlu0 %1482
      %v1484 = vsel %vm524, %v1477, 0
      %v1486 = vsel %vm524, %v1479, 0
      %v1488 = vsel %vm524, %v1481, 0
      %v1490 = vsel %vm524, %v1483, 0
      %1492 = vmatprep.subr.mxu0 0.0
      %1493 = vmatpush1.xpose.msra.mxu0 0.0
      %1494 = vmatprep.subr.mxu0 0.0
      %1495 = vmatpush1.xpose.msra.mxu0 0.0
      %1496 = vmatprep.subr.mxu0 0.0
      %1497 = vmatpush1.xpose.msra.mxu0 0.0
      %1498 = vmatprep.subr.mxu0 0.0
      %1499 = vmatpush1.xpose.msra.mxu0 0.0
      %1500 = vmatprep.subr.mxu0 0.0
      %1501 = vmatpush1.xpose.msra.mxu0 0.0
      %1502 = vmatprep.subr.mxu0 0.0
      %1503 = vmatpush1.xpose.msra.mxu0 0.0
      %1504 = vmatprep.subr.mxu0 0.0
      %1505 = vmatpush1.xpose.msra.mxu0 0.0
      %1506 = vmatprep.subr.mxu0 0.0
      %1507 = vmatpush1.xpose.msra.mxu0 0.0
      %1508 = vmatprep.subr.mxu0 0.0
      %1509 = vmatpush1.xpose.msra.mxu0 0.0
      %1510 = vmatprep.subr.mxu0 0.0
      %1511 = vmatpush1.xpose.msra.mxu0 0.0
      %1512 = vmatprep.subr.mxu0 0.0
      %1513 = vmatpush1.xpose.msra.mxu0 0.0
      %1514 = vmatprep.subr.mxu0 0.0
      %1515 = vmatpush1.xpose.msra.mxu0 0.0
      %1516 = vmatprep.subr.mxu0 0.0
      %1517 = vmatpush1.xpose.msra.mxu0 0.0
      %1518 = vmatprep.subr.mxu0 0.0
      %1519 = vmatpush1.xpose.msra.mxu0 0.0
      %1520 = vmatprep.subr.mxu0 0.0
      %1521 = vmatpush1.xpose.msra.mxu0 %v1490
      %1522 = vmatprep.subr.mxu0 0.0
      %1523 = vmatpush1.xpose.msra.mxu0 %v1488
      %1524 = vmatprep.subr.mxu0 0.0
      %1525 = vmatpush2.xpose.msra.mxu0 0.0
      %1526 = vmatprep.subr.mxu0 0.0
      %1527 = vmatpush2.xpose.msra.mxu0 0.0
      %1528 = vmatprep.subr.mxu0 0.0
      %1529 = vmatpush2.xpose.msra.mxu0 0.0
      %1530 = vmatprep.subr.mxu0 0.0
      %1531 = vmatpush2.xpose.msra.mxu0 0.0
      %1532 = vmatprep.subr.mxu0 0.0
      %1533 = vmatpush2.xpose.msra.mxu0 0.0
      %1534 = vmatprep.subr.mxu0 0.0
      %1535 = vmatpush2.xpose.msra.mxu0 0.0
      %1536 = vmatprep.subr.mxu0 0.0
      %1537 = vmatpush2.xpose.msra.mxu0 0.0
      %1538 = vmatprep.subr.mxu0 0.0
      %1539 = vmatpush2.xpose.msra.mxu0 0.0
      %1540 = vmatprep.subr.mxu0 0.0
      %1541 = vmatpush2.xpose.msra.mxu0 0.0
      %1542 = vmatprep.subr.mxu0 0.0
      %1543 = vmatpush2.xpose.msra.mxu0 0.0
      %1544 = vmatprep.subr.mxu0 0.0
      %1545 = vmatpush2.xpose.msra.mxu0 0.0
      %1546 = vmatprep.subr.mxu0 0.0
      %1547 = vmatpush2.xpose.msra.mxu0 0.0
      %1548 = vmatprep.subr.mxu0 0.0
      %1549 = vmatpush2.xpose.msra.mxu0 0.0
      %1550 = vmatprep.subr.mxu0 0.0
      %1551 = vmatpush2.xpose.msra.mxu0 0.0
      %1552 = vmatprep.subr.mxu0 0.0
      %1553 = vmatpush2.xpose.msra.mxu0 0.0
      %1554 = vmatprep.subr.mxu0 0.0
      %1555 = vmatpush2.xpose.msra.mxu0 0.0
      %1556 = vmatprep.mubr.f32.mxu0 0.0
      %1557 = vmatmul.mubr.f32.gmra.mxu0 %v1484
      %v1558 = vpop.f32.mrf.mxu0
      %v1559 = vadd.f32 0.0, %v1558
      %v1560 = vpop.f32.mrf.mxu0
      %1561 = vmatprep.mubr.f32.mxu0 0.0
      %1562 = vmatmul.mubr.f32.gmra.mxu0 %v1486
      %v1563 = vpop.f32.mrf.mxu0
      %v1564 = vadd.f32 0.0, %v1563
      %v1565 = vpop.f32.mrf.mxu0
      %1566 = vdwg.mxu0
      %1567 = vrot.lane.b32.xlu0 %v409, 96
      %v1568 = vpop.permute.xlu0 %1567
      %1569 = vrot.lane.b32.xlu0 %v415, 96
      %v1570 = vpop.permute.xlu0 %1569
      %1571 = vrot.lane.b32.xlu0 %v411, 96
      %v1572 = vpop.permute.xlu0 %1571
      %1573 = vrot.lane.b32.xlu0 %v417, 96
      %v1574 = vpop.permute.xlu0 %1573
      %v1575 = vsel %vm524, %v1568, 0
      %v1577 = vsel %vm524, %v1570, 0
      %v1579 = vsel %vm524, %v1572, 0
      %v1581 = vsel %vm524, %v1574, 0
      %1583 = vmatprep.subr.mxu0 0.0
      %1584 = vmatpush1.xpose.msra.mxu0 0.0
      %1585 = vmatprep.subr.mxu0 0.0
      %1586 = vmatpush1.xpose.msra.mxu0 0.0
      %1587 = vmatprep.subr.mxu0 0.0
      %1588 = vmatpush1.xpose.msra.mxu0 0.0
      %1589 = vmatprep.subr.mxu0 0.0
      %1590 = vmatpush1.xpose.msra.mxu0 0.0
      %1591 = vmatprep.subr.mxu0 0.0
      %1592 = vmatpush1.xpose.msra.mxu0 0.0
      %1593 = vmatprep.subr.mxu0 0.0
      %1594 = vmatpush1.xpose.msra.mxu0 0.0
      %1595 = vmatprep.subr.mxu0 0.0
      %1596 = vmatpush1.xpose.msra.mxu0 0.0
      %1597 = vmatprep.subr.mxu0 0.0
      %1598 = vmatpush1.xpose.msra.mxu0 0.0
      %1599 = vmatprep.subr.mxu0 0.0
      %1600 = vmatpush1.xpose.msra.mxu0 0.0
      %1601 = vmatprep.subr.mxu0 0.0
      %1602 = vmatpush1.xpose.msra.mxu0 0.0
      %1603 = vmatprep.subr.mxu0 0.0
      %1604 = vmatpush1.xpose.msra.mxu0 0.0
      %1605 = vmatprep.subr.mxu0 0.0
      %1606 = vmatpush1.xpose.msra.mxu0 0.0
      %1607 = vmatprep.subr.mxu0 0.0
      %1608 = vmatpush1.xpose.msra.mxu0 0.0
      %1609 = vmatprep.subr.mxu0 0.0
      %1610 = vmatpush1.xpose.msra.mxu0 0.0
      %1611 = vmatprep.subr.mxu0 0.0
      %1612 = vmatpush1.xpose.msra.mxu0 %v1581
      %1613 = vmatprep.subr.mxu0 0.0
      %1614 = vmatpush1.xpose.msra.mxu0 %v1579
      %1615 = vmatprep.subr.mxu0 0.0
      %1616 = vmatpush2.xpose.msra.mxu0 0.0
      %1617 = vmatprep.subr.mxu0 0.0
      %1618 = vmatpush2.xpose.msra.mxu0 0.0
      %1619 = vmatprep.subr.mxu0 0.0
      %1620 = vmatpush2.xpose.msra.mxu0 0.0
      %1621 = vmatprep.subr.mxu0 0.0
      %1622 = vmatpush2.xpose.msra.mxu0 0.0
      %1623 = vmatprep.subr.mxu0 0.0
      %1624 = vmatpush2.xpose.msra.mxu0 0.0
      %1625 = vmatprep.subr.mxu0 0.0
      %1626 = vmatpush2.xpose.msra.mxu0 0.0
      %1627 = vmatprep.subr.mxu0 0.0
      %1628 = vmatpush2.xpose.msra.mxu0 0.0
      %1629 = vmatprep.subr.mxu0 0.0
      %1630 = vmatpush2.xpose.msra.mxu0 0.0
      %1631 = vmatprep.subr.mxu0 0.0
      %1632 = vmatpush2.xpose.msra.mxu0 0.0
      %1633 = vmatprep.subr.mxu0 0.0
      %1634 = vmatpush2.xpose.msra.mxu0 0.0
      %1635 = vmatprep.subr.mxu0 0.0
      %1636 = vmatpush2.xpose.msra.mxu0 0.0
      %1637 = vmatprep.subr.mxu0 0.0
      %1638 = vmatpush2.xpose.msra.mxu0 0.0
      %1639 = vmatprep.subr.mxu0 0.0
      %1640 = vmatpush2.xpose.msra.mxu0 0.0
      %1641 = vmatprep.subr.mxu0 0.0
      %1642 = vmatpush2.xpose.msra.mxu0 0.0
      %1643 = vmatprep.subr.mxu0 0.0
      %1644 = vmatpush2.xpose.msra.mxu0 0.0
      %1645 = vmatprep.subr.mxu0 0.0
      %1646 = vmatpush2.xpose.msra.mxu0 0.0
      %1647 = vmatprep.mubr.f32.mxu0 0.0
      %1648 = vmatmul.mubr.f32.gmra.mxu0 %v1575
      %v1649 = vpop.f32.mrf.mxu0
      %v1650 = vadd.f32 0.0, %v1649
      %v1651 = vpop.f32.mrf.mxu0
      %1652 = vmatprep.mubr.f32.mxu0 0.0
      %1653 = vmatmul.mubr.f32.gmra.mxu0 %v1577
      %v1654 = vpop.f32.mrf.mxu0
      %v1655 = vadd.f32 0.0, %v1654
      %v1656 = vpop.f32.mrf.mxu0
      %1657 = vdwg.mxu0
      %v1658 = vsel %vm873, %v1377, -inf
      %1659 = vmax.xlane.f32.xlu0 %v1658
      %v1660 = vpop.xlane.xlu0 %1659
      %v1661 = vsel %vm873, %v1382, -inf
      %1662 = vmax.xlane.f32.xlu0 %v1661
      %v1663 = vpop.xlane.xlu0 %1662
      %v1664 = vsel %vm873, %v1468, -inf
      %1665 = vmax.xlane.f32.xlu0 %v1664
      %v1666 = vpop.xlane.xlu0 %1665
      %v1667 = vsel %vm873, %v1473, -inf
      %1668 = vmax.xlane.f32.xlu0 %v1667
      %v1669 = vpop.xlane.xlu0 %1668
      %v1670 = vsel %vm873, %v1559, -inf
      %1671 = vmax.xlane.f32.xlu0 %v1670
      %v1672 = vpop.xlane.xlu0 %1671
      %v1673 = vsel %vm873, %v1564, -inf
      %1674 = vmax.xlane.f32.xlu0 %v1673
      %v1675 = vpop.xlane.xlu0 %1674
      %v1676 = vsel %vm873, %v1650, -inf
      %1677 = vmax.xlane.f32.xlu0 %v1676
      %v1678 = vpop.xlane.xlu0 %1677
      %v1679 = vsel %vm873, %v1655, -inf
      %1680 = vmax.xlane.f32.xlu0 %v1679
      %v1681 = vpop.xlane.xlu0 %1680
      %v1682 = vsub.f32 %v1377, %v1660
      %v1683 = vsub.f32 %v1382, %v1663
      %v1684 = vsub.f32 %v1468, %v1666
      %v1685 = vsub.f32 %v1473, %v1669
      %v1686 = vsub.f32 %v1559, %v1672
      %v1687 = vsub.f32 %v1564, %v1675
      %v1688 = vsub.f32 %v1650, %v1678
      %v1689 = vsub.f32 %v1655, %v1681
      %v1690 = vmul.f32 %v1682, 1.442695
      %v1691 = vpow.pop %v1690
      %v1692 = vmul.f32 %v1683, 1.442695
      %v1693 = vpow.pop %v1692
      %v1694 = vmul.f32 %v1684, 1.442695
      %v1695 = vpow.pop %v1694
      %v1696 = vmul.f32 %v1685, 1.442695
      %v1697 = vpow.pop %v1696
      %v1698 = vmul.f32 %v1686, 1.442695
      %v1699 = vpow.pop %v1698
      %v1700 = vmul.f32 %v1687, 1.442695
      %v1701 = vpow.pop %v1700
      %v1702 = vmul.f32 %v1688, 1.442695
      %v1703 = vpow.pop %v1702
      %v1704 = vmul.f32 %v1689, 1.442695
      %v1705 = vpow.pop %v1704
      %v1706 = vsel %vm873, %v1691, 0.0
      %1707 = vadd.xlane.f32.xlu0 %v1706
      %v1708 = vpop.xlane.xlu0 %1707
      %v1709 = vsel %vm873, %v1693, 0.0
      %1710 = vadd.xlane.f32.xlu0 %v1709
      %v1711 = vpop.xlane.xlu0 %1710
      %v1712 = vsel %vm873, %v1695, 0.0
      %1713 = vadd.xlane.f32.xlu0 %v1712
      %v1714 = vpop.xlane.xlu0 %1713
      %v1715 = vsel %vm873, %v1697, 0.0
      %1716 = vadd.xlane.f32.xlu0 %v1715
      %v1717 = vpop.xlane.xlu0 %1716
      %v1718 = vsel %vm873, %v1699, 0.0
      %1719 = vadd.xlane.f32.xlu0 %v1718
      %v1720 = vpop.xlane.xlu0 %1719
      %v1721 = vsel %vm873, %v1701, 0.0
      %1722 = vadd.xlane.f32.xlu0 %v1721
      %v1723 = vpop.xlane.xlu0 %1722
      %v1724 = vsel %vm873, %v1703, 0.0
      %1725 = vadd.xlane.f32.xlu0 %v1724
      %v1726 = vpop.xlane.xlu0 %1725
      %v1727 = vsel %vm873, %v1705, 0.0
      %1728 = vadd.xlane.f32.xlu0 %v1727
      %v1729 = vpop.xlane.xlu0 %1728
      %v1730 = vrcp.pop %v1708
      %v1731 = vrcp.pop %v1711
      %v1732 = vrcp.pop %v1714
      %v1733 = vrcp.pop %v1717
      %v1734 = vrcp.pop %v1720
      %v1735 = vrcp.pop %v1723
      %v1736 = vrcp.pop %v1726
      %v1737 = vrcp.pop %v1729
      %v1738 = vmul.f32 %v1691, %v1730
      %v1739 = vmul.f32 %v1693, %v1731
      %v1740 = vmul.f32 %v1695, %v1732
      %v1741 = vmul.f32 %v1697, %v1733
      %v1742 = vmul.f32 %v1699, %v1734
      %v1743 = vmul.f32 %v1701, %v1735
      %v1744 = vmul.f32 %v1703, %v1736
      %v1745 = vmul.f32 %v1705, %v1737
      %1748 = vrot.lane.b32.xlu0 %v486, 96
      %v1749 = vpop.permute.xlu0 %1748
      %1750 = vrot.lane.b32.xlu0 %v491, 96
      %v1751 = vpop.permute.xlu0 %1750
      %v1755 = vsel %vm873, %v1738, 0
      %v1758 = vsel %vm873, %v1739, 0
      %1760 = vmatprep.subr.mxu0 0.0
      %1761 = vmatpush1.msra.mxu0 0.0
      %1762 = vmatprep.subr.mxu0 0.0
      %1763 = vmatpush1.msra.mxu0 0.0
      %1764 = vmatprep.subr.mxu0 0.0
      %1765 = vmatpush1.msra.mxu0 0.0
      %1766 = vmatprep.subr.mxu0 0.0
      %1767 = vmatpush1.msra.mxu0 0.0
      %1768 = vmatprep.subr.mxu0 0.0
      %1769 = vmatpush1.msra.mxu0 0.0
      %1770 = vmatprep.subr.mxu0 0.0
      %1771 = vmatpush1.msra.mxu0 0.0
      %1772 = vmatprep.subr.mxu0 0.0
      %1773 = vmatpush1.msra.mxu0 0.0
      %1774 = vmatprep.subr.mxu0 0.0
      %1775 = vmatpush1.msra.mxu0 0.0
      %1776 = vmatprep.subr.mxu0 0.0
      %1777 = vmatpush1.msra.mxu0 0.0
      %1778 = vmatprep.subr.mxu0 0.0
      %1779 = vmatpush1.msra.mxu0 0.0
      %1780 = vmatprep.subr.mxu0 0.0
      %1781 = vmatpush1.msra.mxu0 0.0
      %1782 = vmatprep.subr.mxu0 0.0
      %1783 = vmatpush1.msra.mxu0 0.0
      %1784 = vmatprep.subr.mxu0 0.0
      %1785 = vmatpush1.msra.mxu0 0.0
      %1786 = vmatprep.subr.mxu0 0.0
      %1787 = vmatpush1.msra.mxu0 0.0
      %1788 = vmatprep.subr.mxu0 0.0
      %1789 = vmatpush1.msra.mxu0 %v1751
      %1790 = vmatprep.subr.mxu0 0.0
      %1791 = vmatpush1.msra.mxu0 %v1749
      %1792 = vmatprep.subr.mxu0 0.0
      %1793 = vmatpush2.msra.mxu0 0.0
      %1794 = vmatprep.subr.mxu0 0.0
      %1795 = vmatpush2.msra.mxu0 0.0
      %1796 = vmatprep.subr.mxu0 0.0
      %1797 = vmatpush2.msra.mxu0 0.0
      %1798 = vmatprep.subr.mxu0 0.0
      %1799 = vmatpush2.msra.mxu0 0.0
      %1800 = vmatprep.subr.mxu0 0.0
      %1801 = vmatpush2.msra.mxu0 0.0
      %1802 = vmatprep.subr.mxu0 0.0
      %1803 = vmatpush2.msra.mxu0 0.0
      %1804 = vmatprep.subr.mxu0 0.0
      %1805 = vmatpush2.msra.mxu0 0.0
      %1806 = vmatprep.subr.mxu0 0.0
      %1807 = vmatpush2.msra.mxu0 0.0
      %1808 = vmatprep.subr.mxu0 0.0
      %1809 = vmatpush2.msra.mxu0 0.0
      %1810 = vmatprep.subr.mxu0 0.0
      %1811 = vmatpush2.msra.mxu0 0.0
      %1812 = vmatprep.subr.mxu0 0.0
      %1813 = vmatpush2.msra.mxu0 0.0
      %1814 = vmatprep.subr.mxu0 0.0
      %1815 = vmatpush2.msra.mxu0 0.0
      %1816 = vmatprep.subr.mxu0 0.0
      %1817 = vmatpush2.msra.mxu0 0.0
      %1818 = vmatprep.subr.mxu0 0.0
      %1819 = vmatpush2.msra.mxu0 0.0
      %1820 = vmatprep.subr.mxu0 0.0
      %1821 = vmatpush2.msra.mxu0 0.0
      %1822 = vmatprep.subr.mxu0 0.0
      %1823 = vmatpush2.msra.mxu0 0.0
      %1824 = vmatprep.mubr.f32.mxu0 0.0
      %1825 = vmatmul.mubr.f32.gmra.mxu0 %v1755
      %v1826 = vpop.f32.mrf.mxu0
      %v1827 = vadd.f32 0.0, %v1826
      %v1828 = vpop.f32.mrf.mxu0
      %1829 = vmatprep.mubr.f32.mxu0 0.0
      %1830 = vmatmul.mubr.f32.gmra.mxu0 %v1758
      %v1831 = vpop.f32.mrf.mxu0
      %v1832 = vadd.f32 0.0, %v1831
      %v1833 = vpop.f32.mrf.mxu0
      %1834 = vdwg.mxu0
      %1837 = vrot.lane.b32.xlu0 %v496, 96
      %v1838 = vpop.permute.xlu0 %1837
      %1839 = vrot.lane.b32.xlu0 %v501, 96
      %v1840 = vpop.permute.xlu0 %1839
      %v1844 = vsel %vm873, %v1740, 0
      %v1847 = vsel %vm873, %v1741, 0
      %1849 = vmatprep.subr.mxu0 0.0
      %1850 = vmatpush1.msra.mxu0 0.0
      %1851 = vmatprep.subr.mxu0 0.0
      %1852 = vmatpush1.msra.mxu0 0.0
      %1853 = vmatprep.subr.mxu0 0.0
      %1854 = vmatpush1.msra.mxu0 0.0
      %1855 = vmatprep.subr.mxu0 0.0
      %1856 = vmatpush1.msra.mxu0 0.0
      %1857 = vmatprep.subr.mxu0 0.0
      %1858 = vmatpush1.msra.mxu0 0.0
      %1859 = vmatprep.subr.mxu0 0.0
      %1860 = vmatpush1.msra.mxu0 0.0
      %1861 = vmatprep.subr.mxu0 0.0
      %1862 = vmatpush1.msra.mxu0 0.0
      %1863 = vmatprep.subr.mxu0 0.0
      %1864 = vmatpush1.msra.mxu0 0.0
      %1865 = vmatprep.subr.mxu0 0.0
      %1866 = vmatpush1.msra.mxu0 0.0
      %1867 = vmatprep.subr.mxu0 0.0
      %1868 = vmatpush1.msra.mxu0 0.0
      %1869 = vmatprep.subr.mxu0 0.0
      %1870 = vmatpush1.msra.mxu0 0.0
      %1871 = vmatprep.subr.mxu0 0.0
      %1872 = vmatpush1.msra.mxu0 0.0
      %1873 = vmatprep.subr.mxu0 0.0
      %1874 = vmatpush1.msra.mxu0 0.0
      %1875 = vmatprep.subr.mxu0 0.0
      %1876 = vmatpush1.msra.mxu0 0.0
      %1877 = vmatprep.subr.mxu0 0.0
      %1878 = vmatpush1.msra.mxu0 %v1840
      %1879 = vmatprep.subr.mxu0 0.0
      %1880 = vmatpush1.msra.mxu0 %v1838
      %1881 = vmatprep.subr.mxu0 0.0
      %1882 = vmatpush2.msra.mxu0 0.0
      %1883 = vmatprep.subr.mxu0 0.0
      %1884 = vmatpush2.msra.mxu0 0.0
      %1885 = vmatprep.subr.mxu0 0.0
      %1886 = vmatpush2.msra.mxu0 0.0
      %1887 = vmatprep.subr.mxu0 0.0
      %1888 = vmatpush2.msra.mxu0 0.0
      %1889 = vmatprep.subr.mxu0 0.0
      %1890 = vmatpush2.msra.mxu0 0.0
      %1891 = vmatprep.subr.mxu0 0.0
      %1892 = vmatpush2.msra.mxu0 0.0
      %1893 = vmatprep.subr.mxu0 0.0
      %1894 = vmatpush2.msra.mxu0 0.0
      %1895 = vmatprep.subr.mxu0 0.0
      %1896 = vmatpush2.msra.mxu0 0.0
      %1897 = vmatprep.subr.mxu0 0.0
      %1898 = vmatpush2.msra.mxu0 0.0
      %1899 = vmatprep.subr.mxu0 0.0
      %1900 = vmatpush2.msra.mxu0 0.0
      %1901 = vmatprep.subr.mxu0 0.0
      %1902 = vmatpush2.msra.mxu0 0.0
      %1903 = vmatprep.subr.mxu0 0.0
      %1904 = vmatpush2.msra.mxu0 0.0
      %1905 = vmatprep.subr.mxu0 0.0
      %1906 = vmatpush2.msra.mxu0 0.0
      %1907 = vmatprep.subr.mxu0 0.0
      %1908 = vmatpush2.msra.mxu0 0.0
      %1909 = vmatprep.subr.mxu0 0.0
      %1910 = vmatpush2.msra.mxu0 0.0
      %1911 = vmatprep.subr.mxu0 0.0
      %1912 = vmatpush2.msra.mxu0 0.0
      %1913 = vmatprep.mubr.f32.mxu0 0.0
      %1914 = vmatmul.mubr.f32.gmra.mxu0 %v1844
      %v1915 = vpop.f32.mrf.mxu0
      %v1916 = vadd.f32 0.0, %v1915
      %v1917 = vpop.f32.mrf.mxu0
      %1918 = vmatprep.mubr.f32.mxu0 0.0
      %1919 = vmatmul.mubr.f32.gmra.mxu0 %v1847
      %v1920 = vpop.f32.mrf.mxu0
      %v1921 = vadd.f32 0.0, %v1920
      %v1922 = vpop.f32.mrf.mxu0
      %1923 = vdwg.mxu0
      %1926 = vrot.lane.b32.xlu0 %v506, 96
      %v1927 = vpop.permute.xlu0 %1926
      %1928 = vrot.lane.b32.xlu0 %v511, 96
      %v1929 = vpop.permute.xlu0 %1928
      %v1933 = vsel %vm873, %v1742, 0
      %v1936 = vsel %vm873, %v1743, 0
      %1938 = vmatprep.subr.mxu0 0.0
      %1939 = vmatpush1.msra.mxu0 0.0
      %1940 = vmatprep.subr.mxu0 0.0
      %1941 = vmatpush1.msra.mxu0 0.0
      %1942 = vmatprep.subr.mxu0 0.0
      %1943 = vmatpush1.msra.mxu0 0.0
      %1944 = vmatprep.subr.mxu0 0.0
      %1945 = vmatpush1.msra.mxu0 0.0
      %1946 = vmatprep.subr.mxu0 0.0
      %1947 = vmatpush1.msra.mxu0 0.0
      %1948 = vmatprep.subr.mxu0 0.0
      %1949 = vmatpush1.msra.mxu0 0.0
      %1950 = vmatprep.subr.mxu0 0.0
      %1951 = vmatpush1.msra.mxu0 0.0
      %1952 = vmatprep.subr.mxu0 0.0
      %1953 = vmatpush1.msra.mxu0 0.0
      %1954 = vmatprep.subr.mxu0 0.0
      %1955 = vmatpush1.msra.mxu0 0.0
      %1956 = vmatprep.subr.mxu0 0.0
      %1957 = vmatpush1.msra.mxu0 0.0
      %1958 = vmatprep.subr.mxu0 0.0
      %1959 = vmatpush1.msra.mxu0 0.0
      %1960 = vmatprep.subr.mxu0 0.0
      %1961 = vmatpush1.msra.mxu0 0.0
      %1962 = vmatprep.subr.mxu0 0.0
      %1963 = vmatpush1.msra.mxu0 0.0
      %1964 = vmatprep.subr.mxu0 0.0
      %1965 = vmatpush1.msra.mxu0 0.0
      %1966 = vmatprep.subr.mxu0 0.0
      %1967 = vmatpush1.msra.mxu0 %v1929
      %1968 = vmatprep.subr.mxu0 0.0
      %1969 = vmatpush1.msra.mxu0 %v1927
      %1970 = vmatprep.subr.mxu0 0.0
      %1971 = vmatpush2.msra.mxu0 0.0
      %1972 = vmatprep.subr.mxu0 0.0
      %1973 = vmatpush2.msra.mxu0 0.0
      %1974 = vmatprep.subr.mxu0 0.0
      %1975 = vmatpush2.msra.mxu0 0.0
      %1976 = vmatprep.subr.mxu0 0.0
      %1977 = vmatpush2.msra.mxu0 0.0
      %1978 = vmatprep.subr.mxu0 0.0
      %1979 = vmatpush2.msra.mxu0 0.0
      %1980 = vmatprep.subr.mxu0 0.0
      %1981 = vmatpush2.msra.mxu0 0.0
      %1982 = vmatprep.subr.mxu0 0.0
      %1983 = vmatpush2.msra.mxu0 0.0
      %1984 = vmatprep.subr.mxu0 0.0
      %1985 = vmatpush2.msra.mxu0 0.0
      %1986 = vmatprep.subr.mxu0 0.0
      %1987 = vmatpush2.msra.mxu0 0.0
      %1988 = vmatprep.subr.mxu0 0.0
      %1989 = vmatpush2.msra.mxu0 0.0
      %1990 = vmatprep.subr.mxu0 0.0
      %1991 = vmatpush2.msra.mxu0 0.0
      %1992 = vmatprep.subr.mxu0 0.0
      %1993 = vmatpush2.msra.mxu0 0.0
      %1994 = vmatprep.subr.mxu0 0.0
      %1995 = vmatpush2.msra.mxu0 0.0
      %1996 = vmatprep.subr.mxu0 0.0
      %1997 = vmatpush2.msra.mxu0 0.0
      %1998 = vmatprep.subr.mxu0 0.0
      %1999 = vmatpush2.msra.mxu0 0.0
      %2000 = vmatprep.subr.mxu0 0.0
      %2001 = vmatpush2.msra.mxu0 0.0
      %2002 = vmatprep.mubr.f32.mxu0 0.0
      %2003 = vmatmul.mubr.f32.gmra.mxu0 %v1933
      %v2004 = vpop.f32.mrf.mxu0
      %v2005 = vadd.f32 0.0, %v2004
      %v2006 = vpop.f32.mrf.mxu0
      %2007 = vmatprep.mubr.f32.mxu0 0.0
      %2008 = vmatmul.mubr.f32.gmra.mxu0 %v1936
      %v2009 = vpop.f32.mrf.mxu0
      %v2010 = vadd.f32 0.0, %v2009
      %v2011 = vpop.f32.mrf.mxu0
      %2012 = vdwg.mxu0
      %2015 = vrot.lane.b32.xlu0 %v516, 96
      %v2016 = vpop.permute.xlu0 %2015
      %2017 = vrot.lane.b32.xlu0 %v521, 96
      %v2018 = vpop.permute.xlu0 %2017
      %v2022 = vsel %vm873, %v1744, 0
      %v2025 = vsel %vm873, %v1745, 0
      %2027 = vmatprep.subr.mxu0 0.0
      %2028 = vmatpush1.msra.mxu0 0.0
      %2029 = vmatprep.subr.mxu0 0.0
      %2030 = vmatpush1.msra.mxu0 0.0
      %2031 = vmatprep.subr.mxu0 0.0
      %2032 = vmatpush1.msra.mxu0 0.0
      %2033 = vmatprep.subr.mxu0 0.0
      %2034 = vmatpush1.msra.mxu0 0.0
      %2035 = vmatprep.subr.mxu0 0.0
      %2036 = vmatpush1.msra.mxu0 0.0
      %2037 = vmatprep.subr.mxu0 0.0
      %2038 = vmatpush1.msra.mxu0 0.0
      %2039 = vmatprep.subr.mxu0 0.0
      %2040 = vmatpush1.msra.mxu0 0.0
      %2041 = vmatprep.subr.mxu0 0.0
      %2042 = vmatpush1.msra.mxu0 0.0
      %2043 = vmatprep.subr.mxu0 0.0
      %2044 = vmatpush1.msra.mxu0 0.0
      %2045 = vmatprep.subr.mxu0 0.0
      %2046 = vmatpush1.msra.mxu0 0.0
      %2047 = vmatprep.subr.mxu0 0.0
      %2048 = vmatpush1.msra.mxu0 0.0
      %2049 = vmatprep.subr.mxu0 0.0
      %2050 = vmatpush1.msra.mxu0 0.0
      %2051 = vmatprep.subr.mxu0 0.0
      %2052 = vmatpush1.msra.mxu0 0.0
      %2053 = vmatprep.subr.mxu0 0.0
      %2054 = vmatpush1.msra.mxu0 0.0
      %2055 = vmatprep.subr.mxu0 0.0
      %2056 = vmatpush1.msra.mxu0 %v2018
      %2057 = vmatprep.subr.mxu0 0.0
      %2058 = vmatpush1.msra.mxu0 %v2016
      %2059 = vmatprep.subr.mxu0 0.0
      %2060 = vmatpush2.msra.mxu0 0.0
      %2061 = vmatprep.subr.mxu0 0.0
      %2062 = vmatpush2.msra.mxu0 0.0
      %2063 = vmatprep.subr.mxu0 0.0
      %2064 = vmatpush2.msra.mxu0 0.0
      %2065 = vmatprep.subr.mxu0 0.0
      %2066 = vmatpush2.msra.mxu0 0.0
      %2067 = vmatprep.subr.mxu0 0.0
      %2068 = vmatpush2.msra.mxu0 0.0
      %2069 = vmatprep.subr.mxu0 0.0
      %2070 = vmatpush2.msra.mxu0 0.0
      %2071 = vmatprep.subr.mxu0 0.0
      %2072 = vmatpush2.msra.mxu0 0.0
      %2073 = vmatprep.subr.mxu0 0.0
      %2074 = vmatpush2.msra.mxu0 0.0
      %2075 = vmatprep.subr.mxu0 0.0
      %2076 = vmatpush2.msra.mxu0 0.0
      %2077 = vmatprep.subr.mxu0 0.0
      %2078 = vmatpush2.msra.mxu0 0.0
      %2079 = vmatprep.subr.mxu0 0.0
      %2080 = vmatpush2.msra.mxu0 0.0
      %2081 = vmatprep.subr.mxu0 0.0
      %2082 = vmatpush2.msra.mxu0 0.0
      %2083 = vmatprep.subr.mxu0 0.0
      %2084 = vmatpush2.msra.mxu0 0.0
      %2085 = vmatprep.subr.mxu0 0.0
      %2086 = vmatpush2.msra.mxu0 0.0
      %2087 = vmatprep.subr.mxu0 0.0
      %2088 = vmatpush2.msra.mxu0 0.0
      %2089 = vmatprep.subr.mxu0 0.0
      %2090 = vmatpush2.msra.mxu0 0.0
      %2091 = vmatprep.mubr.f32.mxu0 0.0
      %2092 = vmatmul.mubr.f32.gmra.mxu0 %v2022
      %v2093 = vpop.f32.mrf.mxu0
      %v2094 = vadd.f32 0.0, %v2093
      %v2095 = vpop.f32.mrf.mxu0
      %2096 = vmatprep.mubr.f32.mxu0 0.0
      %2097 = vmatmul.mubr.f32.gmra.mxu0 %v2025
      %v2098 = vpop.f32.mrf.mxu0
      %v2099 = vadd.f32 0.0, %v2098
      %v2100 = vpop.f32.mrf.mxu0
      %2101 = vdwg.mxu0
      %2110 = vrot.lane.b32.xlu0 %v1827, 32
      %v2111 = vpop.permute.xlu0 %2110
      %2112 = vrot.lane.b32.xlu0 %v1832, 32
      %v2113 = vpop.permute.xlu0 %2112
      %2114 = vrot.lane.b32.xlu0 %v1916, 32
      %v2115 = vpop.permute.xlu0 %2114
      %2116 = vrot.lane.b32.xlu0 %v1921, 32
      %v2117 = vpop.permute.xlu0 %2116
      %2118 = vrot.lane.b32.xlu0 %v2005, 32
      %v2119 = vpop.permute.xlu0 %2118
      %2120 = vrot.lane.b32.xlu0 %v2010, 32
      %v2121 = vpop.permute.xlu0 %2120
      %2122 = vrot.lane.b32.xlu0 %v2094, 32
      %v2123 = vpop.permute.xlu0 %2122
      %2124 = vrot.lane.b32.xlu0 %v2099, 32
      %v2125 = vpop.permute.xlu0 %2124
      %vm2134 = vcmask 523520
      %2135 = vst.msk [vmem:[#allocation2] sm:$0xff] %vm2134, %v2111
      %2136 = vst.msk [vmem:[#allocation2 + $0x8] sm:$0xff] %vm2134, %v2113
      %2137 = vst.msk [vmem:[#allocation2 + $0x10] sm:$0xff] %vm2134, %v2115
      %2138 = vst.msk [vmem:[#allocation2 + $0x18] sm:$0xff] %vm2134, %v2117
      %2139 = vst.msk [vmem:[#allocation2 + $0x20] sm:$0xff] %vm2134, %v2119
      %2140 = vst.msk [vmem:[#allocation2 + $0x28] sm:$0xff] %vm2134, %v2121
      %2141 = vst.msk [vmem:[#allocation2 + $0x30] sm:$0xff] %vm2134, %v2123
      %2142 = vst.msk [vmem:[#allocation2 + $0x38] sm:$0xff] %vm2134, %v2125
      %2143 = vrot.lane.b32.xlu0 %v373, 64
      %v2144 = vpop.permute.xlu0 %2143
      %2145 = vrot.lane.b32.xlu0 %v379, 64
      %v2146 = vpop.permute.xlu0 %2145
      %2147 = vrot.lane.b32.xlu0 %v375, 64
      %v2148 = vpop.permute.xlu0 %2147
      %2149 = vrot.lane.b32.xlu0 %v381, 64
      %v2150 = vpop.permute.xlu0 %2149
      %v2151 = vsel %vm524, %v2144, 0
      %v2153 = vsel %vm524, %v2146, 0
      %v2155 = vsel %vm524, %v2148, 0
      %v2157 = vsel %vm524, %v2150, 0
      %2159 = vmatprep.subr.mxu0 0.0
      %2160 = vmatpush1.xpose.msra.mxu0 0.0
      %2161 = vmatprep.subr.mxu0 0.0
      %2162 = vmatpush1.xpose.msra.mxu0 0.0
      %2163 = vmatprep.subr.mxu0 0.0
      %2164 = vmatpush1.xpose.msra.mxu0 0.0
      %2165 = vmatprep.subr.mxu0 0.0
      %2166 = vmatpush1.xpose.msra.mxu0 0.0
      %2167 = vmatprep.subr.mxu0 0.0
      %2168 = vmatpush1.xpose.msra.mxu0 0.0
      %2169 = vmatprep.subr.mxu0 0.0
      %2170 = vmatpush1.xpose.msra.mxu0 0.0
      %2171 = vmatprep.subr.mxu0 0.0
      %2172 = vmatpush1.xpose.msra.mxu0 0.0
      %2173 = vmatprep.subr.mxu0 0.0
      %2174 = vmatpush1.xpose.msra.mxu0 0.0
      %2175 = vmatprep.subr.mxu0 0.0
      %2176 = vmatpush1.xpose.msra.mxu0 0.0
      %2177 = vmatprep.subr.mxu0 0.0
      %2178 = vmatpush1.xpose.msra.mxu0 0.0
      %2179 = vmatprep.subr.mxu0 0.0
      %2180 = vmatpush1.xpose.msra.mxu0 0.0
      %2181 = vmatprep.subr.mxu0 0.0
      %2182 = vmatpush1.xpose.msra.mxu0 0.0
      %2183 = vmatprep.subr.mxu0 0.0
      %2184 = vmatpush1.xpose.msra.mxu0 0.0
      %2185 = vmatprep.subr.mxu0 0.0
      %2186 = vmatpush1.xpose.msra.mxu0 0.0
      %2187 = vmatprep.subr.mxu0 0.0
      %2188 = vmatpush1.xpose.msra.mxu0 %v2157
      %2189 = vmatprep.subr.mxu0 0.0
      %2190 = vmatpush1.xpose.msra.mxu0 %v2155
      %2191 = vmatprep.subr.mxu0 0.0
      %2192 = vmatpush2.xpose.msra.mxu0 0.0
      %2193 = vmatprep.subr.mxu0 0.0
      %2194 = vmatpush2.xpose.msra.mxu0 0.0
      %2195 = vmatprep.subr.mxu0 0.0
      %2196 = vmatpush2.xpose.msra.mxu0 0.0
      %2197 = vmatprep.subr.mxu0 0.0
      %2198 = vmatpush2.xpose.msra.mxu0 0.0
      %2199 = vmatprep.subr.mxu0 0.0
      %2200 = vmatpush2.xpose.msra.mxu0 0.0
      %2201 = vmatprep.subr.mxu0 0.0
      %2202 = vmatpush2.xpose.msra.mxu0 0.0
      %2203 = vmatprep.subr.mxu0 0.0
      %2204 = vmatpush2.xpose.msra.mxu0 0.0
      %2205 = vmatprep.subr.mxu0 0.0
      %2206 = vmatpush2.xpose.msra.mxu0 0.0
      %2207 = vmatprep.subr.mxu0 0.0
      %2208 = vmatpush2.xpose.msra.mxu0 0.0
      %2209 = vmatprep.subr.mxu0 0.0
      %2210 = vmatpush2.xpose.msra.mxu0 0.0
      %2211 = vmatprep.subr.mxu0 0.0
      %2212 = vmatpush2.xpose.msra.mxu0 0.0
      %2213 = vmatprep.subr.mxu0 0.0
      %2214 = vmatpush2.xpose.msra.mxu0 0.0
      %2215 = vmatprep.subr.mxu0 0.0
      %2216 = vmatpush2.xpose.msra.mxu0 0.0
      %2217 = vmatprep.subr.mxu0 0.0
      %2218 = vmatpush2.xpose.msra.mxu0 0.0
      %2219 = vmatprep.subr.mxu0 0.0
      %2220 = vmatpush2.xpose.msra.mxu0 0.0
      %2221 = vmatprep.subr.mxu0 0.0
      %2222 = vmatpush2.xpose.msra.mxu0 0.0
      %2223 = vmatprep.mubr.f32.mxu0 0.0
      %2224 = vmatmul.mubr.f32.gmra.mxu0 %v2151
      %v2225 = vpop.f32.mrf.mxu0
      %v2226 = vadd.f32 0.0, %v2225
      %v2227 = vpop.f32.mrf.mxu0
      %2228 = vmatprep.mubr.f32.mxu0 0.0
      %2229 = vmatmul.mubr.f32.gmra.mxu0 %v2153
      %v2230 = vpop.f32.mrf.mxu0
      %v2231 = vadd.f32 0.0, %v2230
      %v2232 = vpop.f32.mrf.mxu0
      %2233 = vdwg.mxu0
      %2234 = vrot.lane.b32.xlu0 %v385, 64
      %v2235 = vpop.permute.xlu0 %2234
      %2236 = vrot.lane.b32.xlu0 %v391, 64
      %v2237 = vpop.permute.xlu0 %2236
      %2238 = vrot.lane.b32.xlu0 %v387, 64
      %v2239 = vpop.permute.xlu0 %2238
      %2240 = vrot.lane.b32.xlu0 %v393, 64
      %v2241 = vpop.permute.xlu0 %2240
      %v2242 = vsel %vm524, %v2235, 0
      %v2244 = vsel %vm524, %v2237, 0
      %v2246 = vsel %vm524, %v2239, 0
      %v2248 = vsel %vm524, %v2241, 0
      %2250 = vmatprep.subr.mxu0 0.0
      %2251 = vmatpush1.xpose.msra.mxu0 0.0
      %2252 = vmatprep.subr.mxu0 0.0
      %2253 = vmatpush1.xpose.msra.mxu0 0.0
      %2254 = vmatprep.subr.mxu0 0.0
      %2255 = vmatpush1.xpose.msra.mxu0 0.0
      %2256 = vmatprep.subr.mxu0 0.0
      %2257 = vmatpush1.xpose.msra.mxu0 0.0
      %2258 = vmatprep.subr.mxu0 0.0
      %2259 = vmatpush1.xpose.msra.mxu0 0.0
      %2260 = vmatprep.subr.mxu0 0.0
      %2261 = vmatpush1.xpose.msra.mxu0 0.0
      %2262 = vmatprep.subr.mxu0 0.0
      %2263 = vmatpush1.xpose.msra.mxu0 0.0
      %2264 = vmatprep.subr.mxu0 0.0
      %2265 = vmatpush1.xpose.msra.mxu0 0.0
      %2266 = vmatprep.subr.mxu0 0.0
      %2267 = vmatpush1.xpose.msra.mxu0 0.0
      %2268 = vmatprep.subr.mxu0 0.0
      %2269 = vmatpush1.xpose.msra.mxu0 0.0
      %2270 = vmatprep.subr.mxu0 0.0
      %2271 = vmatpush1.xpose.msra.mxu0 0.0
      %2272 = vmatprep.subr.mxu0 0.0
      %2273 = vmatpush1.xpose.msra.mxu0 0.0
      %2274 = vmatprep.subr.mxu0 0.0
      %2275 = vmatpush1.xpose.msra.mxu0 0.0
      %2276 = vmatprep.subr.mxu0 0.0
      %2277 = vmatpush1.xpose.msra.mxu0 0.0
      %2278 = vmatprep.subr.mxu0 0.0
      %2279 = vmatpush1.xpose.msra.mxu0 %v2248
      %2280 = vmatprep.subr.mxu0 0.0
      %2281 = vmatpush1.xpose.msra.mxu0 %v2246
      %2282 = vmatprep.subr.mxu0 0.0
      %2283 = vmatpush2.xpose.msra.mxu0 0.0
      %2284 = vmatprep.subr.mxu0 0.0
      %2285 = vmatpush2.xpose.msra.mxu0 0.0
      %2286 = vmatprep.subr.mxu0 0.0
      %2287 = vmatpush2.xpose.msra.mxu0 0.0
      %2288 = vmatprep.subr.mxu0 0.0
      %2289 = vmatpush2.xpose.msra.mxu0 0.0
      %2290 = vmatprep.subr.mxu0 0.0
      %2291 = vmatpush2.xpose.msra.mxu0 0.0
      %2292 = vmatprep.subr.mxu0 0.0
      %2293 = vmatpush2.xpose.msra.mxu0 0.0
      %2294 = vmatprep.subr.mxu0 0.0
      %2295 = vmatpush2.xpose.msra.mxu0 0.0
      %2296 = vmatprep.subr.mxu0 0.0
      %2297 = vmatpush2.xpose.msra.mxu0 0.0
      %2298 = vmatprep.subr.mxu0 0.0
      %2299 = vmatpush2.xpose.msra.mxu0 0.0
      %2300 = vmatprep.subr.mxu0 0.0
      %2301 = vmatpush2.xpose.msra.mxu0 0.0
      %2302 = vmatprep.subr.mxu0 0.0
      %2303 = vmatpush2.xpose.msra.mxu0 0.0
      %2304 = vmatprep.subr.mxu0 0.0
      %2305 = vmatpush2.xpose.msra.mxu0 0.0
      %2306 = vmatprep.subr.mxu0 0.0
      %2307 = vmatpush2.xpose.msra.mxu0 0.0
      %2308 = vmatprep.subr.mxu0 0.0
      %2309 = vmatpush2.xpose.msra.mxu0 0.0
      %2310 = vmatprep.subr.mxu0 0.0
      %2311 = vmatpush2.xpose.msra.mxu0 0.0
      %2312 = vmatprep.subr.mxu0 0.0
      %2313 = vmatpush2.xpose.msra.mxu0 0.0
      %2314 = vmatprep.mubr.f32.mxu0 0.0
      %2315 = vmatmul.mubr.f32.gmra.mxu0 %v2242
      %v2316 = vpop.f32.mrf.mxu0
      %v2317 = vadd.f32 0.0, %v2316
      %v2318 = vpop.f32.mrf.mxu0
      %2319 = vmatprep.mubr.f32.mxu0 0.0
      %2320 = vmatmul.mubr.f32.gmra.mxu0 %v2244
      %v2321 = vpop.f32.mrf.mxu0
      %v2322 = vadd.f32 0.0, %v2321
      %v2323 = vpop.f32.mrf.mxu0
      %2324 = vdwg.mxu0
      %2325 = vrot.lane.b32.xlu0 %v397, 64
      %v2326 = vpop.permute.xlu0 %2325
      %2327 = vrot.lane.b32.xlu0 %v403, 64
      %v2328 = vpop.permute.xlu0 %2327
      %2329 = vrot.lane.b32.xlu0 %v399, 64
      %v2330 = vpop.permute.xlu0 %2329
      %2331 = vrot.lane.b32.xlu0 %v405, 64
      %v2332 = vpop.permute.xlu0 %2331
      %v2333 = vsel %vm524, %v2326, 0
      %v2335 = vsel %vm524, %v2328, 0
      %v2337 = vsel %vm524, %v2330, 0
      %v2339 = vsel %vm524, %v2332, 0
      %2341 = vmatprep.subr.mxu0 0.0
      %2342 = vmatpush1.xpose.msra.mxu0 0.0
      %2343 = vmatprep.subr.mxu0 0.0
      %2344 = vmatpush1.xpose.msra.mxu0 0.0
      %2345 = vmatprep.subr.mxu0 0.0
      %2346 = vmatpush1.xpose.msra.mxu0 0.0
      %2347 = vmatprep.subr.mxu0 0.0
      %2348 = vmatpush1.xpose.msra.mxu0 0.0
      %2349 = vmatprep.subr.mxu0 0.0
      %2350 = vmatpush1.xpose.msra.mxu0 0.0
      %2351 = vmatprep.subr.mxu0 0.0
      %2352 = vmatpush1.xpose.msra.mxu0 0.0
      %2353 = vmatprep.subr.mxu0 0.0
      %2354 = vmatpush1.xpose.msra.mxu0 0.0
      %2355 = vmatprep.subr.mxu0 0.0
      %2356 = vmatpush1.xpose.msra.mxu0 0.0
      %2357 = vmatprep.subr.mxu0 0.0
      %2358 = vmatpush1.xpose.msra.mxu0 0.0
      %2359 = vmatprep.subr.mxu0 0.0
      %2360 = vmatpush1.xpose.msra.mxu0 0.0
      %2361 = vmatprep.subr.mxu0 0.0
      %2362 = vmatpush1.xpose.msra.mxu0 0.0
      %2363 = vmatprep.subr.mxu0 0.0
      %2364 = vmatpush1.xpose.msra.mxu0 0.0
      %2365 = vmatprep.subr.mxu0 0.0
      %2366 = vmatpush1.xpose.msra.mxu0 0.0
      %2367 = vmatprep.subr.mxu0 0.0
      %2368 = vmatpush1.xpose.msra.mxu0 0.0
      %2369 = vmatprep.subr.mxu0 0.0
      %2370 = vmatpush1.xpose.msra.mxu0 %v2339
      %2371 = vmatprep.subr.mxu0 0.0
      %2372 = vmatpush1.xpose.msra.mxu0 %v2337
      %2373 = vmatprep.subr.mxu0 0.0
      %2374 = vmatpush2.xpose.msra.mxu0 0.0
      %2375 = vmatprep.subr.mxu0 0.0
      %2376 = vmatpush2.xpose.msra.mxu0 0.0
      %2377 = vmatprep.subr.mxu0 0.0
      %2378 = vmatpush2.xpose.msra.mxu0 0.0
      %2379 = vmatprep.subr.mxu0 0.0
      %2380 = vmatpush2.xpose.msra.mxu0 0.0
      %2381 = vmatprep.subr.mxu0 0.0
      %2382 = vmatpush2.xpose.msra.mxu0 0.0
      %2383 = vmatprep.subr.mxu0 0.0
      %2384 = vmatpush2.xpose.msra.mxu0 0.0
      %2385 = vmatprep.subr.mxu0 0.0
      %2386 = vmatpush2.xpose.msra.mxu0 0.0
      %2387 = vmatprep.subr.mxu0 0.0
      %2388 = vmatpush2.xpose.msra.mxu0 0.0
      %2389 = vmatprep.subr.mxu0 0.0
      %2390 = vmatpush2.xpose.msra.mxu0 0.0
      %2391 = vmatprep.subr.mxu0 0.0
      %2392 = vmatpush2.xpose.msra.mxu0 0.0
      %2393 = vmatprep.subr.mxu0 0.0
      %2394 = vmatpush2.xpose.msra.mxu0 0.0
      %2395 = vmatprep.subr.mxu0 0.0
      %2396 = vmatpush2.xpose.msra.mxu0 0.0
      %2397 = vmatprep.subr.mxu0 0.0
      %2398 = vmatpush2.xpose.msra.mxu0 0.0
      %2399 = vmatprep.subr.mxu0 0.0
      %2400 = vmatpush2.xpose.msra.mxu0 0.0
      %2401 = vmatprep.subr.mxu0 0.0
      %2402 = vmatpush2.xpose.msra.mxu0 0.0
      %2403 = vmatprep.subr.mxu0 0.0
      %2404 = vmatpush2.xpose.msra.mxu0 0.0
      %2405 = vmatprep.mubr.f32.mxu0 0.0
      %2406 = vmatmul.mubr.f32.gmra.mxu0 %v2333
      %v2407 = vpop.f32.mrf.mxu0
      %v2408 = vadd.f32 0.0, %v2407
      %v2409 = vpop.f32.mrf.mxu0
      %2410 = vmatprep.mubr.f32.mxu0 0.0
      %2411 = vmatmul.mubr.f32.gmra.mxu0 %v2335
      %v2412 = vpop.f32.mrf.mxu0
      %v2413 = vadd.f32 0.0, %v2412
      %v2414 = vpop.f32.mrf.mxu0
      %2415 = vdwg.mxu0
      %2416 = vrot.lane.b32.xlu0 %v409, 64
      %v2417 = vpop.permute.xlu0 %2416
      %2418 = vrot.lane.b32.xlu0 %v415, 64
      %v2419 = vpop.permute.xlu0 %2418
      %2420 = vrot.lane.b32.xlu0 %v411, 64
      %v2421 = vpop.permute.xlu0 %2420
      %2422 = vrot.lane.b32.xlu0 %v417, 64
      %v2423 = vpop.permute.xlu0 %2422
      %v2424 = vsel %vm524, %v2417, 0
      %v2426 = vsel %vm524, %v2419, 0
      %v2428 = vsel %vm524, %v2421, 0
      %v2430 = vsel %vm524, %v2423, 0
      %2432 = vmatprep.subr.mxu0 0.0
      %2433 = vmatpush1.xpose.msra.mxu0 0.0
      %2434 = vmatprep.subr.mxu0 0.0
      %2435 = vmatpush1.xpose.msra.mxu0 0.0
      %2436 = vmatprep.subr.mxu0 0.0
      %2437 = vmatpush1.xpose.msra.mxu0 0.0
      %2438 = vmatprep.subr.mxu0 0.0
      %2439 = vmatpush1.xpose.msra.mxu0 0.0
      %2440 = vmatprep.subr.mxu0 0.0
      %2441 = vmatpush1.xpose.msra.mxu0 0.0
      %2442 = vmatprep.subr.mxu0 0.0
      %2443 = vmatpush1.xpose.msra.mxu0 0.0
      %2444 = vmatprep.subr.mxu0 0.0
      %2445 = vmatpush1.xpose.msra.mxu0 0.0
      %2446 = vmatprep.subr.mxu0 0.0
      %2447 = vmatpush1.xpose.msra.mxu0 0.0
      %2448 = vmatprep.subr.mxu0 0.0
      %2449 = vmatpush1.xpose.msra.mxu0 0.0
      %2450 = vmatprep.subr.mxu0 0.0
      %2451 = vmatpush1.xpose.msra.mxu0 0.0
      %2452 = vmatprep.subr.mxu0 0.0
      %2453 = vmatpush1.xpose.msra.mxu0 0.0
      %2454 = vmatprep.subr.mxu0 0.0
      %2455 = vmatpush1.xpose.msra.mxu0 0.0
      %2456 = vmatprep.subr.mxu0 0.0
      %2457 = vmatpush1.xpose.msra.mxu0 0.0
      %2458 = vmatprep.subr.mxu0 0.0
      %2459 = vmatpush1.xpose.msra.mxu0 0.0
      %2460 = vmatprep.subr.mxu0 0.0
      %2461 = vmatpush1.xpose.msra.mxu0 %v2430
      %2462 = vmatprep.subr.mxu0 0.0
      %2463 = vmatpush1.xpose.msra.mxu0 %v2428
      %2464 = vmatprep.subr.mxu0 0.0
      %2465 = vmatpush2.xpose.msra.mxu0 0.0
      %2466 = vmatprep.subr.mxu0 0.0
      %2467 = vmatpush2.xpose.msra.mxu0 0.0
      %2468 = vmatprep.subr.mxu0 0.0
      %2469 = vmatpush2.xpose.msra.mxu0 0.0
      %2470 = vmatprep.subr.mxu0 0.0
      %2471 = vmatpush2.xpose.msra.mxu0 0.0
      %2472 = vmatprep.subr.mxu0 0.0
      %2473 = vmatpush2.xpose.msra.mxu0 0.0
      %2474 = vmatprep.subr.mxu0 0.0
      %2475 = vmatpush2.xpose.msra.mxu0 0.0
      %2476 = vmatprep.subr.mxu0 0.0
      %2477 = vmatpush2.xpose.msra.mxu0 0.0
      %2478 = vmatprep.subr.mxu0 0.0
      %2479 = vmatpush2.xpose.msra.mxu0 0.0
      %2480 = vmatprep.subr.mxu0 0.0
      %2481 = vmatpush2.xpose.msra.mxu0 0.0
      %2482 = vmatprep.subr.mxu0 0.0
      %2483 = vmatpush2.xpose.msra.mxu0 0.0
      %2484 = vmatprep.subr.mxu0 0.0
      %2485 = vmatpush2.xpose.msra.mxu0 0.0
      %2486 = vmatprep.subr.mxu0 0.0
      %2487 = vmatpush2.xpose.msra.mxu0 0.0
      %2488 = vmatprep.subr.mxu0 0.0
      %2489 = vmatpush2.xpose.msra.mxu0 0.0
      %2490 = vmatprep.subr.mxu0 0.0
      %2491 = vmatpush2.xpose.msra.mxu0 0.0
      %2492 = vmatprep.subr.mxu0 0.0
      %2493 = vmatpush2.xpose.msra.mxu0 0.0
      %2494 = vmatprep.subr.mxu0 0.0
      %2495 = vmatpush2.xpose.msra.mxu0 0.0
      %2496 = vmatprep.mubr.f32.mxu0 0.0
      %2497 = vmatmul.mubr.f32.gmra.mxu0 %v2424
      %v2498 = vpop.f32.mrf.mxu0
      %v2499 = vadd.f32 0.0, %v2498
      %v2500 = vpop.f32.mrf.mxu0
      %2501 = vmatprep.mubr.f32.mxu0 0.0
      %2502 = vmatmul.mubr.f32.gmra.mxu0 %v2426
      %v2503 = vpop.f32.mrf.mxu0
      %v2504 = vadd.f32 0.0, %v2503
      %v2505 = vpop.f32.mrf.mxu0
      %2506 = vdwg.mxu0
      %v2507 = vsel %vm873, %v2226, -inf
      %2508 = vmax.xlane.f32.xlu0 %v2507
      %v2509 = vpop.xlane.xlu0 %2508
      %v2510 = vsel %vm873, %v2231, -inf
      %2511 = vmax.xlane.f32.xlu0 %v2510
      %v2512 = vpop.xlane.xlu0 %2511
      %v2513 = vsel %vm873, %v2317, -inf
      %2514 = vmax.xlane.f32.xlu0 %v2513
      %v2515 = vpop.xlane.xlu0 %2514
      %v2516 = vsel %vm873, %v2322, -inf
      %2517 = vmax.xlane.f32.xlu0 %v2516
      %v2518 = vpop.xlane.xlu0 %2517
      %v2519 = vsel %vm873, %v2408, -inf
      %2520 = vmax.xlane.f32.xlu0 %v2519
      %v2521 = vpop.xlane.xlu0 %2520
      %v2522 = vsel %vm873, %v2413, -inf
      %2523 = vmax.xlane.f32.xlu0 %v2522
      %v2524 = vpop.xlane.xlu0 %2523
      %v2525 = vsel %vm873, %v2499, -inf
      %2526 = vmax.xlane.f32.xlu0 %v2525
      %v2527 = vpop.xlane.xlu0 %2526
      %v2528 = vsel %vm873, %v2504, -inf
      %2529 = vmax.xlane.f32.xlu0 %v2528
      %v2530 = vpop.xlane.xlu0 %2529
      %v2531 = vsub.f32 %v2226, %v2509
      %v2532 = vsub.f32 %v2231, %v2512
      %v2533 = vsub.f32 %v2317, %v2515
      %v2534 = vsub.f32 %v2322, %v2518
      %v2535 = vsub.f32 %v2408, %v2521
      %v2536 = vsub.f32 %v2413, %v2524
      %v2537 = vsub.f32 %v2499, %v2527
      %v2538 = vsub.f32 %v2504, %v2530
      %v2539 = vmul.f32 %v2531, 1.442695
      %v2540 = vpow.pop %v2539
      %v2541 = vmul.f32 %v2532, 1.442695
      %v2542 = vpow.pop %v2541
      %v2543 = vmul.f32 %v2533, 1.442695
      %v2544 = vpow.pop %v2543
      %v2545 = vmul.f32 %v2534, 1.442695
      %v2546 = vpow.pop %v2545
      %v2547 = vmul.f32 %v2535, 1.442695
      %v2548 = vpow.pop %v2547
      %v2549 = vmul.f32 %v2536, 1.442695
      %v2550 = vpow.pop %v2549
      %v2551 = vmul.f32 %v2537, 1.442695
      %v2552 = vpow.pop %v2551
      %v2553 = vmul.f32 %v2538, 1.442695
      %v2554 = vpow.pop %v2553
      %v2555 = vsel %vm873, %v2540, 0.0
      %2556 = vadd.xlane.f32.xlu0 %v2555
      %v2557 = vpop.xlane.xlu0 %2556
      %v2558 = vsel %vm873, %v2542, 0.0
      %2559 = vadd.xlane.f32.xlu0 %v2558
      %v2560 = vpop.xlane.xlu0 %2559
      %v2561 = vsel %vm873, %v2544, 0.0
      %2562 = vadd.xlane.f32.xlu0 %v2561
      %v2563 = vpop.xlane.xlu0 %2562
      %v2564 = vsel %vm873, %v2546, 0.0
      %2565 = vadd.xlane.f32.xlu0 %v2564
      %v2566 = vpop.xlane.xlu0 %2565
      %v2567 = vsel %vm873, %v2548, 0.0
      %2568 = vadd.xlane.f32.xlu0 %v2567
      %v2569 = vpop.xlane.xlu0 %2568
      %v2570 = vsel %vm873, %v2550, 0.0
      %2571 = vadd.xlane.f32.xlu0 %v2570
      %v2572 = vpop.xlane.xlu0 %2571
      %v2573 = vsel %vm873, %v2552, 0.0
      %2574 = vadd.xlane.f32.xlu0 %v2573
      %v2575 = vpop.xlane.xlu0 %2574
      %v2576 = vsel %vm873, %v2554, 0.0
      %2577 = vadd.xlane.f32.xlu0 %v2576
      %v2578 = vpop.xlane.xlu0 %2577
      %v2579 = vrcp.pop %v2557
      %v2580 = vrcp.pop %v2560
      %v2581 = vrcp.pop %v2563
      %v2582 = vrcp.pop %v2566
      %v2583 = vrcp.pop %v2569
      %v2584 = vrcp.pop %v2572
      %v2585 = vrcp.pop %v2575
      %v2586 = vrcp.pop %v2578
      %v2587 = vmul.f32 %v2540, %v2579
      %v2588 = vmul.f32 %v2542, %v2580
      %v2589 = vmul.f32 %v2544, %v2581
      %v2590 = vmul.f32 %v2546, %v2582
      %v2591 = vmul.f32 %v2548, %v2583
      %v2592 = vmul.f32 %v2550, %v2584
      %v2593 = vmul.f32 %v2552, %v2585
      %v2594 = vmul.f32 %v2554, %v2586
      %2595 = vrot.lane.b32.xlu0 %v486, 64
      %v2596 = vpop.permute.xlu0 %2595
      %2597 = vrot.lane.b32.xlu0 %v491, 64
      %v2598 = vpop.permute.xlu0 %2597
      %v2602 = vsel %vm873, %v2587, 0
      %v2605 = vsel %vm873, %v2588, 0
      %2607 = vmatprep.subr.mxu0 0.0
      %2608 = vmatpush1.msra.mxu0 0.0
      %2609 = vmatprep.subr.mxu0 0.0
      %2610 = vmatpush1.msra.mxu0 0.0
      %2611 = vmatprep.subr.mxu0 0.0
      %2612 = vmatpush1.msra.mxu0 0.0
      %2613 = vmatprep.subr.mxu0 0.0
      %2614 = vmatpush1.msra.mxu0 0.0
      %2615 = vmatprep.subr.mxu0 0.0
      %2616 = vmatpush1.msra.mxu0 0.0
      %2617 = vmatprep.subr.mxu0 0.0
      %2618 = vmatpush1.msra.mxu0 0.0
      %2619 = vmatprep.subr.mxu0 0.0
      %2620 = vmatpush1.msra.mxu0 0.0
      %2621 = vmatprep.subr.mxu0 0.0
      %2622 = vmatpush1.msra.mxu0 0.0
      %2623 = vmatprep.subr.mxu0 0.0
      %2624 = vmatpush1.msra.mxu0 0.0
      %2625 = vmatprep.subr.mxu0 0.0
      %2626 = vmatpush1.msra.mxu0 0.0
      %2627 = vmatprep.subr.mxu0 0.0
      %2628 = vmatpush1.msra.mxu0 0.0
      %2629 = vmatprep.subr.mxu0 0.0
      %2630 = vmatpush1.msra.mxu0 0.0
      %2631 = vmatprep.subr.mxu0 0.0
      %2632 = vmatpush1.msra.mxu0 0.0
      %2633 = vmatprep.subr.mxu0 0.0
      %2634 = vmatpush1.msra.mxu0 0.0
      %2635 = vmatprep.subr.mxu0 0.0
      %2636 = vmatpush1.msra.mxu0 %v2598
      %2637 = vmatprep.subr.mxu0 0.0
      %2638 = vmatpush1.msra.mxu0 %v2596
      %2639 = vmatprep.subr.mxu0 0.0
      %2640 = vmatpush2.msra.mxu0 0.0
      %2641 = vmatprep.subr.mxu0 0.0
      %2642 = vmatpush2.msra.mxu0 0.0
      %2643 = vmatprep.subr.mxu0 0.0
      %2644 = vmatpush2.msra.mxu0 0.0
      %2645 = vmatprep.subr.mxu0 0.0
      %2646 = vmatpush2.msra.mxu0 0.0
      %2647 = vmatprep.subr.mxu0 0.0
      %2648 = vmatpush2.msra.mxu0 0.0
      %2649 = vmatprep.subr.mxu0 0.0
      %2650 = vmatpush2.msra.mxu0 0.0
      %2651 = vmatprep.subr.mxu0 0.0
      %2652 = vmatpush2.msra.mxu0 0.0
      %2653 = vmatprep.subr.mxu0 0.0
      %2654 = vmatpush2.msra.mxu0 0.0
      %2655 = vmatprep.subr.mxu0 0.0
      %2656 = vmatpush2.msra.mxu0 0.0
      %2657 = vmatprep.subr.mxu0 0.0
      %2658 = vmatpush2.msra.mxu0 0.0
      %2659 = vmatprep.subr.mxu0 0.0
      %2660 = vmatpush2.msra.mxu0 0.0
      %2661 = vmatprep.subr.mxu0 0.0
      %2662 = vmatpush2.msra.mxu0 0.0
      %2663 = vmatprep.subr.mxu0 0.0
      %2664 = vmatpush2.msra.mxu0 0.0
      %2665 = vmatprep.subr.mxu0 0.0
      %2666 = vmatpush2.msra.mxu0 0.0
      %2667 = vmatprep.subr.mxu0 0.0
      %2668 = vmatpush2.msra.mxu0 0.0
      %2669 = vmatprep.subr.mxu0 0.0
      %2670 = vmatpush2.msra.mxu0 0.0
      %2671 = vmatprep.mubr.f32.mxu0 0.0
      %2672 = vmatmul.mubr.f32.gmra.mxu0 %v2602
      %v2673 = vpop.f32.mrf.mxu0
      %v2674 = vadd.f32 0.0, %v2673
      %v2675 = vpop.f32.mrf.mxu0
      %2676 = vmatprep.mubr.f32.mxu0 0.0
      %2677 = vmatmul.mubr.f32.gmra.mxu0 %v2605
      %v2678 = vpop.f32.mrf.mxu0
      %v2679 = vadd.f32 0.0, %v2678
      %v2680 = vpop.f32.mrf.mxu0
      %2681 = vdwg.mxu0
      %2682 = vrot.lane.b32.xlu0 %v496, 64
      %v2683 = vpop.permute.xlu0 %2682
      %2684 = vrot.lane.b32.xlu0 %v501, 64
      %v2685 = vpop.permute.xlu0 %2684
      %v2689 = vsel %vm873, %v2589, 0
      %v2692 = vsel %vm873, %v2590, 0
      %2694 = vmatprep.subr.mxu0 0.0
      %2695 = vmatpush1.msra.mxu0 0.0
      %2696 = vmatprep.subr.mxu0 0.0
      %2697 = vmatpush1.msra.mxu0 0.0
      %2698 = vmatprep.subr.mxu0 0.0
      %2699 = vmatpush1.msra.mxu0 0.0
      %2700 = vmatprep.subr.mxu0 0.0
      %2701 = vmatpush1.msra.mxu0 0.0
      %2702 = vmatprep.subr.mxu0 0.0
      %2703 = vmatpush1.msra.mxu0 0.0
      %2704 = vmatprep.subr.mxu0 0.0
      %2705 = vmatpush1.msra.mxu0 0.0
      %2706 = vmatprep.subr.mxu0 0.0
      %2707 = vmatpush1.msra.mxu0 0.0
      %2708 = vmatprep.subr.mxu0 0.0
      %2709 = vmatpush1.msra.mxu0 0.0
      %2710 = vmatprep.subr.mxu0 0.0
      %2711 = vmatpush1.msra.mxu0 0.0
      %2712 = vmatprep.subr.mxu0 0.0
      %2713 = vmatpush1.msra.mxu0 0.0
      %2714 = vmatprep.subr.mxu0 0.0
      %2715 = vmatpush1.msra.mxu0 0.0
      %2716 = vmatprep.subr.mxu0 0.0
      %2717 = vmatpush1.msra.mxu0 0.0
      %2718 = vmatprep.subr.mxu0 0.0
      %2719 = vmatpush1.msra.mxu0 0.0
      %2720 = vmatprep.subr.mxu0 0.0
      %2721 = vmatpush1.msra.mxu0 0.0
      %2722 = vmatprep.subr.mxu0 0.0
      %2723 = vmatpush1.msra.mxu0 %v2685
      %2724 = vmatprep.subr.mxu0 0.0
      %2725 = vmatpush1.msra.mxu0 %v2683
      %2726 = vmatprep.subr.mxu0 0.0
      %2727 = vmatpush2.msra.mxu0 0.0
      %2728 = vmatprep.subr.mxu0 0.0
      %2729 = vmatpush2.msra.mxu0 0.0
      %2730 = vmatprep.subr.mxu0 0.0
      %2731 = vmatpush2.msra.mxu0 0.0
      %2732 = vmatprep.subr.mxu0 0.0
      %2733 = vmatpush2.msra.mxu0 0.0
      %2734 = vmatprep.subr.mxu0 0.0
      %2735 = vmatpush2.msra.mxu0 0.0
      %2736 = vmatprep.subr.mxu0 0.0
      %2737 = vmatpush2.msra.mxu0 0.0
      %2738 = vmatprep.subr.mxu0 0.0
      %2739 = vmatpush2.msra.mxu0 0.0
      %2740 = vmatprep.subr.mxu0 0.0
      %2741 = vmatpush2.msra.mxu0 0.0
      %2742 = vmatprep.subr.mxu0 0.0
      %2743 = vmatpush2.msra.mxu0 0.0
      %2744 = vmatprep.subr.mxu0 0.0
      %2745 = vmatpush2.msra.mxu0 0.0
      %2746 = vmatprep.subr.mxu0 0.0
      %2747 = vmatpush2.msra.mxu0 0.0
      %2748 = vmatprep.subr.mxu0 0.0
      %2749 = vmatpush2.msra.mxu0 0.0
      %2750 = vmatprep.subr.mxu0 0.0
      %2751 = vmatpush2.msra.mxu0 0.0
      %2752 = vmatprep.subr.mxu0 0.0
      %2753 = vmatpush2.msra.mxu0 0.0
      %2754 = vmatprep.subr.mxu0 0.0
      %2755 = vmatpush2.msra.mxu0 0.0
      %2756 = vmatprep.subr.mxu0 0.0
      %2757 = vmatpush2.msra.mxu0 0.0
      %2758 = vmatprep.mubr.f32.mxu0 0.0
      %2759 = vmatmul.mubr.f32.gmra.mxu0 %v2689
      %v2760 = vpop.f32.mrf.mxu0
      %v2761 = vadd.f32 0.0, %v2760
      %v2762 = vpop.f32.mrf.mxu0
      %2763 = vmatprep.mubr.f32.mxu0 0.0
      %2764 = vmatmul.mubr.f32.gmra.mxu0 %v2692
      %v2765 = vpop.f32.mrf.mxu0
      %v2766 = vadd.f32 0.0, %v2765
      %v2767 = vpop.f32.mrf.mxu0
      %2768 = vdwg.mxu0
      %2769 = vrot.lane.b32.xlu0 %v506, 64
      %v2770 = vpop.permute.xlu0 %2769
      %2771 = vrot.lane.b32.xlu0 %v511, 64
      %v2772 = vpop.permute.xlu0 %2771
      %v2776 = vsel %vm873, %v2591, 0
      %v2779 = vsel %vm873, %v2592, 0
      %2781 = vmatprep.subr.mxu0 0.0
      %2782 = vmatpush1.msra.mxu0 0.0
      %2783 = vmatprep.subr.mxu0 0.0
      %2784 = vmatpush1.msra.mxu0 0.0
      %2785 = vmatprep.subr.mxu0 0.0
      %2786 = vmatpush1.msra.mxu0 0.0
      %2787 = vmatprep.subr.mxu0 0.0
      %2788 = vmatpush1.msra.mxu0 0.0
      %2789 = vmatprep.subr.mxu0 0.0
      %2790 = vmatpush1.msra.mxu0 0.0
      %2791 = vmatprep.subr.mxu0 0.0
      %2792 = vmatpush1.msra.mxu0 0.0
      %2793 = vmatprep.subr.mxu0 0.0
      %2794 = vmatpush1.msra.mxu0 0.0
      %2795 = vmatprep.subr.mxu0 0.0
      %2796 = vmatpush1.msra.mxu0 0.0
      %2797 = vmatprep.subr.mxu0 0.0
      %2798 = vmatpush1.msra.mxu0 0.0
      %2799 = vmatprep.subr.mxu0 0.0
      %2800 = vmatpush1.msra.mxu0 0.0
      %2801 = vmatprep.subr.mxu0 0.0
      %2802 = vmatpush1.msra.mxu0 0.0
      %2803 = vmatprep.subr.mxu0 0.0
      %2804 = vmatpush1.msra.mxu0 0.0
      %2805 = vmatprep.subr.mxu0 0.0
      %2806 = vmatpush1.msra.mxu0 0.0
      %2807 = vmatprep.subr.mxu0 0.0
      %2808 = vmatpush1.msra.mxu0 0.0
      %2809 = vmatprep.subr.mxu0 0.0
      %2810 = vmatpush1.msra.mxu0 %v2772
      %2811 = vmatprep.subr.mxu0 0.0
      %2812 = vmatpush1.msra.mxu0 %v2770
      %2813 = vmatprep.subr.mxu0 0.0
      %2814 = vmatpush2.msra.mxu0 0.0
      %2815 = vmatprep.subr.mxu0 0.0
      %2816 = vmatpush2.msra.mxu0 0.0
      %2817 = vmatprep.subr.mxu0 0.0
      %2818 = vmatpush2.msra.mxu0 0.0
      %2819 = vmatprep.subr.mxu0 0.0
      %2820 = vmatpush2.msra.mxu0 0.0
      %2821 = vmatprep.subr.mxu0 0.0
      %2822 = vmatpush2.msra.mxu0 0.0
      %2823 = vmatprep.subr.mxu0 0.0
      %2824 = vmatpush2.msra.mxu0 0.0
      %2825 = vmatprep.subr.mxu0 0.0
      %2826 = vmatpush2.msra.mxu0 0.0
      %2827 = vmatprep.subr.mxu0 0.0
      %2828 = vmatpush2.msra.mxu0 0.0
      %2829 = vmatprep.subr.mxu0 0.0
      %2830 = vmatpush2.msra.mxu0 0.0
      %2831 = vmatprep.subr.mxu0 0.0
      %2832 = vmatpush2.msra.mxu0 0.0
      %2833 = vmatprep.subr.mxu0 0.0
      %2834 = vmatpush2.msra.mxu0 0.0
      %2835 = vmatprep.subr.mxu0 0.0
      %2836 = vmatpush2.msra.mxu0 0.0
      %2837 = vmatprep.subr.mxu0 0.0
      %2838 = vmatpush2.msra.mxu0 0.0
      %2839 = vmatprep.subr.mxu0 0.0
      %2840 = vmatpush2.msra.mxu0 0.0
      %2841 = vmatprep.subr.mxu0 0.0
      %2842 = vmatpush2.msra.mxu0 0.0
      %2843 = vmatprep.subr.mxu0 0.0
      %2844 = vmatpush2.msra.mxu0 0.0
      %2845 = vmatprep.mubr.f32.mxu0 0.0
      %2846 = vmatmul.mubr.f32.gmra.mxu0 %v2776
      %v2847 = vpop.f32.mrf.mxu0
      %v2848 = vadd.f32 0.0, %v2847
      %v2849 = vpop.f32.mrf.mxu0
      %2850 = vmatprep.mubr.f32.mxu0 0.0
      %2851 = vmatmul.mubr.f32.gmra.mxu0 %v2779
      %v2852 = vpop.f32.mrf.mxu0
      %v2853 = vadd.f32 0.0, %v2852
      %v2854 = vpop.f32.mrf.mxu0
      %2855 = vdwg.mxu0
      %2856 = vrot.lane.b32.xlu0 %v516, 64
      %v2857 = vpop.permute.xlu0 %2856
      %2858 = vrot.lane.b32.xlu0 %v521, 64
      %v2859 = vpop.permute.xlu0 %2858
      %v2863 = vsel %vm873, %v2593, 0
      %v2866 = vsel %vm873, %v2594, 0
      %2868 = vmatprep.subr.mxu0 0.0
      %2869 = vmatpush1.msra.mxu0 0.0
      %2870 = vmatprep.subr.mxu0 0.0
      %2871 = vmatpush1.msra.mxu0 0.0
      %2872 = vmatprep.subr.mxu0 0.0
      %2873 = vmatpush1.msra.mxu0 0.0
      %2874 = vmatprep.subr.mxu0 0.0
      %2875 = vmatpush1.msra.mxu0 0.0
      %2876 = vmatprep.subr.mxu0 0.0
      %2877 = vmatpush1.msra.mxu0 0.0
      %2878 = vmatprep.subr.mxu0 0.0
      %2879 = vmatpush1.msra.mxu0 0.0
      %2880 = vmatprep.subr.mxu0 0.0
      %2881 = vmatpush1.msra.mxu0 0.0
      %2882 = vmatprep.subr.mxu0 0.0
      %2883 = vmatpush1.msra.mxu0 0.0
      %2884 = vmatprep.subr.mxu0 0.0
      %2885 = vmatpush1.msra.mxu0 0.0
      %2886 = vmatprep.subr.mxu0 0.0
      %2887 = vmatpush1.msra.mxu0 0.0
      %2888 = vmatprep.subr.mxu0 0.0
      %2889 = vmatpush1.msra.mxu0 0.0
      %2890 = vmatprep.subr.mxu0 0.0
      %2891 = vmatpush1.msra.mxu0 0.0
      %2892 = vmatprep.subr.mxu0 0.0
      %2893 = vmatpush1.msra.mxu0 0.0
      %2894 = vmatprep.subr.mxu0 0.0
      %2895 = vmatpush1.msra.mxu0 0.0
      %2896 = vmatprep.subr.mxu0 0.0
      %2897 = vmatpush1.msra.mxu0 %v2859
      %2898 = vmatprep.subr.mxu0 0.0
      %2899 = vmatpush1.msra.mxu0 %v2857
      %2900 = vmatprep.subr.mxu0 0.0
      %2901 = vmatpush2.msra.mxu0 0.0
      %2902 = vmatprep.subr.mxu0 0.0
      %2903 = vmatpush2.msra.mxu0 0.0
      %2904 = vmatprep.subr.mxu0 0.0
      %2905 = vmatpush2.msra.mxu0 0.0
      %2906 = vmatprep.subr.mxu0 0.0
      %2907 = vmatpush2.msra.mxu0 0.0
      %2908 = vmatprep.subr.mxu0 0.0
      %2909 = vmatpush2.msra.mxu0 0.0
      %2910 = vmatprep.subr.mxu0 0.0
      %2911 = vmatpush2.msra.mxu0 0.0
      %2912 = vmatprep.subr.mxu0 0.0
      %2913 = vmatpush2.msra.mxu0 0.0
      %2914 = vmatprep.subr.mxu0 0.0
      %2915 = vmatpush2.msra.mxu0 0.0
      %2916 = vmatprep.subr.mxu0 0.0
      %2917 = vmatpush2.msra.mxu0 0.0
      %2918 = vmatprep.subr.mxu0 0.0
      %2919 = vmatpush2.msra.mxu0 0.0
      %2920 = vmatprep.subr.mxu0 0.0
      %2921 = vmatpush2.msra.mxu0 0.0
      %2922 = vmatprep.subr.mxu0 0.0
      %2923 = vmatpush2.msra.mxu0 0.0
      %2924 = vmatprep.subr.mxu0 0.0
      %2925 = vmatpush2.msra.mxu0 0.0
      %2926 = vmatprep.subr.mxu0 0.0
      %2927 = vmatpush2.msra.mxu0 0.0
      %2928 = vmatprep.subr.mxu0 0.0
      %2929 = vmatpush2.msra.mxu0 0.0
      %2930 = vmatprep.subr.mxu0 0.0
      %2931 = vmatpush2.msra.mxu0 0.0
      %2932 = vmatprep.mubr.f32.mxu0 0.0
      %2933 = vmatmul.mubr.f32.gmra.mxu0 %v2863
      %v2934 = vpop.f32.mrf.mxu0
      %v2935 = vadd.f32 0.0, %v2934
      %v2936 = vpop.f32.mrf.mxu0
      %2937 = vmatprep.mubr.f32.mxu0 0.0
      %2938 = vmatmul.mubr.f32.gmra.mxu0 %v2866
      %v2939 = vpop.f32.mrf.mxu0
      %v2940 = vadd.f32 0.0, %v2939
      %v2941 = vpop.f32.mrf.mxu0
      %2942 = vdwg.mxu0
      %2951 = vrot.lane.b32.xlu0 %v2674, 64
      %v2952 = vpop.permute.xlu0 %2951
      %2953 = vrot.lane.b32.xlu0 %v2679, 64
      %v2954 = vpop.permute.xlu0 %2953
      %2955 = vrot.lane.b32.xlu0 %v2761, 64
      %v2956 = vpop.permute.xlu0 %2955
      %2957 = vrot.lane.b32.xlu0 %v2766, 64
      %v2958 = vpop.permute.xlu0 %2957
      %2959 = vrot.lane.b32.xlu0 %v2848, 64
      %v2960 = vpop.permute.xlu0 %2959
      %2961 = vrot.lane.b32.xlu0 %v2853, 64
      %v2962 = vpop.permute.xlu0 %2961
      %2963 = vrot.lane.b32.xlu0 %v2935, 64
      %v2964 = vpop.permute.xlu0 %2963
      %2965 = vrot.lane.b32.xlu0 %v2940, 64
      %v2966 = vpop.permute.xlu0 %2965
      %vm2975 = vcmask 785920
      %2976 = vst.msk [vmem:[#allocation2] sm:$0xff] %vm2975, %v2952
      %2977 = vst.msk [vmem:[#allocation2 + $0x8] sm:$0xff] %vm2975, %v2954
      %2978 = vst.msk [vmem:[#allocation2 + $0x10] sm:$0xff] %vm2975, %v2956
      %2979 = vst.msk [vmem:[#allocation2 + $0x18] sm:$0xff] %vm2975, %v2958
      %2980 = vst.msk [vmem:[#allocation2 + $0x20] sm:$0xff] %vm2975, %v2960
      %2981 = vst.msk [vmem:[#allocation2 + $0x28] sm:$0xff] %vm2975, %v2962
      %2982 = vst.msk [vmem:[#allocation2 + $0x30] sm:$0xff] %vm2975, %v2964
      %2983 = vst.msk [vmem:[#allocation2 + $0x38] sm:$0xff] %vm2975, %v2966
      %2984 = vrot.lane.b32.xlu0 %v373, 32
      %v2985 = vpop.permute.xlu0 %2984
      %2986 = vrot.lane.b32.xlu0 %v379, 32
      %v2987 = vpop.permute.xlu0 %2986
      %2988 = vrot.lane.b32.xlu0 %v375, 32
      %v2989 = vpop.permute.xlu0 %2988
      %2990 = vrot.lane.b32.xlu0 %v381, 32
      %v2991 = vpop.permute.xlu0 %2990
      %v2992 = vsel %vm524, %v2985, 0
      %v2994 = vsel %vm524, %v2987, 0
      %v2996 = vsel %vm524, %v2989, 0
      %v2998 = vsel %vm524, %v2991, 0
      %3000 = vmatprep.subr.mxu0 0.0
      %3001 = vmatpush1.xpose.msra.mxu0 0.0
      %3002 = vmatprep.subr.mxu0 0.0
      %3003 = vmatpush1.xpose.msra.mxu0 0.0
      %3004 = vmatprep.subr.mxu0 0.0
      %3005 = vmatpush1.xpose.msra.mxu0 0.0
      %3006 = vmatprep.subr.mxu0 0.0
      %3007 = vmatpush1.xpose.msra.mxu0 0.0
      %3008 = vmatprep.subr.mxu0 0.0
      %3009 = vmatpush1.xpose.msra.mxu0 0.0
      %3010 = vmatprep.subr.mxu0 0.0
      %3011 = vmatpush1.xpose.msra.mxu0 0.0
      %3012 = vmatprep.subr.mxu0 0.0
      %3013 = vmatpush1.xpose.msra.mxu0 0.0
      %3014 = vmatprep.subr.mxu0 0.0
      %3015 = vmatpush1.xpose.msra.mxu0 0.0
      %3016 = vmatprep.subr.mxu0 0.0
      %3017 = vmatpush1.xpose.msra.mxu0 0.0
      %3018 = vmatprep.subr.mxu0 0.0
      %3019 = vmatpush1.xpose.msra.mxu0 0.0
      %3020 = vmatprep.subr.mxu0 0.0
      %3021 = vmatpush1.xpose.msra.mxu0 0.0
      %3022 = vmatprep.subr.mxu0 0.0
      %3023 = vmatpush1.xpose.msra.mxu0 0.0
      %3024 = vmatprep.subr.mxu0 0.0
      %3025 = vmatpush1.xpose.msra.mxu0 0.0
      %3026 = vmatprep.subr.mxu0 0.0
      %3027 = vmatpush1.xpose.msra.mxu0 0.0
      %3028 = vmatprep.subr.mxu0 0.0
      %3029 = vmatpush1.xpose.msra.mxu0 %v2998
      %3030 = vmatprep.subr.mxu0 0.0
      %3031 = vmatpush1.xpose.msra.mxu0 %v2996
      %3032 = vmatprep.subr.mxu0 0.0
      %3033 = vmatpush2.xpose.msra.mxu0 0.0
      %3034 = vmatprep.subr.mxu0 0.0
      %3035 = vmatpush2.xpose.msra.mxu0 0.0
      %3036 = vmatprep.subr.mxu0 0.0
      %3037 = vmatpush2.xpose.msra.mxu0 0.0
      %3038 = vmatprep.subr.mxu0 0.0
      %3039 = vmatpush2.xpose.msra.mxu0 0.0
      %3040 = vmatprep.subr.mxu0 0.0
      %3041 = vmatpush2.xpose.msra.mxu0 0.0
      %3042 = vmatprep.subr.mxu0 0.0
      %3043 = vmatpush2.xpose.msra.mxu0 0.0
      %3044 = vmatprep.subr.mxu0 0.0
      %3045 = vmatpush2.xpose.msra.mxu0 0.0
      %3046 = vmatprep.subr.mxu0 0.0
      %3047 = vmatpush2.xpose.msra.mxu0 0.0
      %3048 = vmatprep.subr.mxu0 0.0
      %3049 = vmatpush2.xpose.msra.mxu0 0.0
      %3050 = vmatprep.subr.mxu0 0.0
      %3051 = vmatpush2.xpose.msra.mxu0 0.0
      %3052 = vmatprep.subr.mxu0 0.0
      %3053 = vmatpush2.xpose.msra.mxu0 0.0
      %3054 = vmatprep.subr.mxu0 0.0
      %3055 = vmatpush2.xpose.msra.mxu0 0.0
      %3056 = vmatprep.subr.mxu0 0.0
      %3057 = vmatpush2.xpose.msra.mxu0 0.0
      %3058 = vmatprep.subr.mxu0 0.0
      %3059 = vmatpush2.xpose.msra.mxu0 0.0
      %3060 = vmatprep.subr.mxu0 0.0
      %3061 = vmatpush2.xpose.msra.mxu0 0.0
      %3062 = vmatprep.subr.mxu0 0.0
      %3063 = vmatpush2.xpose.msra.mxu0 0.0
      %3064 = vmatprep.mubr.f32.mxu0 0.0
      %3065 = vmatmul.mubr.f32.gmra.mxu0 %v2992
      %v3066 = vpop.f32.mrf.mxu0
      %v3067 = vadd.f32 0.0, %v3066
      %v3068 = vpop.f32.mrf.mxu0
      %3069 = vmatprep.mubr.f32.mxu0 0.0
      %3070 = vmatmul.mubr.f32.gmra.mxu0 %v2994
      %v3071 = vpop.f32.mrf.mxu0
      %v3072 = vadd.f32 0.0, %v3071
      %v3073 = vpop.f32.mrf.mxu0
      %3074 = vdwg.mxu0
      %3075 = vrot.lane.b32.xlu0 %v385, 32
      %v3076 = vpop.permute.xlu0 %3075
      %3077 = vrot.lane.b32.xlu0 %v391, 32
      %v3078 = vpop.permute.xlu0 %3077
      %3079 = vrot.lane.b32.xlu0 %v387, 32
      %v3080 = vpop.permute.xlu0 %3079
      %3081 = vrot.lane.b32.xlu0 %v393, 32
      %v3082 = vpop.permute.xlu0 %3081
      %v3083 = vsel %vm524, %v3076, 0
      %v3085 = vsel %vm524, %v3078, 0
      %v3087 = vsel %vm524, %v3080, 0
      %v3089 = vsel %vm524, %v3082, 0
      %3091 = vmatprep.subr.mxu0 0.0
      %3092 = vmatpush1.xpose.msra.mxu0 0.0
      %3093 = vmatprep.subr.mxu0 0.0
      %3094 = vmatpush1.xpose.msra.mxu0 0.0
      %3095 = vmatprep.subr.mxu0 0.0
      %3096 = vmatpush1.xpose.msra.mxu0 0.0
      %3097 = vmatprep.subr.mxu0 0.0
      %3098 = vmatpush1.xpose.msra.mxu0 0.0
      %3099 = vmatprep.subr.mxu0 0.0
      %3100 = vmatpush1.xpose.msra.mxu0 0.0
      %3101 = vmatprep.subr.mxu0 0.0
      %3102 = vmatpush1.xpose.msra.mxu0 0.0
      %3103 = vmatprep.subr.mxu0 0.0
      %3104 = vmatpush1.xpose.msra.mxu0 0.0
      %3105 = vmatprep.subr.mxu0 0.0
      %3106 = vmatpush1.xpose.msra.mxu0 0.0
      %3107 = vmatprep.subr.mxu0 0.0
      %3108 = vmatpush1.xpose.msra.mxu0 0.0
      %3109 = vmatprep.subr.mxu0 0.0
      %3110 = vmatpush1.xpose.msra.mxu0 0.0
      %3111 = vmatprep.subr.mxu0 0.0
      %3112 = vmatpush1.xpose.msra.mxu0 0.0
      %3113 = vmatprep.subr.mxu0 0.0
      %3114 = vmatpush1.xpose.msra.mxu0 0.0
      %3115 = vmatprep.subr.mxu0 0.0
      %3116 = vmatpush1.xpose.msra.mxu0 0.0
      %3117 = vmatprep.subr.mxu0 0.0
      %3118 = vmatpush1.xpose.msra.mxu0 0.0
      %3119 = vmatprep.subr.mxu0 0.0
      %3120 = vmatpush1.xpose.msra.mxu0 %v3089
      %3121 = vmatprep.subr.mxu0 0.0
      %3122 = vmatpush1.xpose.msra.mxu0 %v3087
      %3123 = vmatprep.subr.mxu0 0.0
      %3124 = vmatpush2.xpose.msra.mxu0 0.0
      %3125 = vmatprep.subr.mxu0 0.0
      %3126 = vmatpush2.xpose.msra.mxu0 0.0
      %3127 = vmatprep.subr.mxu0 0.0
      %3128 = vmatpush2.xpose.msra.mxu0 0.0
      %3129 = vmatprep.subr.mxu0 0.0
      %3130 = vmatpush2.xpose.msra.mxu0 0.0
      %3131 = vmatprep.subr.mxu0 0.0
      %3132 = vmatpush2.xpose.msra.mxu0 0.0
      %3133 = vmatprep.subr.mxu0 0.0
      %3134 = vmatpush2.xpose.msra.mxu0 0.0
      %3135 = vmatprep.subr.mxu0 0.0
      %3136 = vmatpush2.xpose.msra.mxu0 0.0
      %3137 = vmatprep.subr.mxu0 0.0
      %3138 = vmatpush2.xpose.msra.mxu0 0.0
      %3139 = vmatprep.subr.mxu0 0.0
      %3140 = vmatpush2.xpose.msra.mxu0 0.0
      %3141 = vmatprep.subr.mxu0 0.0
      %3142 = vmatpush2.xpose.msra.mxu0 0.0
      %3143 = vmatprep.subr.mxu0 0.0
      %3144 = vmatpush2.xpose.msra.mxu0 0.0
      %3145 = vmatprep.subr.mxu0 0.0
      %3146 = vmatpush2.xpose.msra.mxu0 0.0
      %3147 = vmatprep.subr.mxu0 0.0
      %3148 = vmatpush2.xpose.msra.mxu0 0.0
      %3149 = vmatprep.subr.mxu0 0.0
      %3150 = vmatpush2.xpose.msra.mxu0 0.0
      %3151 = vmatprep.subr.mxu0 0.0
      %3152 = vmatpush2.xpose.msra.mxu0 0.0
      %3153 = vmatprep.subr.mxu0 0.0
      %3154 = vmatpush2.xpose.msra.mxu0 0.0
      %3155 = vmatprep.mubr.f32.mxu0 0.0
      %3156 = vmatmul.mubr.f32.gmra.mxu0 %v3083
      %v3157 = vpop.f32.mrf.mxu0
      %v3158 = vadd.f32 0.0, %v3157
      %v3159 = vpop.f32.mrf.mxu0
      %3160 = vmatprep.mubr.f32.mxu0 0.0
      %3161 = vmatmul.mubr.f32.gmra.mxu0 %v3085
      %v3162 = vpop.f32.mrf.mxu0
      %v3163 = vadd.f32 0.0, %v3162
      %v3164 = vpop.f32.mrf.mxu0
      %3165 = vdwg.mxu0
      %3166 = vrot.lane.b32.xlu0 %v397, 32
      %v3167 = vpop.permute.xlu0 %3166
      %3168 = vrot.lane.b32.xlu0 %v403, 32
      %v3169 = vpop.permute.xlu0 %3168
      %3170 = vrot.lane.b32.xlu0 %v399, 32
      %v3171 = vpop.permute.xlu0 %3170
      %3172 = vrot.lane.b32.xlu0 %v405, 32
      %v3173 = vpop.permute.xlu0 %3172
      %v3174 = vsel %vm524, %v3167, 0
      %v3176 = vsel %vm524, %v3169, 0
      %v3178 = vsel %vm524, %v3171, 0
      %v3180 = vsel %vm524, %v3173, 0
      %3182 = vmatprep.subr.mxu0 0.0
      %3183 = vmatpush1.xpose.msra.mxu0 0.0
      %3184 = vmatprep.subr.mxu0 0.0
      %3185 = vmatpush1.xpose.msra.mxu0 0.0
      %3186 = vmatprep.subr.mxu0 0.0
      %3187 = vmatpush1.xpose.msra.mxu0 0.0
      %3188 = vmatprep.subr.mxu0 0.0
      %3189 = vmatpush1.xpose.msra.mxu0 0.0
      %3190 = vmatprep.subr.mxu0 0.0
      %3191 = vmatpush1.xpose.msra.mxu0 0.0
      %3192 = vmatprep.subr.mxu0 0.0
      %3193 = vmatpush1.xpose.msra.mxu0 0.0
      %3194 = vmatprep.subr.mxu0 0.0
      %3195 = vmatpush1.xpose.msra.mxu0 0.0
      %3196 = vmatprep.subr.mxu0 0.0
      %3197 = vmatpush1.xpose.msra.mxu0 0.0
      %3198 = vmatprep.subr.mxu0 0.0
      %3199 = vmatpush1.xpose.msra.mxu0 0.0
      %3200 = vmatprep.subr.mxu0 0.0
      %3201 = vmatpush1.xpose.msra.mxu0 0.0
      %3202 = vmatprep.subr.mxu0 0.0
      %3203 = vmatpush1.xpose.msra.mxu0 0.0
      %3204 = vmatprep.subr.mxu0 0.0
      %3205 = vmatpush1.xpose.msra.mxu0 0.0
      %3206 = vmatprep.subr.mxu0 0.0
      %3207 = vmatpush1.xpose.msra.mxu0 0.0
      %3208 = vmatprep.subr.mxu0 0.0
      %3209 = vmatpush1.xpose.msra.mxu0 0.0
      %3210 = vmatprep.subr.mxu0 0.0
      %3211 = vmatpush1.xpose.msra.mxu0 %v3180
      %3212 = vmatprep.subr.mxu0 0.0
      %3213 = vmatpush1.xpose.msra.mxu0 %v3178
      %3214 = vmatprep.subr.mxu0 0.0
      %3215 = vmatpush2.xpose.msra.mxu0 0.0
      %3216 = vmatprep.subr.mxu0 0.0
      %3217 = vmatpush2.xpose.msra.mxu0 0.0
      %3218 = vmatprep.subr.mxu0 0.0
      %3219 = vmatpush2.xpose.msra.mxu0 0.0
      %3220 = vmatprep.subr.mxu0 0.0
      %3221 = vmatpush2.xpose.msra.mxu0 0.0
      %3222 = vmatprep.subr.mxu0 0.0
      %3223 = vmatpush2.xpose.msra.mxu0 0.0
      %3224 = vmatprep.subr.mxu0 0.0
      %3225 = vmatpush2.xpose.msra.mxu0 0.0
      %3226 = vmatprep.subr.mxu0 0.0
      %3227 = vmatpush2.xpose.msra.mxu0 0.0
      %3228 = vmatprep.subr.mxu0 0.0
      %3229 = vmatpush2.xpose.msra.mxu0 0.0
      %3230 = vmatprep.subr.mxu0 0.0
      %3231 = vmatpush2.xpose.msra.mxu0 0.0
      %3232 = vmatprep.subr.mxu0 0.0
      %3233 = vmatpush2.xpose.msra.mxu0 0.0
      %3234 = vmatprep.subr.mxu0 0.0
      %3235 = vmatpush2.xpose.msra.mxu0 0.0
      %3236 = vmatprep.subr.mxu0 0.0
      %3237 = vmatpush2.xpose.msra.mxu0 0.0
      %3238 = vmatprep.subr.mxu0 0.0
      %3239 = vmatpush2.xpose.msra.mxu0 0.0
      %3240 = vmatprep.subr.mxu0 0.0
      %3241 = vmatpush2.xpose.msra.mxu0 0.0
      %3242 = vmatprep.subr.mxu0 0.0
      %3243 = vmatpush2.xpose.msra.mxu0 0.0
      %3244 = vmatprep.subr.mxu0 0.0
      %3245 = vmatpush2.xpose.msra.mxu0 0.0
      %3246 = vmatprep.mubr.f32.mxu0 0.0
      %3247 = vmatmul.mubr.f32.gmra.mxu0 %v3174
      %v3248 = vpop.f32.mrf.mxu0
      %v3249 = vadd.f32 0.0, %v3248
      %v3250 = vpop.f32.mrf.mxu0
      %3251 = vmatprep.mubr.f32.mxu0 0.0
      %3252 = vmatmul.mubr.f32.gmra.mxu0 %v3176
      %v3253 = vpop.f32.mrf.mxu0
      %v3254 = vadd.f32 0.0, %v3253
      %v3255 = vpop.f32.mrf.mxu0
      %3256 = vdwg.mxu0
      %3257 = vrot.lane.b32.xlu0 %v409, 32
      %v3258 = vpop.permute.xlu0 %3257
      %3259 = vrot.lane.b32.xlu0 %v415, 32
      %v3260 = vpop.permute.xlu0 %3259
      %3261 = vrot.lane.b32.xlu0 %v411, 32
      %v3262 = vpop.permute.xlu0 %3261
      %3263 = vrot.lane.b32.xlu0 %v417, 32
      %v3264 = vpop.permute.xlu0 %3263
      %v3265 = vsel %vm524, %v3258, 0
      %v3267 = vsel %vm524, %v3260, 0
      %v3269 = vsel %vm524, %v3262, 0
      %v3271 = vsel %vm524, %v3264, 0
      %3273 = vmatprep.subr.mxu0 0.0
      %3274 = vmatpush1.xpose.msra.mxu0 0.0
      %3275 = vmatprep.subr.mxu0 0.0
      %3276 = vmatpush1.xpose.msra.mxu0 0.0
      %3277 = vmatprep.subr.mxu0 0.0
      %3278 = vmatpush1.xpose.msra.mxu0 0.0
      %3279 = vmatprep.subr.mxu0 0.0
      %3280 = vmatpush1.xpose.msra.mxu0 0.0
      %3281 = vmatprep.subr.mxu0 0.0
      %3282 = vmatpush1.xpose.msra.mxu0 0.0
      %3283 = vmatprep.subr.mxu0 0.0
      %3284 = vmatpush1.xpose.msra.mxu0 0.0
      %3285 = vmatprep.subr.mxu0 0.0
      %3286 = vmatpush1.xpose.msra.mxu0 0.0
      %3287 = vmatprep.subr.mxu0 0.0
      %3288 = vmatpush1.xpose.msra.mxu0 0.0
      %3289 = vmatprep.subr.mxu0 0.0
      %3290 = vmatpush1.xpose.msra.mxu0 0.0
      %3291 = vmatprep.subr.mxu0 0.0
      %3292 = vmatpush1.xpose.msra.mxu0 0.0
      %3293 = vmatprep.subr.mxu0 0.0
      %3294 = vmatpush1.xpose.msra.mxu0 0.0
      %3295 = vmatprep.subr.mxu0 0.0
      %3296 = vmatpush1.xpose.msra.mxu0 0.0
      %3297 = vmatprep.subr.mxu0 0.0
      %3298 = vmatpush1.xpose.msra.mxu0 0.0
      %3299 = vmatprep.subr.mxu0 0.0
      %3300 = vmatpush1.xpose.msra.mxu0 0.0
      %3301 = vmatprep.subr.mxu0 0.0
      %3302 = vmatpush1.xpose.msra.mxu0 %v3271
      %3303 = vmatprep.subr.mxu0 0.0
      %3304 = vmatpush1.xpose.msra.mxu0 %v3269
      %3305 = vmatprep.subr.mxu0 0.0
      %3306 = vmatpush2.xpose.msra.mxu0 0.0
      %3307 = vmatprep.subr.mxu0 0.0
      %3308 = vmatpush2.xpose.msra.mxu0 0.0
      %3309 = vmatprep.subr.mxu0 0.0
      %3310 = vmatpush2.xpose.msra.mxu0 0.0
      %3311 = vmatprep.subr.mxu0 0.0
      %3312 = vmatpush2.xpose.msra.mxu0 0.0
      %3313 = vmatprep.subr.mxu0 0.0
      %3314 = vmatpush2.xpose.msra.mxu0 0.0
      %3315 = vmatprep.subr.mxu0 0.0
      %3316 = vmatpush2.xpose.msra.mxu0 0.0
      %3317 = vmatprep.subr.mxu0 0.0
      %3318 = vmatpush2.xpose.msra.mxu0 0.0
      %3319 = vmatprep.subr.mxu0 0.0
      %3320 = vmatpush2.xpose.msra.mxu0 0.0
      %3321 = vmatprep.subr.mxu0 0.0
      %3322 = vmatpush2.xpose.msra.mxu0 0.0
      %3323 = vmatprep.subr.mxu0 0.0
      %3324 = vmatpush2.xpose.msra.mxu0 0.0
      %3325 = vmatprep.subr.mxu0 0.0
      %3326 = vmatpush2.xpose.msra.mxu0 0.0
      %3327 = vmatprep.subr.mxu0 0.0
      %3328 = vmatpush2.xpose.msra.mxu0 0.0
      %3329 = vmatprep.subr.mxu0 0.0
      %3330 = vmatpush2.xpose.msra.mxu0 0.0
      %3331 = vmatprep.subr.mxu0 0.0
      %3332 = vmatpush2.xpose.msra.mxu0 0.0
      %3333 = vmatprep.subr.mxu0 0.0
      %3334 = vmatpush2.xpose.msra.mxu0 0.0
      %3335 = vmatprep.subr.mxu0 0.0
      %3336 = vmatpush2.xpose.msra.mxu0 0.0
      %3337 = vmatprep.mubr.f32.mxu0 0.0
      %3338 = vmatmul.mubr.f32.gmra.mxu0 %v3265
      %v3339 = vpop.f32.mrf.mxu0
      %v3340 = vadd.f32 0.0, %v3339
      %v3341 = vpop.f32.mrf.mxu0
      %3342 = vmatprep.mubr.f32.mxu0 0.0
      %3343 = vmatmul.mubr.f32.gmra.mxu0 %v3267
      %v3344 = vpop.f32.mrf.mxu0
      %v3345 = vadd.f32 0.0, %v3344
      %v3346 = vpop.f32.mrf.mxu0
      %3347 = vdwg.mxu0
      %v3348 = vsel %vm873, %v3067, -inf
      %3349 = vmax.xlane.f32.xlu0 %v3348
      %v3350 = vpop.xlane.xlu0 %3349
      %v3351 = vsel %vm873, %v3072, -inf
      %3352 = vmax.xlane.f32.xlu0 %v3351
      %v3353 = vpop.xlane.xlu0 %3352
      %v3354 = vsel %vm873, %v3158, -inf
      %3355 = vmax.xlane.f32.xlu0 %v3354
      %v3356 = vpop.xlane.xlu0 %3355
      %v3357 = vsel %vm873, %v3163, -inf
      %3358 = vmax.xlane.f32.xlu0 %v3357
      %v3359 = vpop.xlane.xlu0 %3358
      %v3360 = vsel %vm873, %v3249, -inf
      %3361 = vmax.xlane.f32.xlu0 %v3360
      %v3362 = vpop.xlane.xlu0 %3361
      %v3363 = vsel %vm873, %v3254, -inf
      %3364 = vmax.xlane.f32.xlu0 %v3363
      %v3365 = vpop.xlane.xlu0 %3364
      %v3366 = vsel %vm873, %v3340, -inf
      %3367 = vmax.xlane.f32.xlu0 %v3366
      %v3368 = vpop.xlane.xlu0 %3367
      %v3369 = vsel %vm873, %v3345, -inf
      %3370 = vmax.xlane.f32.xlu0 %v3369
      %v3371 = vpop.xlane.xlu0 %3370
      %v3372 = vsub.f32 %v3067, %v3350
      %v3373 = vsub.f32 %v3072, %v3353
      %v3374 = vsub.f32 %v3158, %v3356
      %v3375 = vsub.f32 %v3163, %v3359
      %v3376 = vsub.f32 %v3249, %v3362
      %v3377 = vsub.f32 %v3254, %v3365
      %v3378 = vsub.f32 %v3340, %v3368
      %v3379 = vsub.f32 %v3345, %v3371
      %v3380 = vmul.f32 %v3372, 1.442695
      %v3381 = vpow.pop %v3380
      %v3382 = vmul.f32 %v3373, 1.442695
      %v3383 = vpow.pop %v3382
      %v3384 = vmul.f32 %v3374, 1.442695
      %v3385 = vpow.pop %v3384
      %v3386 = vmul.f32 %v3375, 1.442695
      %v3387 = vpow.pop %v3386
      %v3388 = vmul.f32 %v3376, 1.442695
      %v3389 = vpow.pop %v3388
      %v3390 = vmul.f32 %v3377, 1.442695
      %v3391 = vpow.pop %v3390
      %v3392 = vmul.f32 %v3378, 1.442695
      %v3393 = vpow.pop %v3392
      %v3394 = vmul.f32 %v3379, 1.442695
      %v3395 = vpow.pop %v3394
      %v3396 = vsel %vm873, %v3381, 0.0
      %3397 = vadd.xlane.f32.xlu0 %v3396
      %v3398 = vpop.xlane.xlu0 %3397
      %v3399 = vsel %vm873, %v3383, 0.0
      %3400 = vadd.xlane.f32.xlu0 %v3399
      %v3401 = vpop.xlane.xlu0 %3400
      %v3402 = vsel %vm873, %v3385, 0.0
      %3403 = vadd.xlane.f32.xlu0 %v3402
      %v3404 = vpop.xlane.xlu0 %3403
      %v3405 = vsel %vm873, %v3387, 0.0
      %3406 = vadd.xlane.f32.xlu0 %v3405
      %v3407 = vpop.xlane.xlu0 %3406
      %v3408 = vsel %vm873, %v3389, 0.0
      %3409 = vadd.xlane.f32.xlu0 %v3408
      %v3410 = vpop.xlane.xlu0 %3409
      %v3411 = vsel %vm873, %v3391, 0.0
      %3412 = vadd.xlane.f32.xlu0 %v3411
      %v3413 = vpop.xlane.xlu0 %3412
      %v3414 = vsel %vm873, %v3393, 0.0
      %3415 = vadd.xlane.f32.xlu0 %v3414
      %v3416 = vpop.xlane.xlu0 %3415
      %v3417 = vsel %vm873, %v3395, 0.0
      %3418 = vadd.xlane.f32.xlu0 %v3417
      %v3419 = vpop.xlane.xlu0 %3418
      %v3420 = vrcp.pop %v3398
      %v3421 = vrcp.pop %v3401
      %v3422 = vrcp.pop %v3404
      %v3423 = vrcp.pop %v3407
      %v3424 = vrcp.pop %v3410
      %v3425 = vrcp.pop %v3413
      %v3426 = vrcp.pop %v3416
      %v3427 = vrcp.pop %v3419
      %v3428 = vmul.f32 %v3381, %v3420
      %v3429 = vmul.f32 %v3383, %v3421
      %v3430 = vmul.f32 %v3385, %v3422
      %v3431 = vmul.f32 %v3387, %v3423
      %v3432 = vmul.f32 %v3389, %v3424
      %v3433 = vmul.f32 %v3391, %v3425
      %v3434 = vmul.f32 %v3393, %v3426
      %v3435 = vmul.f32 %v3395, %v3427
      %3436 = vrot.lane.b32.xlu0 %v486, 32
      %v3437 = vpop.permute.xlu0 %3436
      %3438 = vrot.lane.b32.xlu0 %v491, 32
      %v3439 = vpop.permute.xlu0 %3438
      %v3443 = vsel %vm873, %v3428, 0
      %v3446 = vsel %vm873, %v3429, 0
      %3448 = vmatprep.subr.mxu0 0.0
      %3449 = vmatpush1.msra.mxu0 0.0
      %3450 = vmatprep.subr.mxu0 0.0
      %3451 = vmatpush1.msra.mxu0 0.0
      %3452 = vmatprep.subr.mxu0 0.0
      %3453 = vmatpush1.msra.mxu0 0.0
      %3454 = vmatprep.subr.mxu0 0.0
      %3455 = vmatpush1.msra.mxu0 0.0
      %3456 = vmatprep.subr.mxu0 0.0
      %3457 = vmatpush1.msra.mxu0 0.0
      %3458 = vmatprep.subr.mxu0 0.0
      %3459 = vmatpush1.msra.mxu0 0.0
      %3460 = vmatprep.subr.mxu0 0.0
      %3461 = vmatpush1.msra.mxu0 0.0
      %3462 = vmatprep.subr.mxu0 0.0
      %3463 = vmatpush1.msra.mxu0 0.0
      %3464 = vmatprep.subr.mxu0 0.0
      %3465 = vmatpush1.msra.mxu0 0.0
      %3466 = vmatprep.subr.mxu0 0.0
      %3467 = vmatpush1.msra.mxu0 0.0
      %3468 = vmatprep.subr.mxu0 0.0
      %3469 = vmatpush1.msra.mxu0 0.0
      %3470 = vmatprep.subr.mxu0 0.0
      %3471 = vmatpush1.msra.mxu0 0.0
      %3472 = vmatprep.subr.mxu0 0.0
      %3473 = vmatpush1.msra.mxu0 0.0
      %3474 = vmatprep.subr.mxu0 0.0
      %3475 = vmatpush1.msra.mxu0 0.0
      %3476 = vmatprep.subr.mxu0 0.0
      %3477 = vmatpush1.msra.mxu0 %v3439
      %3478 = vmatprep.subr.mxu0 0.0
      %3479 = vmatpush1.msra.mxu0 %v3437
      %3480 = vmatprep.subr.mxu0 0.0
      %3481 = vmatpush2.msra.mxu0 0.0
      %3482 = vmatprep.subr.mxu0 0.0
      %3483 = vmatpush2.msra.mxu0 0.0
      %3484 = vmatprep.subr.mxu0 0.0
      %3485 = vmatpush2.msra.mxu0 0.0
      %3486 = vmatprep.subr.mxu0 0.0
      %3487 = vmatpush2.msra.mxu0 0.0
      %3488 = vmatprep.subr.mxu0 0.0
      %3489 = vmatpush2.msra.mxu0 0.0
      %3490 = vmatprep.subr.mxu0 0.0
      %3491 = vmatpush2.msra.mxu0 0.0
      %3492 = vmatprep.subr.mxu0 0.0
      %3493 = vmatpush2.msra.mxu0 0.0
      %3494 = vmatprep.subr.mxu0 0.0
      %3495 = vmatpush2.msra.mxu0 0.0
      %3496 = vmatprep.subr.mxu0 0.0
      %3497 = vmatpush2.msra.mxu0 0.0
      %3498 = vmatprep.subr.mxu0 0.0
      %3499 = vmatpush2.msra.mxu0 0.0
      %3500 = vmatprep.subr.mxu0 0.0
      %3501 = vmatpush2.msra.mxu0 0.0
      %3502 = vmatprep.subr.mxu0 0.0
      %3503 = vmatpush2.msra.mxu0 0.0
      %3504 = vmatprep.subr.mxu0 0.0
      %3505 = vmatpush2.msra.mxu0 0.0
      %3506 = vmatprep.subr.mxu0 0.0
      %3507 = vmatpush2.msra.mxu0 0.0
      %3508 = vmatprep.subr.mxu0 0.0
      %3509 = vmatpush2.msra.mxu0 0.0
      %3510 = vmatprep.subr.mxu0 0.0
      %3511 = vmatpush2.msra.mxu0 0.0
      %3512 = vmatprep.mubr.f32.mxu0 0.0
      %3513 = vmatmul.mubr.f32.gmra.mxu0 %v3443
      %v3514 = vpop.f32.mrf.mxu0
      %v3515 = vadd.f32 0.0, %v3514
      %v3516 = vpop.f32.mrf.mxu0
      %3517 = vmatprep.mubr.f32.mxu0 0.0
      %3518 = vmatmul.mubr.f32.gmra.mxu0 %v3446
      %v3519 = vpop.f32.mrf.mxu0
      %v3520 = vadd.f32 0.0, %v3519
      %v3521 = vpop.f32.mrf.mxu0
      %3522 = vdwg.mxu0
      %3523 = vrot.lane.b32.xlu0 %v496, 32
      %v3524 = vpop.permute.xlu0 %3523
      %3525 = vrot.lane.b32.xlu0 %v501, 32
      %v3526 = vpop.permute.xlu0 %3525
      %v3530 = vsel %vm873, %v3430, 0
      %v3533 = vsel %vm873, %v3431, 0
      %3535 = vmatprep.subr.mxu0 0.0
      %3536 = vmatpush1.msra.mxu0 0.0
      %3537 = vmatprep.subr.mxu0 0.0
      %3538 = vmatpush1.msra.mxu0 0.0
      %3539 = vmatprep.subr.mxu0 0.0
      %3540 = vmatpush1.msra.mxu0 0.0
      %3541 = vmatprep.subr.mxu0 0.0
      %3542 = vmatpush1.msra.mxu0 0.0
      %3543 = vmatprep.subr.mxu0 0.0
      %3544 = vmatpush1.msra.mxu0 0.0
      %3545 = vmatprep.subr.mxu0 0.0
      %3546 = vmatpush1.msra.mxu0 0.0
      %3547 = vmatprep.subr.mxu0 0.0
      %3548 = vmatpush1.msra.mxu0 0.0
      %3549 = vmatprep.subr.mxu0 0.0
      %3550 = vmatpush1.msra.mxu0 0.0
      %3551 = vmatprep.subr.mxu0 0.0
      %3552 = vmatpush1.msra.mxu0 0.0
      %3553 = vmatprep.subr.mxu0 0.0
      %3554 = vmatpush1.msra.mxu0 0.0
      %3555 = vmatprep.subr.mxu0 0.0
      %3556 = vmatpush1.msra.mxu0 0.0
      %3557 = vmatprep.subr.mxu0 0.0
      %3558 = vmatpush1.msra.mxu0 0.0
      %3559 = vmatprep.subr.mxu0 0.0
      %3560 = vmatpush1.msra.mxu0 0.0
      %3561 = vmatprep.subr.mxu0 0.0
      %3562 = vmatpush1.msra.mxu0 0.0
      %3563 = vmatprep.subr.mxu0 0.0
      %3564 = vmatpush1.msra.mxu0 %v3526
      %3565 = vmatprep.subr.mxu0 0.0
      %3566 = vmatpush1.msra.mxu0 %v3524
      %3567 = vmatprep.subr.mxu0 0.0
      %3568 = vmatpush2.msra.mxu0 0.0
      %3569 = vmatprep.subr.mxu0 0.0
      %3570 = vmatpush2.msra.mxu0 0.0
      %3571 = vmatprep.subr.mxu0 0.0
      %3572 = vmatpush2.msra.mxu0 0.0
      %3573 = vmatprep.subr.mxu0 0.0
      %3574 = vmatpush2.msra.mxu0 0.0
      %3575 = vmatprep.subr.mxu0 0.0
      %3576 = vmatpush2.msra.mxu0 0.0
      %3577 = vmatprep.subr.mxu0 0.0
      %3578 = vmatpush2.msra.mxu0 0.0
      %3579 = vmatprep.subr.mxu0 0.0
      %3580 = vmatpush2.msra.mxu0 0.0
      %3581 = vmatprep.subr.mxu0 0.0
      %3582 = vmatpush2.msra.mxu0 0.0
      %3583 = vmatprep.subr.mxu0 0.0
      %3584 = vmatpush2.msra.mxu0 0.0
      %3585 = vmatprep.subr.mxu0 0.0
      %3586 = vmatpush2.msra.mxu0 0.0
      %3587 = vmatprep.subr.mxu0 0.0
      %3588 = vmatpush2.msra.mxu0 0.0
      %3589 = vmatprep.subr.mxu0 0.0
      %3590 = vmatpush2.msra.mxu0 0.0
      %3591 = vmatprep.subr.mxu0 0.0
      %3592 = vmatpush2.msra.mxu0 0.0
      %3593 = vmatprep.subr.mxu0 0.0
      %3594 = vmatpush2.msra.mxu0 0.0
      %3595 = vmatprep.subr.mxu0 0.0
      %3596 = vmatpush2.msra.mxu0 0.0
      %3597 = vmatprep.subr.mxu0 0.0
      %3598 = vmatpush2.msra.mxu0 0.0
      %3599 = vmatprep.mubr.f32.mxu0 0.0
      %3600 = vmatmul.mubr.f32.gmra.mxu0 %v3530
      %v3601 = vpop.f32.mrf.mxu0
      %v3602 = vadd.f32 0.0, %v3601
      %v3603 = vpop.f32.mrf.mxu0
      %3604 = vmatprep.mubr.f32.mxu0 0.0
      %3605 = vmatmul.mubr.f32.gmra.mxu0 %v3533
      %v3606 = vpop.f32.mrf.mxu0
      %v3607 = vadd.f32 0.0, %v3606
      %v3608 = vpop.f32.mrf.mxu0
      %3609 = vdwg.mxu0
      %3610 = vrot.lane.b32.xlu0 %v506, 32
      %v3611 = vpop.permute.xlu0 %3610
      %3612 = vrot.lane.b32.xlu0 %v511, 32
      %v3613 = vpop.permute.xlu0 %3612
      %v3617 = vsel %vm873, %v3432, 0
      %v3620 = vsel %vm873, %v3433, 0
      %3622 = vmatprep.subr.mxu0 0.0
      %3623 = vmatpush1.msra.mxu0 0.0
      %3624 = vmatprep.subr.mxu0 0.0
      %3625 = vmatpush1.msra.mxu0 0.0
      %3626 = vmatprep.subr.mxu0 0.0
      %3627 = vmatpush1.msra.mxu0 0.0
      %3628 = vmatprep.subr.mxu0 0.0
      %3629 = vmatpush1.msra.mxu0 0.0
      %3630 = vmatprep.subr.mxu0 0.0
      %3631 = vmatpush1.msra.mxu0 0.0
      %3632 = vmatprep.subr.mxu0 0.0
      %3633 = vmatpush1.msra.mxu0 0.0
      %3634 = vmatprep.subr.mxu0 0.0
      %3635 = vmatpush1.msra.mxu0 0.0
      %3636 = vmatprep.subr.mxu0 0.0
      %3637 = vmatpush1.msra.mxu0 0.0
      %3638 = vmatprep.subr.mxu0 0.0
      %3639 = vmatpush1.msra.mxu0 0.0
      %3640 = vmatprep.subr.mxu0 0.0
      %3641 = vmatpush1.msra.mxu0 0.0
      %3642 = vmatprep.subr.mxu0 0.0
      %3643 = vmatpush1.msra.mxu0 0.0
      %3644 = vmatprep.subr.mxu0 0.0
      %3645 = vmatpush1.msra.mxu0 0.0
      %3646 = vmatprep.subr.mxu0 0.0
      %3647 = vmatpush1.msra.mxu0 0.0
      %3648 = vmatprep.subr.mxu0 0.0
      %3649 = vmatpush1.msra.mxu0 0.0
      %3650 = vmatprep.subr.mxu0 0.0
      %3651 = vmatpush1.msra.mxu0 %v3613
      %3652 = vmatprep.subr.mxu0 0.0
      %3653 = vmatpush1.msra.mxu0 %v3611
      %3654 = vmatprep.subr.mxu0 0.0
      %3655 = vmatpush2.msra.mxu0 0.0
      %3656 = vmatprep.subr.mxu0 0.0
      %3657 = vmatpush2.msra.mxu0 0.0
      %3658 = vmatprep.subr.mxu0 0.0
      %3659 = vmatpush2.msra.mxu0 0.0
      %3660 = vmatprep.subr.mxu0 0.0
      %3661 = vmatpush2.msra.mxu0 0.0
      %3662 = vmatprep.subr.mxu0 0.0
      %3663 = vmatpush2.msra.mxu0 0.0
      %3664 = vmatprep.subr.mxu0 0.0
      %3665 = vmatpush2.msra.mxu0 0.0
      %3666 = vmatprep.subr.mxu0 0.0
      %3667 = vmatpush2.msra.mxu0 0.0
      %3668 = vmatprep.subr.mxu0 0.0
      %3669 = vmatpush2.msra.mxu0 0.0
      %3670 = vmatprep.subr.mxu0 0.0
      %3671 = vmatpush2.msra.mxu0 0.0
      %3672 = vmatprep.subr.mxu0 0.0
      %3673 = vmatpush2.msra.mxu0 0.0
      %3674 = vmatprep.subr.mxu0 0.0
      %3675 = vmatpush2.msra.mxu0 0.0
      %3676 = vmatprep.subr.mxu0 0.0
      %3677 = vmatpush2.msra.mxu0 0.0
      %3678 = vmatprep.subr.mxu0 0.0
      %3679 = vmatpush2.msra.mxu0 0.0
      %3680 = vmatprep.subr.mxu0 0.0
      %3681 = vmatpush2.msra.mxu0 0.0
      %3682 = vmatprep.subr.mxu0 0.0
      %3683 = vmatpush2.msra.mxu0 0.0
      %3684 = vmatprep.subr.mxu0 0.0
      %3685 = vmatpush2.msra.mxu0 0.0
      %3686 = vmatprep.mubr.f32.mxu0 0.0
      %3687 = vmatmul.mubr.f32.gmra.mxu0 %v3617
      %v3688 = vpop.f32.mrf.mxu0
      %v3689 = vadd.f32 0.0, %v3688
      %v3690 = vpop.f32.mrf.mxu0
      %3691 = vmatprep.mubr.f32.mxu0 0.0
      %3692 = vmatmul.mubr.f32.gmra.mxu0 %v3620
      %v3693 = vpop.f32.mrf.mxu0
      %v3694 = vadd.f32 0.0, %v3693
      %v3695 = vpop.f32.mrf.mxu0
      %3696 = vdwg.mxu0
      %3697 = vrot.lane.b32.xlu0 %v516, 32
      %v3698 = vpop.permute.xlu0 %3697
      %3699 = vrot.lane.b32.xlu0 %v521, 32
      %v3700 = vpop.permute.xlu0 %3699
      %v3704 = vsel %vm873, %v3434, 0
      %v3707 = vsel %vm873, %v3435, 0
      %3709 = vmatprep.subr.mxu0 0.0
      %3710 = vmatpush1.msra.mxu0 0.0
      %3711 = vmatprep.subr.mxu0 0.0
      %3712 = vmatpush1.msra.mxu0 0.0
      %3713 = vmatprep.subr.mxu0 0.0
      %3714 = vmatpush1.msra.mxu0 0.0
      %3715 = vmatprep.subr.mxu0 0.0
      %3716 = vmatpush1.msra.mxu0 0.0
      %3717 = vmatprep.subr.mxu0 0.0
      %3718 = vmatpush1.msra.mxu0 0.0
      %3719 = vmatprep.subr.mxu0 0.0
      %3720 = vmatpush1.msra.mxu0 0.0
      %3721 = vmatprep.subr.mxu0 0.0
      %3722 = vmatpush1.msra.mxu0 0.0
      %3723 = vmatprep.subr.mxu0 0.0
      %3724 = vmatpush1.msra.mxu0 0.0
      %3725 = vmatprep.subr.mxu0 0.0
      %3726 = vmatpush1.msra.mxu0 0.0
      %3727 = vmatprep.subr.mxu0 0.0
      %3728 = vmatpush1.msra.mxu0 0.0
      %3729 = vmatprep.subr.mxu0 0.0
      %3730 = vmatpush1.msra.mxu0 0.0
      %3731 = vmatprep.subr.mxu0 0.0
      %3732 = vmatpush1.msra.mxu0 0.0
      %3733 = vmatprep.subr.mxu0 0.0
      %3734 = vmatpush1.msra.mxu0 0.0
      %3735 = vmatprep.subr.mxu0 0.0
      %3736 = vmatpush1.msra.mxu0 0.0
      %3737 = vmatprep.subr.mxu0 0.0
      %3738 = vmatpush1.msra.mxu0 %v3700
      %3739 = vmatprep.subr.mxu0 0.0
      %3740 = vmatpush1.msra.mxu0 %v3698
      %3741 = vmatprep.subr.mxu0 0.0
      %3742 = vmatpush2.msra.mxu0 0.0
      %3743 = vmatprep.subr.mxu0 0.0
      %3744 = vmatpush2.msra.mxu0 0.0
      %3745 = vmatprep.subr.mxu0 0.0
      %3746 = vmatpush2.msra.mxu0 0.0
      %3747 = vmatprep.subr.mxu0 0.0
      %3748 = vmatpush2.msra.mxu0 0.0
      %3749 = vmatprep.subr.mxu0 0.0
      %3750 = vmatpush2.msra.mxu0 0.0
      %3751 = vmatprep.subr.mxu0 0.0
      %3752 = vmatpush2.msra.mxu0 0.0
      %3753 = vmatprep.subr.mxu0 0.0
      %3754 = vmatpush2.msra.mxu0 0.0
      %3755 = vmatprep.subr.mxu0 0.0
      %3756 = vmatpush2.msra.mxu0 0.0
      %3757 = vmatprep.subr.mxu0 0.0
      %3758 = vmatpush2.msra.mxu0 0.0
      %3759 = vmatprep.subr.mxu0 0.0
      %3760 = vmatpush2.msra.mxu0 0.0
      %3761 = vmatprep.subr.mxu0 0.0
      %3762 = vmatpush2.msra.mxu0 0.0
      %3763 = vmatprep.subr.mxu0 0.0
      %3764 = vmatpush2.msra.mxu0 0.0
      %3765 = vmatprep.subr.mxu0 0.0
      %3766 = vmatpush2.msra.mxu0 0.0
      %3767 = vmatprep.subr.mxu0 0.0
      %3768 = vmatpush2.msra.mxu0 0.0
      %3769 = vmatprep.subr.mxu0 0.0
      %3770 = vmatpush2.msra.mxu0 0.0
      %3771 = vmatprep.subr.mxu0 0.0
      %3772 = vmatpush2.msra.mxu0 0.0
      %3773 = vmatprep.mubr.f32.mxu0 0.0
      %3774 = vmatmul.mubr.f32.gmra.mxu0 %v3704
      %v3775 = vpop.f32.mrf.mxu0
      %v3776 = vadd.f32 0.0, %v3775
      %v3777 = vpop.f32.mrf.mxu0
      %3778 = vmatprep.mubr.f32.mxu0 0.0
      %3779 = vmatmul.mubr.f32.gmra.mxu0 %v3707
      %v3780 = vpop.f32.mrf.mxu0
      %v3781 = vadd.f32 0.0, %v3780
      %v3782 = vpop.f32.mrf.mxu0
      %3783 = vdwg.mxu0
      %3792 = vrot.lane.b32.xlu0 %v3515, 96
      %v3793 = vpop.permute.xlu0 %3792
      %3794 = vrot.lane.b32.xlu0 %v3520, 96
      %v3795 = vpop.permute.xlu0 %3794
      %3796 = vrot.lane.b32.xlu0 %v3602, 96
      %v3797 = vpop.permute.xlu0 %3796
      %3798 = vrot.lane.b32.xlu0 %v3607, 96
      %v3799 = vpop.permute.xlu0 %3798
      %3800 = vrot.lane.b32.xlu0 %v3689, 96
      %v3801 = vpop.permute.xlu0 %3800
      %3802 = vrot.lane.b32.xlu0 %v3694, 96
      %v3803 = vpop.permute.xlu0 %3802
      %3804 = vrot.lane.b32.xlu0 %v3776, 96
      %v3805 = vpop.permute.xlu0 %3804
      %3806 = vrot.lane.b32.xlu0 %v3781, 96
      %v3807 = vpop.permute.xlu0 %3806
      %vm3816 = vcmask 1048320
      %3817 = vst.msk [vmem:[#allocation2] sm:$0xff] %vm3816, %v3793
      %3818 = vst.msk [vmem:[#allocation2 + $0x8] sm:$0xff] %vm3816, %v3795
      %3819 = vst.msk [vmem:[#allocation2 + $0x10] sm:$0xff] %vm3816, %v3797
      %3820 = vst.msk [vmem:[#allocation2 + $0x18] sm:$0xff] %vm3816, %v3799
      %3821 = vst.msk [vmem:[#allocation2 + $0x20] sm:$0xff] %vm3816, %v3801
      %3822 = vst.msk [vmem:[#allocation2 + $0x28] sm:$0xff] %vm3816, %v3803
      %3823 = vst.msk [vmem:[#allocation2 + $0x30] sm:$0xff] %vm3816, %v3805
      %3824 = vst.msk [vmem:[#allocation2 + $0x38] sm:$0xff] %vm3816, %v3807
      %v3825 = vld [vmem:[#allocation2] sm:$0xff]
      %v3826 = vld [vmem:[#allocation2 + $0x8] sm:$0xff]
      %v3827 = vld [vmem:[#allocation2 + $0x10] sm:$0xff]
      %v3828 = vld [vmem:[#allocation2 + $0x18] sm:$0xff]
      %v3829 = vld [vmem:[#allocation2 + $0x20] sm:$0xff]
      %v3830 = vld [vmem:[#allocation2 + $0x28] sm:$0xff]
      %v3831 = vld [vmem:[#allocation2 + $0x30] sm:$0xff]
      %v3832 = vld [vmem:[#allocation2 + $0x38] sm:$0xff]
      %v3833 = vld [vmem:[%s3] sm:$0xff]
      %v3834 = vld [vmem:[%s3 + $0x8] sm:$0xff]
      %v3835 = vld [vmem:[%s3 + $0x10] sm:$0xff]
      %v3836 = vld [vmem:[%s3 + $0x18] sm:$0xff]
      %v3837 = vld [vmem:[%s3 + $0x20] sm:$0xff]
      %v3838 = vld [vmem:[%s3 + $0x28] sm:$0xff]
      %v3839 = vld [vmem:[%s3 + $0x30] sm:$0xff]
      %v3840 = vld [vmem:[%s3 + $0x38] sm:$0xff]
      %v3841 = vld [vmem:[%s3 + $0x40] sm:$0xff]
      %v3842 = vld [vmem:[%s3 + $0x48] sm:$0xff]
      %v3843 = vld [vmem:[%s3 + $0x50] sm:$0xff]
      %v3844 = vld [vmem:[%s3 + $0x58] sm:$0xff]
      %v3845 = vld [vmem:[%s3 + $0x60] sm:$0xff]
      %v3846 = vld [vmem:[%s3 + $0x68] sm:$0xff]
      %v3847 = vld [vmem:[%s3 + $0x70] sm:$0xff]
      %v3848 = vld [vmem:[%s3 + $0x78] sm:$0xff]
      %v3849 = vld [vmem:[%s4] sm:$0x1]
      %v3851 = vlaneseq
      %v3852 = vshrl.u32 %v3851, 7
      %v3853 = vsub.s32 0, %v3852
      %v3854 = vrot.slane %v3849, %v3853
      %3856 = vmatprep.subr.mxu0 0.0
      %3857 = vmatpush1.msra.mxu0 %v3848
      %3858 = vmatprep.subr.mxu0 0.0
      %3859 = vmatpush1.msra.mxu0 %v3847
      %3860 = vmatprep.subr.mxu0 0.0
      %3861 = vmatpush1.msra.mxu0 %v3846
      %3862 = vmatprep.subr.mxu0 0.0
      %3863 = vmatpush1.msra.mxu0 %v3845
      %3864 = vmatprep.subr.mxu0 0.0
      %3865 = vmatpush1.msra.mxu0 %v3844
      %3866 = vmatprep.subr.mxu0 0.0
      %3867 = vmatpush1.msra.mxu0 %v3843
      %3868 = vmatprep.subr.mxu0 0.0
      %3869 = vmatpush1.msra.mxu0 %v3842
      %3870 = vmatprep.subr.mxu0 0.0
      %3871 = vmatpush1.msra.mxu0 %v3841
      %3872 = vmatprep.subr.mxu0 0.0
      %3873 = vmatpush1.msra.mxu0 %v3840
      %3874 = vmatprep.subr.mxu0 0.0
      %3875 = vmatpush1.msra.mxu0 %v3839
      %3876 = vmatprep.subr.mxu0 0.0
      %3877 = vmatpush1.msra.mxu0 %v3838
      %3878 = vmatprep.subr.mxu0 0.0
      %3879 = vmatpush1.msra.mxu0 %v3837
      %3880 = vmatprep.subr.mxu0 0.0
      %3881 = vmatpush1.msra.mxu0 %v3836
      %3882 = vmatprep.subr.mxu0 0.0
      %3883 = vmatpush1.msra.mxu0 %v3835
      %3884 = vmatprep.subr.mxu0 0.0
      %3885 = vmatpush1.msra.mxu0 %v3834
      %3886 = vmatprep.subr.mxu0 0.0
      %3887 = vmatpush1.msra.mxu0 %v3833
      %3888 = vmatprep.subr.mxu0 0.0
      %3889 = vmatpush2.msra.mxu0 0.0
      %3890 = vmatprep.subr.mxu0 0.0
      %3891 = vmatpush2.msra.mxu0 0.0
      %3892 = vmatprep.subr.mxu0 0.0
      %3893 = vmatpush2.msra.mxu0 0.0
      %3894 = vmatprep.subr.mxu0 0.0
      %3895 = vmatpush2.msra.mxu0 0.0
      %3896 = vmatprep.subr.mxu0 0.0
      %3897 = vmatpush2.msra.mxu0 0.0
      %3898 = vmatprep.subr.mxu0 0.0
      %3899 = vmatpush2.msra.mxu0 0.0
      %3900 = vmatprep.subr.mxu0 0.0
      %3901 = vmatpush2.msra.mxu0 0.0
      %3902 = vmatprep.subr.mxu0 0.0
      %3903 = vmatpush2.msra.mxu0 0.0
      %3904 = vmatprep.subr.mxu0 0.0
      %3905 = vmatpush2.msra.mxu0 0.0
      %3906 = vmatprep.subr.mxu0 0.0
      %3907 = vmatpush2.msra.mxu0 0.0
      %3908 = vmatprep.subr.mxu0 0.0
      %3909 = vmatpush2.msra.mxu0 0.0
      %3910 = vmatprep.subr.mxu0 0.0
      %3911 = vmatpush2.msra.mxu0 0.0
      %3912 = vmatprep.subr.mxu0 0.0
      %3913 = vmatpush2.msra.mxu0 0.0
      %3914 = vmatprep.subr.mxu0 0.0
      %3915 = vmatpush2.msra.mxu0 0.0
      %3916 = vmatprep.subr.mxu0 0.0
      %3917 = vmatpush2.msra.mxu0 0.0
      %3918 = vmatprep.subr.mxu0 0.0
      %3919 = vmatpush2.msra.mxu0 0.0
      %3920 = vmatprep.mubr.f32.mxu0 0.0
      %3921 = vmatmul.mubr.f32.gmra.mxu0 %v3825
      %v3922 = vpop.f32.mrf.mxu0
      %v3923 = vadd.f32 %v3854, %v3922
      %v3924 = vpop.f32.mrf.mxu0
      %3925 = vmatprep.mubr.f32.mxu0 0.0
      %3926 = vmatmul.mubr.f32.gmra.mxu0 %v3826
      %v3927 = vpop.f32.mrf.mxu0
      %v3928 = vadd.f32 %v3854, %v3927
      %v3929 = vpop.f32.mrf.mxu0
      %3930 = vmatprep.mubr.f32.mxu0 0.0
      %3931 = vmatmul.mubr.f32.gmra.mxu0 %v3827
      %v3932 = vpop.f32.mrf.mxu0
      %v3933 = vadd.f32 %v3854, %v3932
      %v3934 = vpop.f32.mrf.mxu0
      %3935 = vmatprep.mubr.f32.mxu0 0.0
      %3936 = vmatmul.mubr.f32.gmra.mxu0 %v3828
      %v3937 = vpop.f32.mrf.mxu0
      %v3938 = vadd.f32 %v3854, %v3937
      %v3939 = vpop.f32.mrf.mxu0
      %3940 = vmatprep.mubr.f32.mxu0 0.0
      %3941 = vmatmul.mubr.f32.gmra.mxu0 %v3829
      %v3942 = vpop.f32.mrf.mxu0
      %v3943 = vadd.f32 %v3854, %v3942
      %v3944 = vpop.f32.mrf.mxu0
      %3945 = vmatprep.mubr.f32.mxu0 0.0
      %3946 = vmatmul.mubr.f32.gmra.mxu0 %v3830
      %v3947 = vpop.f32.mrf.mxu0
      %v3948 = vadd.f32 %v3854, %v3947
      %v3949 = vpop.f32.mrf.mxu0
      %3950 = vmatprep.mubr.f32.mxu0 0.0
      %3951 = vmatmul.mubr.f32.gmra.mxu0 %v3831
      %v3952 = vpop.f32.mrf.mxu0
      %v3953 = vadd.f32 %v3854, %v3952
      %v3954 = vpop.f32.mrf.mxu0
      %3955 = vmatprep.mubr.f32.mxu0 0.0
      %3956 = vmatmul.mubr.f32.gmra.mxu0 %v3832
      %v3957 = vpop.f32.mrf.mxu0
      %v3958 = vadd.f32 %v3854, %v3957
      %v3959 = vpop.f32.mrf.mxu0
      %3960 = vdwg.mxu0
      %3961 = vst [vmem:[%s231] sm:$0xff] %v3923
      %3962 = vst [vmem:[%s231 + $0x8] sm:$0xff] %v3928
      %3963 = vst [vmem:[%s231 + $0x10] sm:$0xff] %v3933
      %3964 = vst [vmem:[%s231 + $0x18] sm:$0xff] %v3938
      %3965 = vst [vmem:[%s231 + $0x20] sm:$0xff] %v3943
      %3966 = vst [vmem:[%s231 + $0x28] sm:$0xff] %v3948
      %3967 = vst [vmem:[%s231 + $0x30] sm:$0xff] %v3953
      %3968 = vst [vmem:[%s231 + $0x38] sm:$0xff] %v3958
      %s3969 = smul.u32 4, %s16
      %p3970 = scmp.lt.s32.totalorder %s3969, 7
      %s3971 = scalar_select %p3970, %s3969, 7
      %s3972 = smul.addr %s3971, 2
      %s3973 = smul.addr %s3972, 8
      %s3974 = scalar_lea.vmem %s5, %s3973
      // Predicated region
      $region41: #{attention_forward.1} parent=39 // pred_check
        %p3975 = pneg %p144
      $region42: #{attention_forward.1} parent=39 // pred_check_branch
        %3977 = sbr.rel (%p3975) target = $region44
      $region43: #{attention_forward.1} parent=39 // pred_region
        %s3978 = smul.u32 4, %s16
      $region44: #{attention_forward.1} parent=39 // pred_fallthru
        _
    $region40: #{attention_forward.1} parent=5 // pred_fallthru
      _
    %p3979 = scmp.le.s32.totalorder 2, %s11
    // Predicated region
    $region45: #{attention_forward.1} parent=5 // pred_check
      %p3980 = pneg %p3979
    $region46: #{attention_forward.1} parent=5 // pred_check_branch
      %3982 = sbr.rel (%p3980) target = $region48
    $region47: #{attention_forward.1} parent=5 // pred_region
      %s3983 = ssub.s32 %s11, 2
      // Predicated region
      $region49: #{attention_forward.1} parent=47 // pred_check
        %p3984 = pneg %p150
      $region50: #{attention_forward.1} parent=47 // pred_check_branch
        %3986 = sbr.rel (%p3984) target = $region52
      $region51: #{attention_forward.1} parent=47 // pred_region
        %s3987 = smul.u32 4, %s17
        %p3988 = scmp.lt.s32.totalorder %s3987, 7
        %s3989 = scalar_select %p3988, %s3987, 7
        %s3990 = smul.addr %s3989, 2
        %s3991 = smul.addr %s3990, 8
        %s3992 = scalar_lea.vmem %s5, %s3991
      $region52: #{attention_forward.1} parent=47 // pred_fallthru
        _
    $region48: #{attention_forward.1} parent=5 // pred_fallthru
      _
  $region6: #{attention_forward.1} parent=0 // loop_footer
    %s15 = sadd.s32 1, %s11
  $region7: #{attention_forward.1} parent=0 // loop_footer_branch
    %10 = sbr.rel target = $region3
  $region8: #{attention_forward.1} parent=0 // loop_exit
    _

</llo_original>
